<compile_context>
chip_gen: v5e
topology: v5e:2x2
jax: 0.10.0
libtpu: 0.0.40
codegen_flags: <defaults>
</compile_context>

<pallas_src>
import functools

import jax
import jax.numpy as jnp
from jax.experimental import pallas as pl
from jax.experimental.pallas import tpu as pltpu


def _round_up(x, m):
    return (x + m - 1) // m * m


# ---------------------------------------------------------------------------
# in-kernel helpers
# ---------------------------------------------------------------------------

def _prep_scratch(xpad_ref, imc_ref, cin):
    """Zero the padded-input scratch and initialise the bias / K-padding lanes
    of the im2col scratch.  Done every grid step (the grid may be sharded
    across TensorCores, each with its own scratch)."""
    h, w, kp = imc_ref.shape
    k = 9 * cin
    xpad_ref[...] = jnp.zeros(xpad_ref.shape, xpad_ref.dtype)
    imc_ref[:, :, k:kp] = jnp.zeros((h, w, kp - k), imc_ref.dtype)
    imc_ref[:, :, k:k + 1] = jnp.ones((h, w, 1), imc_ref.dtype)      # bias column


def _conv3x3_mxu(xpad_ref, imc_ref, w_ref):
    """3x3 'same' conv as a single im2col MXU matmul.

    xpad_ref: (H+2, W+2, Cin) bf16 scratch, zero border, interior = input.
    imc_ref:  (H, W, Kp) bf16 scratch; lanes >= 9*Cin already hold [1, 0, ...].
    w_ref:    (Kp, Cout) bf16 augmented weights (row 9*Cin = bias, rest 0).
    Returns (H*W, Cout) float32.
    """
    h, w, kp = imc_ref.shape
    cin = xpad_ref.shape[-1]
    for t in range(9):                                   # copy 9 shifted patches
        dy, dx = t // 3, t % 3
        imc_ref[:, :, t * cin:(t + 1) * cin] = xpad_ref[dy:dy + h, dx:dx + w, :]
    im2col = imc_ref[...].reshape(h * w, kp)             # lane dim unchanged
    return jnp.dot(im2col, w_ref[...], preferred_element_type=jnp.float32)


# ---------------------------------------------------------------------------
# fused stage kernels
# ---------------------------------------------------------------------------

def _head_kernel(x_ref, w_ref, o_ref, xpad_ref, imc_ref):
    _, h, w, cin = x_ref.shape
    cout = o_ref.shape[-1]
    _prep_scratch(xpad_ref, imc_ref, cin)
    xpad_ref[1:h + 1, 1:w + 1, :] = x_ref[0]
    acc = jnp.maximum(_conv3x3_mxu(xpad_ref, imc_ref, w_ref), 0.0)
    o_ref[...] = acc.reshape(1, h, w, cout).astype(o_ref.dtype)


def _rb_kernel(x_ref, w1_ref, w2_ref, o_ref, xpad_ref, imc_ref):
    """Residual block: x + conv3x3(relu(conv3x3(x))); intermediate stays in VMEM."""
    _, h, w, c = x_ref.shape
    _prep_scratch(xpad_ref, imc_ref, c)
    x = x_ref[0]                                                   # (h, w, c) bf16
    xpad_ref[1:h + 1, 1:w + 1, :] = x
    t = jnp.maximum(_conv3x3_mxu(xpad_ref, imc_ref, w1_ref), 0.0)  # (h*w, c) f32
    xpad_ref[1:h + 1, 1:w + 1, :] = t.reshape(h, w, c).astype(xpad_ref.dtype)
    y = _conv3x3_mxu(xpad_ref, imc_ref, w2_ref)                    # (h*w, c) f32
    y = y + x.reshape(h * w, c).astype(jnp.float32)                # skip add in f32
    o_ref[...] = y.reshape(1, h, w, c).astype(o_ref.dtype)


def _up_kernel(x_ref, w_ref, o_ref, xpad_ref, imc_ref, *, factor):
    """Nearest-neighbour x`factor` upsample fused with conv3x3 + relu."""
    _, h, w, c = x_ref.shape
    f = factor
    hf, wf = h * f, w * f
    cout = o_ref.shape[-1]
    _prep_scratch(xpad_ref, imc_ref, c)
    x = x_ref[0].astype(jnp.float32)                               # (h, w, c)
    # width repeat: out[:, wi*f + j, :] = x[:, wi, :]
    x = jnp.broadcast_to(x[:, :, None, :], (h, w, f, c)).reshape(h, wf, c)
    # height repeat (pure leading-dim merge): out[hi*f + i, :, :] = x[hi, :, :]
    x = jnp.broadcast_to(x[:, None, :, :], (h, f, wf, c)).reshape(hf, wf, c)
    xpad_ref[1:hf + 1, 1:wf + 1, :] = x.astype(xpad_ref.dtype)
    acc = jnp.maximum(_conv3x3_mxu(xpad_ref, imc_ref, w_ref), 0.0)
    o_ref[...] = acc.reshape(1, hf, wf, cout).astype(o_ref.dtype)


def _tail_kernel(*refs, has_residual):
    if has_residual:
        x_ref, w_ref, res_ref, o_ref, xpad_ref, imc_ref = refs
    else:
        x_ref, w_ref, o_ref, xpad_ref, imc_ref = refs
        res_ref = None
    _, h, w, cin = x_ref.shape
    cout = o_ref.shape[-1]
    _prep_scratch(xpad_ref, imc_ref, cin)
    xpad_ref[1:h + 1, 1:w + 1, :] = x_ref[0]
    acc = _conv3x3_mxu(xpad_ref, imc_ref, w_ref)                   # (h*w, cout) f32
    if has_residual:
        acc = acc + res_ref[0].reshape(h * w, cout).astype(jnp.float32)
    o_ref[...] = acc.reshape(1, h, w, cout).astype(o_ref.dtype)


# ---------------------------------------------------------------------------
# pallas_call wrappers
# ---------------------------------------------------------------------------

def _conv_call(kernel, inputs, out_shape, scratch_shapes):
    n = out_shape.shape[0]
    in_specs = []
    for a in inputs:
        if a.ndim == 4:                                   # activation / residual
            in_specs.append(pl.BlockSpec((1,) + a.shape[1:],
                                         lambda i: (i, 0, 0, 0)))
        else:                                             # (Kp, Cout) weights
            in_specs.append(pl.BlockSpec(a.shape, lambda i: (0, 0)))
    out_specs = pl.BlockSpec((1,) + out_shape.shape[1:], lambda i: (i, 0, 0, 0))
    return pl.pallas_call(
        kernel,
        out_shape=out_shape,
        grid=(n,),
        in_specs=in_specs,
        out_specs=out_specs,
        scratch_shapes=scratch_shapes,
        compiler_params=pltpu.CompilerParams(
            dimension_semantics=("parallel",),            # shard batch across TCs
            vmem_limit_bytes=64 * 1024 * 1024),
    )(*inputs)


def _scratches(h, w, cin, kp):
    return [pltpu.VMEM((h + 2, w + 2, cin), jnp.bfloat16),   # zero-padded input
            pltpu.VMEM((h, w, kp), jnp.bfloat16)]            # im2col buffer


def _run_head(w_aug, x):
    n, h, w, cin = x.shape
    kp, cout = w_aug.shape
    out = jax.ShapeDtypeStruct((n, h, w, cout), jnp.bfloat16)
    return _conv_call(_head_kernel, [x, w_aug], out, _scratches(h, w, cin, kp))


def _run_rb(w1_aug, w2_aug, x):
    n, h, w, c = x.shape
    kp = w1_aug.shape[0]
    out = jax.ShapeDtypeStruct((n, h, w, c), jnp.bfloat16)
    return _conv_call(_rb_kernel, [x, w1_aug, w2_aug], out,
                      _scratches(h, w, c, kp))


def _run_up(w_aug, x, factor):
    n, h, w, c = x.shape
    kp, cout = w_aug.shape
    hf, wf = h * factor, w * factor
    out = jax.ShapeDtypeStruct((n, hf, wf, cout), jnp.bfloat16)
    kern = functools.partial(_up_kernel, factor=factor)
    return _conv_call(kern, [x, w_aug], out, _scratches(hf, wf, c, kp))


def _run_tail(w_aug, x, residual_nhwc):
    n, h, w, cin = x.shape
    kp, cout = w_aug.shape
    out = jax.ShapeDtypeStruct((n, h, w, cout), jnp.float32)
    inputs = [x, w_aug]
    has_res = residual_nhwc is not None
    if has_res:
        inputs.append(residual_nhwc)
    kern = functools.partial(_tail_kernel, has_residual=has_res)
    return _conv_call(kern, inputs, out, _scratches(h, w, cin, kp))


# ---------------------------------------------------------------------------
# parameters
# ---------------------------------------------------------------------------

def _upsample_factors(scale):
    """Decompose scale the same way VSR's Upsample does (x2 stages)."""
    factors = []
    while scale > 1:
        if scale % 2 == 1 or scale == 2:
            factors.append(scale)
            break
        factors.append(2)
        scale //= 2
    return factors


def _augment_weight(w, b):
    """(3,3,Cin,Cout) weight + (Cout,) bias -> (Kp, Cout) bf16.
    Rows [0:9*Cin] are the 3x3 taps (dy-major, dx, cin), row 9*Cin is the bias
    (matched by a ones im2col column), remaining rows are zero so that
    Kp = round_up(9*Cin + 1, 128) keeps the MXU contraction pass-aligned."""
    _, _, cin, cout = w.shape
    k = 9 * cin
    kp = _round_up(k + 1, 128)
    wa = jnp.zeros((kp, cout), jnp.float32)
    wa = wa.at[:k].set(w.reshape(k, cout))
    wa = wa.at[k].set(b)
    return wa.astype(jnp.bfloat16)


def init_teco_generator_params(key, channel, scale, filters, num_rb):
    # NOTE: init distribution differs from PyTorch defaults (init-time only).
    def conv_p(k, cin, cout):
        k1, k2 = jax.random.split(k)
        fan_in = cin * 9
        w = jax.random.normal(k1, (3, 3, cin, cout), jnp.float32) / jnp.sqrt(
            jnp.float32(fan_in))
        b = jax.random.normal(k2, (cout,), jnp.float32) * 0.01
        return _augment_weight(w, b)

    up_factors = _upsample_factors(scale)
    n_keys = 2 + 2 * num_rb + len(up_factors)
    keys = jax.random.split(key, n_keys)
    ki = iter(range(n_keys))
    params = {
        "head": conv_p(keys[next(ki)], channel * (1 + scale ** 2), filters),
        "rbs": [(conv_p(keys[next(ki)], filters, filters),
                 conv_p(keys[next(ki)], filters, filters))
                for _ in range(num_rb)],
        "up": [conv_p(keys[next(ki)], filters, filters) for _ in up_factors],
        "up_factors": up_factors,
        "tail": conv_p(keys[next(ki)], filters, channel),
    }
    return params


# ---------------------------------------------------------------------------
# forward
# ---------------------------------------------------------------------------

def teco_generator_forward(params, x, prev, residual=None):
    """x: (N, C, H, W), prev: (N, C*scale^2, H, W), residual: (N, C, H*s, W*s),
       all NCHW (matching the PyTorch module).  Returns sr in NCHW, float32."""
    inp = jnp.concatenate([x, prev], axis=1)                   # channel concat
    h = jnp.transpose(inp, (0, 2, 3, 1)).astype(jnp.bfloat16)  # NHWC, bf16 store

    h = _run_head(params["head"], h)                           # conv + relu
    for w1, w2 in params["rbs"]:                               # fused RBs
        h = _run_rb(w1, w2, h)
    for factor, wu in zip(params["up_factors"], params["up"]): # fused up stages
        h = _run_up(wu, h, factor)

    res = None
    if residual is not None:
        res = jnp.transpose(residual, (0, 2, 3, 1)).astype(jnp.float32)
    sr = _run_tail(params["tail"], h, res)                     # conv (+residual)

    return jnp.transpose(sr, (0, 3, 1, 2))                     # back to NCHW


if __name__ == "__main__":
    # Small deterministic config consistent with the module's forward.
    channel, scale, filters, num_rb = 3, 2, 16, 2
    N, H, W = 2, 16, 16

    key = jax.random.PRNGKey(0)
    kx, kprev, kres, kparam = jax.random.split(key, 4)

    x = jax.random.normal(kx, (N, channel, H, W), jnp.float32)
    prev = jax.random.normal(kprev, (N, channel * scale ** 2, H, W), jnp.float32)
    residual = jax.random.normal(kres, (N, channel, H * scale, W * scale),
                                 jnp.float32)

    params = init_teco_generator_params(kparam, channel, scale, filters, num_rb)

    sr = teco_generator_forward(params, x, prev, residual)
    sr = jax.block_until_ready(sr)
    assert sr.shape == (N, channel, H * scale, W * scale), sr.shape
    assert bool(jnp.all(jnp.isfinite(sr))), "non-finite output"
    print("KERNEL_OK")
</pallas_src>

<mosaic_0001>
module attributes {stable_mosaic.version = 11 : i64} {
  func.func @_head_kernel(%arg0: i32, %arg1: memref<1x16x16x15xbf16, #tpu.memory_space<vmem>>, %arg2: memref<256x16xbf16, #tpu.memory_space<vmem>>, %arg3: memref<1x16x16x16xbf16, #tpu.memory_space<vmem>>, %arg4: memref<18x18x15xbf16, #tpu.memory_space<vmem>>, %arg5: memref<16x16x256xbf16, #tpu.memory_space<vmem>>) attributes {dimension_semantics = [#tpu.dimension_semantics<parallel>], iteration_bounds = array<i64: 2>, scalar_prefetch = 0 : i64, scratch_operands = 2 : i64, tpu.core_type = #tpu.core_type<tc>, window_params = [{transform_indices = @transform_0, window_bounds = array<i64: 1, 16, 16, 15>}, {pipeline_mode = #tpu.pipeline_mode<synchronous>, transform_indices = @transform_1, window_bounds = array<i64: 256, 16>}, {transform_indices = @transform_2, window_bounds = array<i64: 1, 16, 16, 16>}]} {
    %cst = arith.constant 0.000000e+00 : bf16
    %0 = vector.broadcast %cst : bf16 to vector<18x18x15xbf16>
    %c0 = arith.constant 0 : index
    %c0_0 = arith.constant 0 : index
    %c0_1 = arith.constant 0 : index
    %1 = vector.load %arg4[%c0, %c0_0, %c0_1] : memref<18x18x15xbf16, #tpu.memory_space<vmem>>, vector<18x18x15xbf16>
    tpu.vector_store %arg4[%c0, %c0_0, %c0_1], %0 {strides = array<i32>} : memref<18x18x15xbf16, #tpu.memory_space<vmem>>, vector<18x18x15xbf16>,
    %cst_2 = arith.constant 0.000000e+00 : bf16
    %2 = vector.broadcast %cst_2 : bf16 to vector<16x16x121xbf16>
    %c0_3 = arith.constant 0 : index
    %c0_4 = arith.constant 0 : index
    %c135 = arith.constant 135 : index
    %3 = vector.load %arg5[%c0_3, %c0_4, %c135] : memref<16x16x256xbf16, #tpu.memory_space<vmem>>, vector<16x16x121xbf16>
    tpu.vector_store %arg5[%c0_3, %c0_4, %c135], %2 {strides = array<i32>} : memref<16x16x256xbf16, #tpu.memory_space<vmem>>, vector<16x16x121xbf16>,
    %cst_5 = arith.constant 1.000000e+00 : bf16
    %4 = vector.broadcast %cst_5 : bf16 to vector<16x16x1xbf16>
    %c0_6 = arith.constant 0 : index
    %c0_7 = arith.constant 0 : index
    %c135_8 = arith.constant 135 : index
    %5 = vector.load %arg5[%c0_6, %c0_7, %c135_8] : memref<16x16x256xbf16, #tpu.memory_space<vmem>>, vector<16x16x1xbf16>
    tpu.vector_store %arg5[%c0_6, %c0_7, %c135_8], %4 {strides = array<i32>} : memref<16x16x256xbf16, #tpu.memory_space<vmem>>, vector<16x16x1xbf16>,
    %c0_9 = arith.constant 0 : index
    %c0_10 = arith.constant 0 : index
    %c0_11 = arith.constant 0 : index
    %c0_12 = arith.constant 0 : index
    %6 = vector.load %arg1[%c0_9, %c0_10, %c0_11, %c0_12] : memref<1x16x16x15xbf16, #tpu.memory_space<vmem>>, vector<1x16x16x15xbf16>
    %7 = vector.shape_cast %6 : vector<1x16x16x15xbf16> to vector<16x16x15xbf16>
    %c1 = arith.constant 1 : index
    %c1_13 = arith.constant 1 : index
    %c0_14 = arith.constant 0 : index
    %8 = vector.load %arg4[%c1, %c1_13, %c0_14] : memref<18x18x15xbf16, #tpu.memory_space<vmem>>, vector<16x16x15xbf16>
    tpu.vector_store %arg4[%c1, %c1_13, %c0_14], %7 {strides = array<i32>} : memref<18x18x15xbf16, #tpu.memory_space<vmem>>, vector<16x16x15xbf16>,
    %c0_15 = arith.constant 0 : index
    %c0_16 = arith.constant 0 : index
    %c0_17 = arith.constant 0 : index
    %9 = vector.load %arg4[%c0_15, %c0_16, %c0_17] : memref<18x18x15xbf16, #tpu.memory_space<vmem>>, vector<16x16x15xbf16>
    %c0_18 = arith.constant 0 : index
    %c0_19 = arith.constant 0 : index
    %c0_20 = arith.constant 0 : index
    %10 = vector.load %arg5[%c0_18, %c0_19, %c0_20] : memref<16x16x256xbf16, #tpu.memory_space<vmem>>, vector<16x16x15xbf16>
    tpu.vector_store %arg5[%c0_18, %c0_19, %c0_20], %9 {strides = array<i32>} : memref<16x16x256xbf16, #tpu.memory_space<vmem>>, vector<16x16x15xbf16>,
    %c0_21 = arith.constant 0 : index
    %c1_22 = arith.constant 1 : index
    %c0_23 = arith.constant 0 : index
    %11 = vector.load %arg4[%c0_21, %c1_22, %c0_23] : memref<18x18x15xbf16, #tpu.memory_space<vmem>>, vector<16x16x15xbf16>
    %c0_24 = arith.constant 0 : index
    %c0_25 = arith.constant 0 : index
    %c15 = arith.constant 15 : index
    %12 = vector.load %arg5[%c0_24, %c0_25, %c15] : memref<16x16x256xbf16, #tpu.memory_space<vmem>>, vector<16x16x15xbf16>
    tpu.vector_store %arg5[%c0_24, %c0_25, %c15], %11 {strides = array<i32>} : memref<16x16x256xbf16, #tpu.memory_space<vmem>>, vector<16x16x15xbf16>,
    %c0_26 = arith.constant 0 : index
    %c2 = arith.constant 2 : index
    %c0_27 = arith.constant 0 : index
    %13 = vector.load %arg4[%c0_26, %c2, %c0_27] : memref<18x18x15xbf16, #tpu.memory_space<vmem>>, vector<16x16x15xbf16>
    %c0_28 = arith.constant 0 : index
    %c0_29 = arith.constant 0 : index
    %c30 = arith.constant 30 : index
    %14 = vector.load %arg5[%c0_28, %c0_29, %c30] : memref<16x16x256xbf16, #tpu.memory_space<vmem>>, vector<16x16x15xbf16>
    tpu.vector_store %arg5[%c0_28, %c0_29, %c30], %13 {strides = array<i32>} : memref<16x16x256xbf16, #tpu.memory_space<vmem>>, vector<16x16x15xbf16>,
    %c1_30 = arith.constant 1 : index
    %c0_31 = arith.constant 0 : index
    %c0_32 = arith.constant 0 : index
    %15 = vector.load %arg4[%c1_30, %c0_31, %c0_32] : memref<18x18x15xbf16, #tpu.memory_space<vmem>>, vector<16x16x15xbf16>
    %c0_33 = arith.constant 0 : index
    %c0_34 = arith.constant 0 : index
    %c45 = arith.constant 45 : index
    %16 = vector.load %arg5[%c0_33, %c0_34, %c45] : memref<16x16x256xbf16, #tpu.memory_space<vmem>>, vector<16x16x15xbf16>
    tpu.vector_store %arg5[%c0_33, %c0_34, %c45], %15 {strides = array<i32>} : memref<16x16x256xbf16, #tpu.memory_space<vmem>>, vector<16x16x15xbf16>,
    %c1_35 = arith.constant 1 : index
    %c1_36 = arith.constant 1 : index
    %c0_37 = arith.constant 0 : index
    %17 = vector.load %arg4[%c1_35, %c1_36, %c0_37] : memref<18x18x15xbf16, #tpu.memory_space<vmem>>, vector<16x16x15xbf16>
    %c0_38 = arith.constant 0 : index
    %c0_39 = arith.constant 0 : index
    %c60 = arith.constant 60 : index
    %18 = vector.load %arg5[%c0_38, %c0_39, %c60] : memref<16x16x256xbf16, #tpu.memory_space<vmem>>, vector<16x16x15xbf16>
    tpu.vector_store %arg5[%c0_38, %c0_39, %c60], %17 {strides = array<i32>} : memref<16x16x256xbf16, #tpu.memory_space<vmem>>, vector<16x16x15xbf16>,
    %c1_40 = arith.constant 1 : index
    %c2_41 = arith.constant 2 : index
    %c0_42 = arith.constant 0 : index
    %19 = vector.load %arg4[%c1_40, %c2_41, %c0_42] : memref<18x18x15xbf16, #tpu.memory_space<vmem>>, vector<16x16x15xbf16>
    %c0_43 = arith.constant 0 : index
    %c0_44 = arith.constant 0 : index
    %c75 = arith.constant 75 : index
    %20 = vector.load %arg5[%c0_43, %c0_44, %c75] : memref<16x16x256xbf16, #tpu.memory_space<vmem>>, vector<16x16x15xbf16>
    tpu.vector_store %arg5[%c0_43, %c0_44, %c75], %19 {strides = array<i32>} : memref<16x16x256xbf16, #tpu.memory_space<vmem>>, vector<16x16x15xbf16>,
    %c2_45 = arith.constant 2 : index
    %c0_46 = arith.constant 0 : index
    %c0_47 = arith.constant 0 : index
    %21 = vector.load %arg4[%c2_45, %c0_46, %c0_47] : memref<18x18x15xbf16, #tpu.memory_space<vmem>>, vector<16x16x15xbf16>
    %c0_48 = arith.constant 0 : index
    %c0_49 = arith.constant 0 : index
    %c90 = arith.constant 90 : index
    %22 = vector.load %arg5[%c0_48, %c0_49, %c90] : memref<16x16x256xbf16, #tpu.memory_space<vmem>>, vector<16x16x15xbf16>
    tpu.vector_store %arg5[%c0_48, %c0_49, %c90], %21 {strides = array<i32>} : memref<16x16x256xbf16, #tpu.memory_space<vmem>>, vector<16x16x15xbf16>,
    %c2_50 = arith.constant 2 : index
    %c1_51 = arith.constant 1 : index
    %c0_52 = arith.constant 0 : index
    %23 = vector.load %arg4[%c2_50, %c1_51, %c0_52] : memref<18x18x15xbf16, #tpu.memory_space<vmem>>, vector<16x16x15xbf16>
    %c0_53 = arith.constant 0 : index
    %c0_54 = arith.constant 0 : index
    %c105 = arith.constant 105 : index
    %24 = vector.load %arg5[%c0_53, %c0_54, %c105] : memref<16x16x256xbf16, #tpu.memory_space<vmem>>, vector<16x16x15xbf16>
    tpu.vector_store %arg5[%c0_53, %c0_54, %c105], %23 {strides = array<i32>} : memref<16x16x256xbf16, #tpu.memory_space<vmem>>, vector<16x16x15xbf16>,
    %c2_55 = arith.constant 2 : index
    %c2_56 = arith.constant 2 : index
    %c0_57 = arith.constant 0 : index
    %25 = vector.load %arg4[%c2_55, %c2_56, %c0_57] : memref<18x18x15xbf16, #tpu.memory_space<vmem>>, vector<16x16x15xbf16>
    %c0_58 = arith.constant 0 : index
    %c0_59 = arith.constant 0 : index
    %c120 = arith.constant 120 : index
    %26 = vector.load %arg5[%c0_58, %c0_59, %c120] : memref<16x16x256xbf16, #tpu.memory_space<vmem>>, vector<16x16x15xbf16>
    tpu.vector_store %arg5[%c0_58, %c0_59, %c120], %25 {strides = array<i32>} : memref<16x16x256xbf16, #tpu.memory_space<vmem>>, vector<16x16x15xbf16>,
    %c0_60 = arith.constant 0 : index
    %c0_61 = arith.constant 0 : index
    %c0_62 = arith.constant 0 : index
    %27 = vector.load %arg5[%c0_60, %c0_61, %c0_62] : memref<16x16x256xbf16, #tpu.memory_space<vmem>>, vector<16x16x256xbf16>
    %28 = vector.shape_cast %27 : vector<16x16x256xbf16> to vector<256x256xbf16>
    %c0_63 = arith.constant 0 : index
    %c0_64 = arith.constant 0 : index
    %29 = vector.load %arg2[%c0_63, %c0_64] : memref<256x16xbf16, #tpu.memory_space<vmem>>, vector<256x16xbf16>
    %cst_65 = arith.constant dense<0.000000e+00> : vector<256x16xf32>
    %30 = tpu.matmul %28, %29, %cst_65 {dimension_numbers = #tpu.dot_dimension_numbers<[1], [0], [0], [1], [0, 0, 1, 1], [], []>} : vector<256x256xbf16>, vector<256x16xbf16>, vector<256x16xf32> -> vector<256x16xf32>
    %cst_66 = arith.constant 0.000000e+00 : f32
    %31 = vector.broadcast %cst_66 : f32 to vector<256x16xf32>
    %32 = arith.maximumf %30, %31 : vector<256x16xf32>
    %33 = vector.shape_cast %32 : vector<256x16xf32> to vector<1x16x16x16xf32>
    %34 = arith.truncf %33 : vector<1x16x16x16xf32> to vector<1x16x16x16xbf16>
    %c0_67 = arith.constant 0 : index
    %c0_68 = arith.constant 0 : index
    %c0_69 = arith.constant 0 : index
    %c0_70 = arith.constant 0 : index
    %35 = vector.load %arg3[%c0_67, %c0_68, %c0_69, %c0_70] : memref<1x16x16x16xbf16, #tpu.memory_space<vmem>>, vector<1x16x16x16xbf16>
    tpu.vector_store %arg3[%c0_67, %c0_68, %c0_69, %c0_70], %34 {strides = array<i32>} : memref<1x16x16x16xbf16, #tpu.memory_space<vmem>>, vector<1x16x16x16xbf16>,
    return
  }
  func.func @transform_0(%arg0: i32) -> (i32, i32, i32, i32) {
    %c0_i32 = arith.constant 0 : i32
    %c0_i32_0 = arith.constant 0 : i32
    %c0_i32_1 = arith.constant 0 : i32
    %c0_i32_2 = arith.constant 0 : i32
    return %arg0, %c0_i32, %c0_i32_0, %c0_i32_1 : i32, i32, i32, i32
  }
  func.func @transform_1(%arg0: i32) -> (i32, i32) {
    %c0_i32 = arith.constant 0 : i32
    %c0_i32_0 = arith.constant 0 : i32
    %c0_i32_1 = arith.constant 0 : i32
    return %c0_i32, %c0_i32_0 : i32, i32
  }
  func.func @transform_2(%arg0: i32) -> (i32, i32, i32, i32) {
    %c0_i32 = arith.constant 0 : i32
    %c0_i32_0 = arith.constant 0 : i32
    %c0_i32_1 = arith.constant 0 : i32
    %c0_i32_2 = arith.constant 0 : i32
    return %arg0, %c0_i32, %c0_i32_0, %c0_i32_1 : i32, i32, i32, i32
  }
}

</mosaic_0001>

<llo_original>
// kernel: tpu_custom_call.1
$region0: #{tpu_custom_call.1}
  #allocation0 [shape = 'u32[]', space=smem, size = 0x4, offset = 0x4, fixed_abs, tag = 'smem constant byte address 0x4 - core index']
  #allocation1 [shape = 'u32[72,128]{1,0:T(1,128)}', space=vmem, size = 0x9000, scoped, tag = 'internal scratch']
  #allocation2 [shape = 'bf16[18,18,15]{2,1,0:T(8,128)(2,1)}', space=vmem, size = 0x1b000, scoped, tag = 'scratch operand']
  #allocation3 [shape = 'bf16[16,16,256]{2,1,0:T(8,128)(2,1)}', space=vmem, size = 0x20000, scoped, tag = 'scratch operand']
  %s0 = inlined_call_operand.vmem [shape: bf16[2,16,16,15], index: 0, kind: input, shape index: {}]
  %s1 = inlined_call_operand.vmem [shape: bf16[256,16], index: 1, kind: input, shape index: {}]
  %s2 = inlined_call_operand.hbm [shape: bf16[2,16,16,16], index: 2, kind: output, shape index: {}]
  %s3 = sld [smem:[#allocation0]]
  $region41: #{tpu_custom_call.1} parent=0
    _
  %s5 = ssub.s32 1, %s3
  %s6 = scalar_select 0, %s5, %s3
  $region1: #{tpu_custom_call.1} parent=0
    #allocation4 [shape = 'u8[131072]{0}', space=vmem, size = 0x20000, scoped, tag = 'output window, operand 0']
    #allocation5 [shape = 's32[2]{0}', space=sflag, size = 0x8, scoped, tag = 'scoped memory for tpu_custom_call.1']
    %7 = vsyncpa [#allocation5], 0
    %s8 = scalar_lea.sflag [#allocation5], 1
    %9 = vsyncpa %s8, 0
    loop: start=0, step=1, limit=4
    $region2: #{tpu_custom_call.1} parent=1 // loop_pre_header
      _
    $region3: #{tpu_custom_call.1} parent=1 // loop_header
      %s11 = sphi 0, %s15
      %p12 = scmp.ge.s32.totalorder %s11, 4
      %s21 = sphi 0, %s23
      %s24 = sphi 0, %s21
      %s25 = sphi 0, %s24
      %s41 = sphi 0, %s25
      %s45 = sphi 0, %s45
      %s47 = sphi 0, %s45
      %s48 = sphi 0, %s47
      %s62 = sphi 0, %s48
      %s68 = sphi 0, %s70
      %s71 = sphi 0, %s68
      %s72 = sphi 0, %s71
      %s88 = sphi 0, %s72
    $region4: #{tpu_custom_call.1} parent=1 // loop_header_branch
      %14 = sbr.rel (%p12) target = $region8
    $region5: #{tpu_custom_call.1} parent=1 // loop_body
      %s16 = ssub.s32 %s11, 1
      %s17 = ssub.s32 %s11, 2
      %s18 = sadd.s32 %s11, 1
      %s19 = ssub.s32 %s11, %s18
      %p20 = scmp.eq.s32.totalorder %s19, 0
      %s22 = sadd.s32 %s21, 1
      %s23 = scalar_select %p20, %s21, %s22
      %p26 = pneg %p20
      %p27 = scmp.eq.s32.totalorder %s11, 1
      %p28 = por %p26, %p27
      %p29 = scmp.ne.s32.totalorder %s21, %s24
      %p30 = scmp.eq.s32.totalorder %s11, 0
      %p31 = por %p29, %p30
      %p32 = scmp.ne.s32.totalorder %s21, %s24
      %p33 = scmp.eq.s32.totalorder %s16, 1
      %p34 = por %p32, %p33
      %p35 = scmp.ne.s32.totalorder %s24, %s25
      %p36 = scmp.eq.s32.totalorder %s16, 0
      %p37 = por %p35, %p36
      %p38 = scmp.ne.s32.totalorder %s24, %s25
      %p39 = scmp.eq.s32.totalorder %s17, 1
      %p40 = por %p38, %p39
      %p42 = scmp.ne.s32.totalorder %s25, %s41
      %p43 = scmp.eq.s32.totalorder %s17, 0
      %p44 = por %p42, %p43
      %s46 = sadd.s32 %s45, 1
      %p49 = scmp.eq.s32.totalorder %s11, 1
      %p50 = scmp.ne.s32.totalorder %s45, %s47
      %p51 = scmp.eq.s32.totalorder %s11, 0
      %p52 = por %p50, %p51
      %p53 = scmp.ne.s32.totalorder %s45, %s47
      %p54 = scmp.eq.s32.totalorder %s16, 1
      %p55 = por %p53, %p54
      %p56 = scmp.ne.s32.totalorder %s47, %s48
      %p57 = scmp.eq.s32.totalorder %s16, 0
      %p58 = por %p56, %p57
      %p59 = scmp.ne.s32.totalorder %s47, %s48
      %p60 = scmp.eq.s32.totalorder %s17, 1
      %p61 = por %p59, %p60
      %p63 = scmp.ne.s32.totalorder %s48, %s62
      %p64 = scmp.eq.s32.totalorder %s17, 0
      %p65 = por %p63, %p64
      %s66 = ssub.s32 %s11, %s18
      %p67 = scmp.eq.s32.totalorder %s66, 0
      %s69 = sadd.s32 %s68, 1
      %s70 = scalar_select %p67, %s68, %s69
      %p73 = pneg %p67
      %p74 = scmp.eq.s32.totalorder %s11, 1
      %p75 = por %p73, %p74
      %p76 = scmp.ne.s32.totalorder %s68, %s71
      %p77 = scmp.eq.s32.totalorder %s11, 0
      %p78 = por %p76, %p77
      %p79 = scmp.ne.s32.totalorder %s68, %s71
      %p80 = scmp.eq.s32.totalorder %s16, 1
      %p81 = por %p79, %p80
      %p82 = scmp.ne.s32.totalorder %s71, %s72
      %p83 = scmp.eq.s32.totalorder %s16, 0
      %p84 = por %p82, %p83
      %p85 = scmp.ne.s32.totalorder %s71, %s72
      %p86 = scmp.eq.s32.totalorder %s17, 1
      %p87 = por %p85, %p86
      %p89 = scmp.ne.s32.totalorder %s72, %s88
      %p90 = scmp.eq.s32.totalorder %s17, 0
      %p91 = por %p89, %p90
      %p92 = scmp.le.s32.totalorder 1, %s11
      %p93 = scmp.lt.s32.totalorder %s11, 3
      %p94 = pnand %p92, %p93
      %p95 = pneg %p94
      // Predicated region
      $region9: #{tpu_custom_call.1} parent=5 // pred_check
        _
      $region10: #{tpu_custom_call.1} parent=5 // pred_check_branch
        %97 = sbr.rel (%p94) target = $region12
      $region11: #{tpu_custom_call.1} parent=5 // pred_region
        %s98 = ssub.s32 %s11, 1
        // Predicated region
        $region13: #{tpu_custom_call.1} parent=11 // pred_check
          %p99 = pneg %p58
        $region14: #{tpu_custom_call.1} parent=11 // pred_check_branch
          %101 = sbr.rel (%p99) target = $region16
        $region15: #{tpu_custom_call.1} parent=11 // pred_region
          _
        $region16: #{tpu_custom_call.1} parent=11 // pred_fallthru
          _
      $region12: #{tpu_custom_call.1} parent=5 // pred_fallthru
        _
      %p102 = scmp.lt.s32.totalorder %s11, 2
      // Predicated region
      $region17: #{tpu_custom_call.1} parent=5 // pred_check
        %p103 = pneg %p102
      $region18: #{tpu_custom_call.1} parent=5 // pred_check_branch
        %105 = sbr.rel (%p103) target = $region20
      $region19: #{tpu_custom_call.1} parent=5 // pred_region
        // Predicated region
        $region21: #{tpu_custom_call.1} parent=19 // pred_check
          %p106 = pneg %p31
        $region22: #{tpu_custom_call.1} parent=19 // pred_check_branch
          %108 = sbr.rel (%p106) target = $region24
        $region23: #{tpu_custom_call.1} parent=19 // pred_region
          %p109 = scmp.lt.s32.totalorder %s11, 1
          %s110 = scalar_select %p109, %s11, 1
          %s111 = smul.addr %s110, 32
          %s112 = smul.addr %s111, 4
          %s113 = scalar_lea.vmem %s0, %s112
        $region24: #{tpu_custom_call.1} parent=19 // pred_fallthru
          _
      $region20: #{tpu_custom_call.1} parent=5 // pred_fallthru
        _
      %p114 = scmp.le.s32.totalorder 1, %s11
      %p115 = scmp.lt.s32.totalorder %s11, 3
      %p116 = pnand %p114, %p115
      %p117 = pneg %p116
      // Predicated region
      $region25: #{tpu_custom_call.1} parent=5 // pred_check
        _
      $region26: #{tpu_custom_call.1} parent=5 // pred_check_branch
        %119 = sbr.rel (%p116) target = $region28
      $region27: #{tpu_custom_call.1} parent=5 // pred_region
        %s120 = ssub.s32 %s11, 1
        %p121 = scmp.lt.s32.totalorder %s16, 1
        %s122 = scalar_select %p121, %s16, 1
        %s123 = smul.addr %s122, 32
        %s124 = smul.addr %s123, 4
        %s125 = scalar_lea.vmem %s0, %s124
        %p126 = pneg %p37
        %p127 = pneg %p34
        %p128 = pneg %p58
        %p129 = pneg %p55
        %p130 = pneg %p84
        %p131 = pneg %p81
        %s132 = sand.u32 %s71, 1
        %s133 = scalar_lea.sflag [#allocation5], %s132
        %s134 = sand.u32 %s71, 1
        %s135 = smul.addr %s134, 128
        %s136 = scalar_lea.vmem [#allocation4], %s135
        %p137 = scmp.lt.s32.totalorder %s16, 1
        %s138 = scalar_select %p137, %s16, 1
        %s139 = smul.addr %s138, 32
        %s140 = smul.addr %s139, 4
        %s141 = scalar_lea.vmem %s0, %s140
        %vm144 = vcmask 117760
        %145 = vst.msk [vmem:[#allocation2] sm:$0xf] %vm144, 0
        %146 = vst.msk [vmem:[#allocation2 + $0x4] sm:$0xf] %vm144, 0
        %vm147 = vcmask 114688
        %148 = vst.msk [vmem:[#allocation2 + $0x8] sm:$0x1] %vm147, 0
        %149 = vst.msk [vmem:[#allocation2 + $0xc] sm:$0xf] %vm144, 0
        %150 = vst.msk [vmem:[#allocation2 + $0x10] sm:$0xf] %vm144, 0
        %151 = vst.msk [vmem:[#allocation2 + $0x14] sm:$0x1] %vm147, 0
        %152 = vst.msk [vmem:[#allocation2 + $0x18] sm:$0xf] %vm144, 0
        %153 = vst.msk [vmem:[#allocation2 + $0x1c] sm:$0xf] %vm144, 0
        %154 = vst.msk [vmem:[#allocation2 + $0x20] sm:$0x1] %vm147, 0
        %155 = vst.msk [vmem:[#allocation2 + $0x24] sm:$0xf] %vm144, 0
        %156 = vst.msk [vmem:[#allocation2 + $0x28] sm:$0xf] %vm144, 0
        %157 = vst.msk [vmem:[#allocation2 + $0x2c] sm:$0x1] %vm147, 0
        %158 = vst.msk [vmem:[#allocation2 + $0x30] sm:$0xf] %vm144, 0
        %159 = vst.msk [vmem:[#allocation2 + $0x34] sm:$0xf] %vm144, 0
        %160 = vst.msk [vmem:[#allocation2 + $0x38] sm:$0x1] %vm147, 0
        %161 = vst.msk [vmem:[#allocation2 + $0x3c] sm:$0xf] %vm144, 0
        %162 = vst.msk [vmem:[#allocation2 + $0x40] sm:$0xf] %vm144, 0
        %163 = vst.msk [vmem:[#allocation2 + $0x44] sm:$0x1] %vm147, 0
        %164 = vst.msk [vmem:[#allocation2 + $0x48] sm:$0xf] %vm144, 0
        %165 = vst.msk [vmem:[#allocation2 + $0x4c] sm:$0xf] %vm144, 0
        %166 = vst.msk [vmem:[#allocation2 + $0x50] sm:$0x1] %vm147, 0
        %167 = vst.msk [vmem:[#allocation2 + $0x54] sm:$0xf] %vm144, 0
        %168 = vst.msk [vmem:[#allocation2 + $0x58] sm:$0xf] %vm144, 0
        %169 = vst.msk [vmem:[#allocation2 + $0x5c] sm:$0x1] %vm147, 0
        %170 = vst.msk [vmem:[#allocation2 + $0x60] sm:$0xf] %vm144, 0
        %171 = vst.msk [vmem:[#allocation2 + $0x64] sm:$0xf] %vm144, 0
        %172 = vst.msk [vmem:[#allocation2 + $0x68] sm:$0x1] %vm147, 0
        %173 = vst.msk [vmem:[#allocation2 + $0x6c] sm:$0xf] %vm144, 0
        %174 = vst.msk [vmem:[#allocation2 + $0x70] sm:$0xf] %vm144, 0
        %175 = vst.msk [vmem:[#allocation2 + $0x74] sm:$0x1] %vm147, 0
        %176 = vst.msk [vmem:[#allocation2 + $0x78] sm:$0xf] %vm144, 0
        %177 = vst.msk [vmem:[#allocation2 + $0x7c] sm:$0xf] %vm144, 0
        %178 = vst.msk [vmem:[#allocation2 + $0x80] sm:$0x1] %vm147, 0
        %179 = vst.msk [vmem:[#allocation2 + $0x84] sm:$0xf] %vm144, 0
        %180 = vst.msk [vmem:[#allocation2 + $0x88] sm:$0xf] %vm144, 0
        %181 = vst.msk [vmem:[#allocation2 + $0x8c] sm:$0x1] %vm147, 0
        %182 = vst.msk [vmem:[#allocation2 + $0x90] sm:$0xf] %vm144, 0
        %183 = vst.msk [vmem:[#allocation2 + $0x94] sm:$0xf] %vm144, 0
        %184 = vst.msk [vmem:[#allocation2 + $0x98] sm:$0x1] %vm147, 0
        %185 = vst.msk [vmem:[#allocation2 + $0x9c] sm:$0xf] %vm144, 0
        %186 = vst.msk [vmem:[#allocation2 + $0xa0] sm:$0xf] %vm144, 0
        %187 = vst.msk [vmem:[#allocation2 + $0xa4] sm:$0x1] %vm147, 0
        %188 = vst.msk [vmem:[#allocation2 + $0xa8] sm:$0xf] %vm144, 0
        %189 = vst.msk [vmem:[#allocation2 + $0xac] sm:$0xf] %vm144, 0
        %190 = vst.msk [vmem:[#allocation2 + $0xb0] sm:$0x1] %vm147, 0
        %191 = vst.msk [vmem:[#allocation2 + $0xb4] sm:$0xf] %vm144, 0
        %192 = vst.msk [vmem:[#allocation2 + $0xb8] sm:$0xf] %vm144, 0
        %193 = vst.msk [vmem:[#allocation2 + $0xbc] sm:$0x1] %vm147, 0
        %194 = vst.msk [vmem:[#allocation2 + $0xc0] sm:$0xf] %vm144, 0
        %195 = vst.msk [vmem:[#allocation2 + $0xc4] sm:$0xf] %vm144, 0
        %196 = vst.msk [vmem:[#allocation2 + $0xc8] sm:$0x1] %vm147, 0
        %197 = vst.msk [vmem:[#allocation2 + $0xcc] sm:$0xf] %vm144, 0
        %198 = vst.msk [vmem:[#allocation2 + $0xd0] sm:$0xf] %vm144, 0
        %199 = vst.msk [vmem:[#allocation2 + $0xd4] sm:$0x1] %vm147, 0
        %vm200 = vcmask 1043512
        %201 = vst.msk [vmem:[#allocation3 + $0x4] sm:$0xf] %vm200, 0
        %202 = vst.msk [vmem:[#allocation3 + $0xc] sm:$0xf] %vm200, 0
        %203 = vst.msk [vmem:[#allocation3 + $0x14] sm:$0xf] %vm200, 0
        %204 = vst.msk [vmem:[#allocation3 + $0x1c] sm:$0xf] %vm200, 0
        %205 = vst.msk [vmem:[#allocation3 + $0x24] sm:$0xf] %vm200, 0
        %206 = vst.msk [vmem:[#allocation3 + $0x2c] sm:$0xf] %vm200, 0
        %207 = vst.msk [vmem:[#allocation3 + $0x34] sm:$0xf] %vm200, 0
        %208 = vst.msk [vmem:[#allocation3 + $0x3c] sm:$0xf] %vm200, 0
        %209 = vst.msk [vmem:[#allocation3 + $0x44] sm:$0xf] %vm200, 0
        %210 = vst.msk [vmem:[#allocation3 + $0x4c] sm:$0xf] %vm200, 0
        %211 = vst.msk [vmem:[#allocation3 + $0x54] sm:$0xf] %vm200, 0
        %212 = vst.msk [vmem:[#allocation3 + $0x5c] sm:$0xf] %vm200, 0
        %213 = vst.msk [vmem:[#allocation3 + $0x64] sm:$0xf] %vm200, 0
        %214 = vst.msk [vmem:[#allocation3 + $0x6c] sm:$0xf] %vm200, 0
        %215 = vst.msk [vmem:[#allocation3 + $0x74] sm:$0xf] %vm200, 0
        %216 = vst.msk [vmem:[#allocation3 + $0x7c] sm:$0xf] %vm200, 0
        %217 = vst.msk [vmem:[#allocation3 + $0x84] sm:$0xf] %vm200, 0
        %218 = vst.msk [vmem:[#allocation3 + $0x8c] sm:$0xf] %vm200, 0
        %219 = vst.msk [vmem:[#allocation3 + $0x94] sm:$0xf] %vm200, 0
        %220 = vst.msk [vmem:[#allocation3 + $0x9c] sm:$0xf] %vm200, 0
        %221 = vst.msk [vmem:[#allocation3 + $0xa4] sm:$0xf] %vm200, 0
        %222 = vst.msk [vmem:[#allocation3 + $0xac] sm:$0xf] %vm200, 0
        %223 = vst.msk [vmem:[#allocation3 + $0xb4] sm:$0xf] %vm200, 0
        %224 = vst.msk [vmem:[#allocation3 + $0xbc] sm:$0xf] %vm200, 0
        %225 = vst.msk [vmem:[#allocation3 + $0xc4] sm:$0xf] %vm200, 0
        %226 = vst.msk [vmem:[#allocation3 + $0xcc] sm:$0xf] %vm200, 0
        %227 = vst.msk [vmem:[#allocation3 + $0xd4] sm:$0xf] %vm200, 0
        %228 = vst.msk [vmem:[#allocation3 + $0xdc] sm:$0xf] %vm200, 0
        %229 = vst.msk [vmem:[#allocation3 + $0xe4] sm:$0xf] %vm200, 0
        %230 = vst.msk [vmem:[#allocation3 + $0xec] sm:$0xf] %vm200, 0
        %231 = vst.msk [vmem:[#allocation3 + $0xf4] sm:$0xf] %vm200, 0
        %232 = vst.msk [vmem:[#allocation3 + $0xfc] sm:$0xf] %vm200, 0
        %vm233 = vcmask 60472
        %234 = vst.msk [vmem:[#allocation3 + $0x4] sm:$0xf] %vm233, 1065369472
        %235 = vst.msk [vmem:[#allocation3 + $0xc] sm:$0xf] %vm233, 1065369472
        %236 = vst.msk [vmem:[#allocation3 + $0x14] sm:$0xf] %vm233, 1065369472
        %237 = vst.msk [vmem:[#allocation3 + $0x1c] sm:$0xf] %vm233, 1065369472
        %238 = vst.msk [vmem:[#allocation3 + $0x24] sm:$0xf] %vm233, 1065369472
        %239 = vst.msk [vmem:[#allocation3 + $0x2c] sm:$0xf] %vm233, 1065369472
        %240 = vst.msk [vmem:[#allocation3 + $0x34] sm:$0xf] %vm233, 1065369472
        %241 = vst.msk [vmem:[#allocation3 + $0x3c] sm:$0xf] %vm233, 1065369472
        %242 = vst.msk [vmem:[#allocation3 + $0x44] sm:$0xf] %vm233, 1065369472
        %243 = vst.msk [vmem:[#allocation3 + $0x4c] sm:$0xf] %vm233, 1065369472
        %244 = vst.msk [vmem:[#allocation3 + $0x54] sm:$0xf] %vm233, 1065369472
        %245 = vst.msk [vmem:[#allocation3 + $0x5c] sm:$0xf] %vm233, 1065369472
        %246 = vst.msk [vmem:[#allocation3 + $0x64] sm:$0xf] %vm233, 1065369472
        %247 = vst.msk [vmem:[#allocation3 + $0x6c] sm:$0xf] %vm233, 1065369472
        %248 = vst.msk [vmem:[#allocation3 + $0x74] sm:$0xf] %vm233, 1065369472
        %249 = vst.msk [vmem:[#allocation3 + $0x7c] sm:$0xf] %vm233, 1065369472
        %250 = vst.msk [vmem:[#allocation3 + $0x84] sm:$0xf] %vm233, 1065369472
        %251 = vst.msk [vmem:[#allocation3 + $0x8c] sm:$0xf] %vm233, 1065369472
        %252 = vst.msk [vmem:[#allocation3 + $0x94] sm:$0xf] %vm233, 1065369472
        %253 = vst.msk [vmem:[#allocation3 + $0x9c] sm:$0xf] %vm233, 1065369472
        %254 = vst.msk [vmem:[#allocation3 + $0xa4] sm:$0xf] %vm233, 1065369472
        %255 = vst.msk [vmem:[#allocation3 + $0xac] sm:$0xf] %vm233, 1065369472
        %256 = vst.msk [vmem:[#allocation3 + $0xb4] sm:$0xf] %vm233, 1065369472
        %257 = vst.msk [vmem:[#allocation3 + $0xbc] sm:$0xf] %vm233, 1065369472
        %258 = vst.msk [vmem:[#allocation3 + $0xc4] sm:$0xf] %vm233, 1065369472
        %259 = vst.msk [vmem:[#allocation3 + $0xcc] sm:$0xf] %vm233, 1065369472
        %260 = vst.msk [vmem:[#allocation3 + $0xd4] sm:$0xf] %vm233, 1065369472
        %261 = vst.msk [vmem:[#allocation3 + $0xdc] sm:$0xf] %vm233, 1065369472
        %262 = vst.msk [vmem:[#allocation3 + $0xe4] sm:$0xf] %vm233, 1065369472
        %263 = vst.msk [vmem:[#allocation3 + $0xec] sm:$0xf] %vm233, 1065369472
        %264 = vst.msk [vmem:[#allocation3 + $0xf4] sm:$0xf] %vm233, 1065369472
        %265 = vst.msk [vmem:[#allocation3 + $0xfc] sm:$0xf] %vm233, 1065369472
        %v266 = vld [vmem:[%s141] sm:$0xf]
        %v267 = vld [vmem:[%s141 + $0x4] sm:$0xf]
        %v268 = vld [vmem:[%s141 + $0x8] sm:$0xf]
        %v269 = vld [vmem:[%s141 + $0xc] sm:$0xf]
        %v270 = vld [vmem:[%s141 + $0x10] sm:$0xf]
        %v271 = vld [vmem:[%s141 + $0x14] sm:$0xf]
        %v272 = vld [vmem:[%s141 + $0x18] sm:$0xf]
        %v273 = vld [vmem:[%s141 + $0x1c] sm:$0xf]
        %v274 = vld [vmem:[%s141 + $0x20] sm:$0xf]
        %v275 = vld [vmem:[%s141 + $0x24] sm:$0xf]
        %v276 = vld [vmem:[%s141 + $0x28] sm:$0xf]
        %v277 = vld [vmem:[%s141 + $0x2c] sm:$0xf]
        %v278 = vld [vmem:[%s141 + $0x30] sm:$0xf]
        %v279 = vld [vmem:[%s141 + $0x34] sm:$0xf]
        %v280 = vld [vmem:[%s141 + $0x38] sm:$0xf]
        %v281 = vld [vmem:[%s141 + $0x3c] sm:$0xf]
        %v282 = vld [vmem:[%s141 + $0x40] sm:$0xf]
        %v283 = vld [vmem:[%s141 + $0x44] sm:$0xf]
        %v284 = vld [vmem:[%s141 + $0x48] sm:$0xf]
        %v285 = vld [vmem:[%s141 + $0x4c] sm:$0xf]
        %v286 = vld [vmem:[%s141 + $0x50] sm:$0xf]
        %v287 = vld [vmem:[%s141 + $0x54] sm:$0xf]
        %v288 = vld [vmem:[%s141 + $0x58] sm:$0xf]
        %v289 = vld [vmem:[%s141 + $0x5c] sm:$0xf]
        %v290 = vld [vmem:[%s141 + $0x60] sm:$0xf]
        %v291 = vld [vmem:[%s141 + $0x64] sm:$0xf]
        %v292 = vld [vmem:[%s141 + $0x68] sm:$0xf]
        %v293 = vld [vmem:[%s141 + $0x6c] sm:$0xf]
        %v294 = vld [vmem:[%s141 + $0x70] sm:$0xf]
        %v295 = vld [vmem:[%s141 + $0x74] sm:$0xf]
        %v296 = vld [vmem:[%s141 + $0x78] sm:$0xf]
        %v297 = vld [vmem:[%s141 + $0x7c] sm:$0xf]
        %vm298 = vsmask.f32 256
        %vm299 = vsmask.f32 4368
        %vm300 = vmor %vm298, %vm299
        %v302 = vshrl.u32 %v266, 16
        %v304 = vrot.slane %v302, 7
        %v305 = vshll.u32 %v266, 16
        %v307 = vor.u32 %v304, %v305
        %v308 = vrot.slane %v304, 4
        %v310 = vshrl.u32 %v267, 16
        %v312 = vrot.slane %v310, 7
        %v313 = vshll.u32 %v267, 16
        %v315 = vor.u32 %v312, %v313
        %v316 = vsel %vm300, %v308, %v315
        %v317 = vrot.slane %v312, 4
        %v319 = vshrl.u32 %v268, 16
        %v321 = vrot.slane %v319, 7
        %v322 = vshll.u32 %v268, 16
        %v324 = vor.u32 %v321, %v322
        %v325 = vrot.slane %v321, 4
        %v327 = vshrl.u32 %v269, 16
        %v329 = vrot.slane %v327, 7
        %v330 = vshll.u32 %v269, 16
        %v332 = vor.u32 %v329, %v330
        %v333 = vsel %vm300, %v325, %v332
        %v334 = vrot.slane %v329, 4
        %v336 = vshrl.u32 %v270, 16
        %v338 = vrot.slane %v336, 7
        %v339 = vshll.u32 %v270, 16
        %v341 = vor.u32 %v338, %v339
        %v342 = vrot.slane %v338, 4
        %v344 = vshrl.u32 %v271, 16
        %v346 = vrot.slane %v344, 7
        %v347 = vshll.u32 %v271, 16
        %v349 = vor.u32 %v346, %v347
        %v350 = vsel %vm300, %v342, %v349
        %v351 = vrot.slane %v346, 4
        %v353 = vshrl.u32 %v272, 16
        %v355 = vrot.slane %v353, 7
        %v356 = vshll.u32 %v272, 16
        %v358 = vor.u32 %v355, %v356
        %v359 = vrot.slane %v355, 4
        %v361 = vshrl.u32 %v273, 16
        %v363 = vrot.slane %v361, 7
        %v364 = vshll.u32 %v273, 16
        %v366 = vor.u32 %v363, %v364
        %v367 = vsel %vm300, %v359, %v366
        %v368 = vrot.slane %v363, 4
        %v370 = vshrl.u32 %v274, 16
        %v372 = vrot.slane %v370, 7
        %v373 = vshll.u32 %v274, 16
        %v375 = vor.u32 %v372, %v373
        %v376 = vrot.slane %v372, 4
        %v378 = vshrl.u32 %v275, 16
        %v380 = vrot.slane %v378, 7
        %v381 = vshll.u32 %v275, 16
        %v383 = vor.u32 %v380, %v381
        %v384 = vsel %vm300, %v376, %v383
        %v385 = vrot.slane %v380, 4
        %v387 = vshrl.u32 %v276, 16
        %v389 = vrot.slane %v387, 7
        %v390 = vshll.u32 %v276, 16
        %v392 = vor.u32 %v389, %v390
        %v393 = vrot.slane %v389, 4
        %v395 = vshrl.u32 %v277, 16
        %v397 = vrot.slane %v395, 7
        %v398 = vshll.u32 %v277, 16
        %v400 = vor.u32 %v397, %v398
        %v401 = vsel %vm300, %v393, %v400
        %v402 = vrot.slane %v397, 4
        %v404 = vshrl.u32 %v278, 16
        %v406 = vrot.slane %v404, 7
        %v407 = vshll.u32 %v278, 16
        %v409 = vor.u32 %v406, %v407
        %v410 = vrot.slane %v406, 4
        %v412 = vshrl.u32 %v279, 16
        %v414 = vrot.slane %v412, 7
        %v415 = vshll.u32 %v279, 16
        %v417 = vor.u32 %v414, %v415
        %v418 = vsel %vm300, %v410, %v417
        %v419 = vrot.slane %v414, 4
        %v421 = vshrl.u32 %v280, 16
        %v423 = vrot.slane %v421, 7
        %v424 = vshll.u32 %v280, 16
        %v426 = vor.u32 %v423, %v424
        %v427 = vrot.slane %v423, 4
        %v429 = vshrl.u32 %v281, 16
        %v431 = vrot.slane %v429, 7
        %v432 = vshll.u32 %v281, 16
        %v434 = vor.u32 %v431, %v432
        %v435 = vsel %vm300, %v427, %v434
        %v436 = vrot.slane %v431, 4
        %v438 = vshrl.u32 %v282, 16
        %v440 = vrot.slane %v438, 7
        %v441 = vshll.u32 %v282, 16
        %v443 = vor.u32 %v440, %v441
        %v444 = vrot.slane %v440, 4
        %v446 = vshrl.u32 %v283, 16
        %v448 = vrot.slane %v446, 7
        %v449 = vshll.u32 %v283, 16
        %v451 = vor.u32 %v448, %v449
        %v452 = vsel %vm300, %v444, %v451
        %v453 = vrot.slane %v448, 4
        %v455 = vshrl.u32 %v284, 16
        %v457 = vrot.slane %v455, 7
        %v458 = vshll.u32 %v284, 16
        %v460 = vor.u32 %v457, %v458
        %v461 = vrot.slane %v457, 4
        %v463 = vshrl.u32 %v285, 16
        %v465 = vrot.slane %v463, 7
        %v466 = vshll.u32 %v285, 16
        %v468 = vor.u32 %v465, %v466
        %v469 = vsel %vm300, %v461, %v468
        %v470 = vrot.slane %v465, 4
        %v472 = vshrl.u32 %v286, 16
        %v474 = vrot.slane %v472, 7
        %v475 = vshll.u32 %v286, 16
        %v477 = vor.u32 %v474, %v475
        %v478 = vrot.slane %v474, 4
        %v480 = vshrl.u32 %v287, 16
        %v482 = vrot.slane %v480, 7
        %v483 = vshll.u32 %v287, 16
        %v485 = vor.u32 %v482, %v483
        %v486 = vsel %vm300, %v478, %v485
        %v487 = vrot.slane %v482, 4
        %v489 = vshrl.u32 %v288, 16
        %v491 = vrot.slane %v489, 7
        %v492 = vshll.u32 %v288, 16
        %v494 = vor.u32 %v491, %v492
        %v495 = vrot.slane %v491, 4
        %v497 = vshrl.u32 %v289, 16
        %v499 = vrot.slane %v497, 7
        %v500 = vshll.u32 %v289, 16
        %v502 = vor.u32 %v499, %v500
        %v503 = vsel %vm300, %v495, %v502
        %v504 = vrot.slane %v499, 4
        %v506 = vshrl.u32 %v290, 16
        %v508 = vrot.slane %v506, 7
        %v509 = vshll.u32 %v290, 16
        %v511 = vor.u32 %v508, %v509
        %v512 = vrot.slane %v508, 4
        %v514 = vshrl.u32 %v291, 16
        %v516 = vrot.slane %v514, 7
        %v517 = vshll.u32 %v291, 16
        %v519 = vor.u32 %v516, %v517
        %v520 = vsel %vm300, %v512, %v519
        %v521 = vrot.slane %v516, 4
        %v523 = vshrl.u32 %v292, 16
        %v525 = vrot.slane %v523, 7
        %v526 = vshll.u32 %v292, 16
        %v528 = vor.u32 %v525, %v526
        %v529 = vrot.slane %v525, 4
        %v531 = vshrl.u32 %v293, 16
        %v533 = vrot.slane %v531, 7
        %v534 = vshll.u32 %v293, 16
        %v536 = vor.u32 %v533, %v534
        %v537 = vsel %vm300, %v529, %v536
        %v538 = vrot.slane %v533, 4
        %v540 = vshrl.u32 %v294, 16
        %v542 = vrot.slane %v540, 7
        %v543 = vshll.u32 %v294, 16
        %v545 = vor.u32 %v542, %v543
        %v546 = vrot.slane %v542, 4
        %v548 = vshrl.u32 %v295, 16
        %v550 = vrot.slane %v548, 7
        %v551 = vshll.u32 %v295, 16
        %v553 = vor.u32 %v550, %v551
        %v554 = vsel %vm300, %v546, %v553
        %v555 = vrot.slane %v550, 4
        %v557 = vshrl.u32 %v296, 16
        %v559 = vrot.slane %v557, 7
        %v560 = vshll.u32 %v296, 16
        %v562 = vor.u32 %v559, %v560
        %v563 = vrot.slane %v559, 4
        %v565 = vshrl.u32 %v297, 16
        %v567 = vrot.slane %v565, 7
        %v568 = vshll.u32 %v297, 16
        %v570 = vor.u32 %v567, %v568
        %v571 = vsel %vm300, %v563, %v570
        %v572 = vrot.slane %v567, 4
        %s621 = scalar_lea.vmem [#allocation2], 12
        %vm622 = vcmask 117760
        %vm623 = vsmask.f32 7938
        %vm624 = vmand %vm622, %vm623
        %v625 = vld [vmem:[%s621] sm:$0xf]
        %v626 = vsel %vm624, %v307, %v625
        %627 = vst [vmem:[%s621] sm:$0xf] %v626
        %628 = vst.msk [vmem:[%s621 + $0x4] sm:$0xf] %vm144, %v316
        %vm629 = vcmask 114688
        %vm630 = vmand %vm629, %vm298
        %v631 = vld [vmem:[%s621 + $0x8] sm:$0x1]
        %v632 = vsel %vm630, %v317, %v631
        %633 = vst [vmem:[%s621 + $0x8] sm:$0x1] %v632
        %v634 = vld [vmem:[%s621 + $0xc] sm:$0xf]
        %v635 = vsel %vm624, %v324, %v634
        %636 = vst [vmem:[%s621 + $0xc] sm:$0xf] %v635
        %637 = vst.msk [vmem:[%s621 + $0x10] sm:$0xf] %vm144, %v333
        %v638 = vld [vmem:[%s621 + $0x14] sm:$0x1]
        %v639 = vsel %vm630, %v334, %v638
        %640 = vst [vmem:[%s621 + $0x14] sm:$0x1] %v639
        %v641 = vld [vmem:[%s621 + $0x18] sm:$0xf]
        %v642 = vsel %vm624, %v341, %v641
        %643 = vst [vmem:[%s621 + $0x18] sm:$0xf] %v642
        %644 = vst.msk [vmem:[%s621 + $0x1c] sm:$0xf] %vm144, %v350
        %v645 = vld [vmem:[%s621 + $0x20] sm:$0x1]
        %v646 = vsel %vm630, %v351, %v645
        %647 = vst [vmem:[%s621 + $0x20] sm:$0x1] %v646
        %v648 = vld [vmem:[%s621 + $0x24] sm:$0xf]
        %v649 = vsel %vm624, %v358, %v648
        %650 = vst [vmem:[%s621 + $0x24] sm:$0xf] %v649
        %651 = vst.msk [vmem:[%s621 + $0x28] sm:$0xf] %vm144, %v367
        %v652 = vld [vmem:[%s621 + $0x2c] sm:$0x1]
        %v653 = vsel %vm630, %v368, %v652
        %654 = vst [vmem:[%s621 + $0x2c] sm:$0x1] %v653
        %v655 = vld [vmem:[%s621 + $0x30] sm:$0xf]
        %v656 = vsel %vm624, %v375, %v655
        %657 = vst [vmem:[%s621 + $0x30] sm:$0xf] %v656
        %658 = vst.msk [vmem:[%s621 + $0x34] sm:$0xf] %vm144, %v384
        %v659 = vld [vmem:[%s621 + $0x38] sm:$0x1]
        %v660 = vsel %vm630, %v385, %v659
        %661 = vst [vmem:[%s621 + $0x38] sm:$0x1] %v660
        %v662 = vld [vmem:[%s621 + $0x3c] sm:$0xf]
        %v663 = vsel %vm624, %v392, %v662
        %664 = vst [vmem:[%s621 + $0x3c] sm:$0xf] %v663
        %665 = vst.msk [vmem:[%s621 + $0x40] sm:$0xf] %vm144, %v401
        %v666 = vld [vmem:[%s621 + $0x44] sm:$0x1]
        %v667 = vsel %vm630, %v402, %v666
        %668 = vst [vmem:[%s621 + $0x44] sm:$0x1] %v667
        %v669 = vld [vmem:[%s621 + $0x48] sm:$0xf]
        %v670 = vsel %vm624, %v409, %v669
        %671 = vst [vmem:[%s621 + $0x48] sm:$0xf] %v670
        %672 = vst.msk [vmem:[%s621 + $0x4c] sm:$0xf] %vm144, %v418
        %v673 = vld [vmem:[%s621 + $0x50] sm:$0x1]
        %v674 = vsel %vm630, %v419, %v673
        %675 = vst [vmem:[%s621 + $0x50] sm:$0x1] %v674
        %v676 = vld [vmem:[%s621 + $0x54] sm:$0xf]
        %v677 = vsel %vm624, %v426, %v676
        %678 = vst [vmem:[%s621 + $0x54] sm:$0xf] %v677
        %679 = vst.msk [vmem:[%s621 + $0x58] sm:$0xf] %vm144, %v435
        %v680 = vld [vmem:[%s621 + $0x5c] sm:$0x1]
        %v681 = vsel %vm630, %v436, %v680
        %682 = vst [vmem:[%s621 + $0x5c] sm:$0x1] %v681
        %v683 = vld [vmem:[%s621 + $0x60] sm:$0xf]
        %v684 = vsel %vm624, %v443, %v683
        %685 = vst [vmem:[%s621 + $0x60] sm:$0xf] %v684
        %686 = vst.msk [vmem:[%s621 + $0x64] sm:$0xf] %vm144, %v452
        %v687 = vld [vmem:[%s621 + $0x68] sm:$0x1]
        %v688 = vsel %vm630, %v453, %v687
        %689 = vst [vmem:[%s621 + $0x68] sm:$0x1] %v688
        %v690 = vld [vmem:[%s621 + $0x6c] sm:$0xf]
        %v691 = vsel %vm624, %v460, %v690
        %692 = vst [vmem:[%s621 + $0x6c] sm:$0xf] %v691
        %693 = vst.msk [vmem:[%s621 + $0x70] sm:$0xf] %vm144, %v469
        %v694 = vld [vmem:[%s621 + $0x74] sm:$0x1]
        %v695 = vsel %vm630, %v470, %v694
        %696 = vst [vmem:[%s621 + $0x74] sm:$0x1] %v695
        %v697 = vld [vmem:[%s621 + $0x78] sm:$0xf]
        %v698 = vsel %vm624, %v477, %v697
        %699 = vst [vmem:[%s621 + $0x78] sm:$0xf] %v698
        %700 = vst.msk [vmem:[%s621 + $0x7c] sm:$0xf] %vm144, %v486
        %v701 = vld [vmem:[%s621 + $0x80] sm:$0x1]
        %v702 = vsel %vm630, %v487, %v701
        %703 = vst [vmem:[%s621 + $0x80] sm:$0x1] %v702
        %v704 = vld [vmem:[%s621 + $0x84] sm:$0xf]
        %v705 = vsel %vm624, %v494, %v704
        %706 = vst [vmem:[%s621 + $0x84] sm:$0xf] %v705
        %707 = vst.msk [vmem:[%s621 + $0x88] sm:$0xf] %vm144, %v503
        %v708 = vld [vmem:[%s621 + $0x8c] sm:$0x1]
        %v709 = vsel %vm630, %v504, %v708
        %710 = vst [vmem:[%s621 + $0x8c] sm:$0x1] %v709
        %v711 = vld [vmem:[%s621 + $0x90] sm:$0xf]
        %v712 = vsel %vm624, %v511, %v711
        %713 = vst [vmem:[%s621 + $0x90] sm:$0xf] %v712
        %714 = vst.msk [vmem:[%s621 + $0x94] sm:$0xf] %vm144, %v520
        %v715 = vld [vmem:[%s621 + $0x98] sm:$0x1]
        %v716 = vsel %vm630, %v521, %v715
        %717 = vst [vmem:[%s621 + $0x98] sm:$0x1] %v716
        %v718 = vld [vmem:[%s621 + $0x9c] sm:$0xf]
        %v719 = vsel %vm624, %v528, %v718
        %720 = vst [vmem:[%s621 + $0x9c] sm:$0xf] %v719
        %721 = vst.msk [vmem:[%s621 + $0xa0] sm:$0xf] %vm144, %v537
        %v722 = vld [vmem:[%s621 + $0xa4] sm:$0x1]
        %v723 = vsel %vm630, %v538, %v722
        %724 = vst [vmem:[%s621 + $0xa4] sm:$0x1] %v723
        %v725 = vld [vmem:[%s621 + $0xa8] sm:$0xf]
        %v726 = vsel %vm624, %v545, %v725
        %727 = vst [vmem:[%s621 + $0xa8] sm:$0xf] %v726
        %728 = vst.msk [vmem:[%s621 + $0xac] sm:$0xf] %vm144, %v554
        %v729 = vld [vmem:[%s621 + $0xb0] sm:$0x1]
        %v730 = vsel %vm630, %v555, %v729
        %731 = vst [vmem:[%s621 + $0xb0] sm:$0x1] %v730
        %v732 = vld [vmem:[%s621 + $0xb4] sm:$0xf]
        %v733 = vsel %vm624, %v562, %v732
        %734 = vst [vmem:[%s621 + $0xb4] sm:$0xf] %v733
        %735 = vst.msk [vmem:[%s621 + $0xb8] sm:$0xf] %vm144, %v571
        %v736 = vld [vmem:[%s621 + $0xbc] sm:$0x1]
        %v737 = vsel %vm630, %v572, %v736
        %738 = vst [vmem:[%s621 + $0xbc] sm:$0x1] %v737
        %v739 = vld [vmem:[#allocation2] sm:$0xf]
        %v740 = vld [vmem:[#allocation2 + $0x4] sm:$0xf]
        %v741 = vld [vmem:[#allocation2 + $0xc] sm:$0xf]
        %v742 = vld [vmem:[#allocation2 + $0x10] sm:$0xf]
        %v743 = vld [vmem:[#allocation2 + $0x18] sm:$0xf]
        %v744 = vld [vmem:[#allocation2 + $0x1c] sm:$0xf]
        %v745 = vld [vmem:[#allocation2 + $0x24] sm:$0xf]
        %v746 = vld [vmem:[#allocation2 + $0x28] sm:$0xf]
        %v747 = vld [vmem:[#allocation2 + $0x30] sm:$0xf]
        %v748 = vld [vmem:[#allocation2 + $0x34] sm:$0xf]
        %v749 = vld [vmem:[#allocation2 + $0x3c] sm:$0xf]
        %v750 = vld [vmem:[#allocation2 + $0x40] sm:$0xf]
        %v751 = vld [vmem:[#allocation2 + $0x48] sm:$0xf]
        %v752 = vld [vmem:[#allocation2 + $0x4c] sm:$0xf]
        %v753 = vld [vmem:[#allocation2 + $0x54] sm:$0xf]
        %v754 = vld [vmem:[#allocation2 + $0x58] sm:$0xf]
        %v755 = vld [vmem:[#allocation2 + $0x60] sm:$0xf]
        %v756 = vld [vmem:[#allocation2 + $0x64] sm:$0xf]
        %v757 = vld [vmem:[#allocation2 + $0x6c] sm:$0xf]
        %v758 = vld [vmem:[#allocation2 + $0x70] sm:$0xf]
        %v759 = vld [vmem:[#allocation2 + $0x78] sm:$0xf]
        %v760 = vld [vmem:[#allocation2 + $0x7c] sm:$0xf]
        %v761 = vld [vmem:[#allocation2 + $0x84] sm:$0xf]
        %v762 = vld [vmem:[#allocation2 + $0x88] sm:$0xf]
        %v763 = vld [vmem:[#allocation2 + $0x90] sm:$0xf]
        %v764 = vld [vmem:[#allocation2 + $0x94] sm:$0xf]
        %v765 = vld [vmem:[#allocation2 + $0x9c] sm:$0xf]
        %v766 = vld [vmem:[#allocation2 + $0xa0] sm:$0xf]
        %v767 = vld [vmem:[#allocation2 + $0xa8] sm:$0xf]
        %v768 = vld [vmem:[#allocation2 + $0xac] sm:$0xf]
        %v769 = vld [vmem:[#allocation2 + $0xb4] sm:$0xf]
        %v770 = vld [vmem:[#allocation2 + $0xb8] sm:$0xf]
        %771 = vst.msk [vmem:[#allocation3] sm:$0xf] %vm144, %v739
        %772 = vst.msk [vmem:[#allocation3 + $0x8] sm:$0xf] %vm144, %v740
        %773 = vst.msk [vmem:[#allocation3 + $0x10] sm:$0xf] %vm144, %v741
        %774 = vst.msk [vmem:[#allocation3 + $0x18] sm:$0xf] %vm144, %v742
        %775 = vst.msk [vmem:[#allocation3 + $0x20] sm:$0xf] %vm144, %v743
        %776 = vst.msk [vmem:[#allocation3 + $0x28] sm:$0xf] %vm144, %v744
        %777 = vst.msk [vmem:[#allocation3 + $0x30] sm:$0xf] %vm144, %v745
        %778 = vst.msk [vmem:[#allocation3 + $0x38] sm:$0xf] %vm144, %v746
        %779 = vst.msk [vmem:[#allocation3 + $0x40] sm:$0xf] %vm144, %v747
        %780 = vst.msk [vmem:[#allocation3 + $0x48] sm:$0xf] %vm144, %v748
        %781 = vst.msk [vmem:[#allocation3 + $0x50] sm:$0xf] %vm144, %v749
        %782 = vst.msk [vmem:[#allocation3 + $0x58] sm:$0xf] %vm144, %v750
        %783 = vst.msk [vmem:[#allocation3 + $0x60] sm:$0xf] %vm144, %v751
        %784 = vst.msk [vmem:[#allocation3 + $0x68] sm:$0xf] %vm144, %v752
        %785 = vst.msk [vmem:[#allocation3 + $0x70] sm:$0xf] %vm144, %v753
        %786 = vst.msk [vmem:[#allocation3 + $0x78] sm:$0xf] %vm144, %v754
        %787 = vst.msk [vmem:[#allocation3 + $0x80] sm:$0xf] %vm144, %v755
        %788 = vst.msk [vmem:[#allocation3 + $0x88] sm:$0xf] %vm144, %v756
        %789 = vst.msk [vmem:[#allocation3 + $0x90] sm:$0xf] %vm144, %v757
        %790 = vst.msk [vmem:[#allocation3 + $0x98] sm:$0xf] %vm144, %v758
        %791 = vst.msk [vmem:[#allocation3 + $0xa0] sm:$0xf] %vm144, %v759
        %792 = vst.msk [vmem:[#allocation3 + $0xa8] sm:$0xf] %vm144, %v760
        %793 = vst.msk [vmem:[#allocation3 + $0xb0] sm:$0xf] %vm144, %v761
        %794 = vst.msk [vmem:[#allocation3 + $0xb8] sm:$0xf] %vm144, %v762
        %795 = vst.msk [vmem:[#allocation3 + $0xc0] sm:$0xf] %vm144, %v763
        %796 = vst.msk [vmem:[#allocation3 + $0xc8] sm:$0xf] %vm144, %v764
        %797 = vst.msk [vmem:[#allocation3 + $0xd0] sm:$0xf] %vm144, %v765
        %798 = vst.msk [vmem:[#allocation3 + $0xd8] sm:$0xf] %vm144, %v766
        %799 = vst.msk [vmem:[#allocation3 + $0xe0] sm:$0xf] %vm144, %v767
        %800 = vst.msk [vmem:[#allocation3 + $0xe8] sm:$0xf] %vm144, %v768
        %801 = vst.msk [vmem:[#allocation3 + $0xf0] sm:$0xf] %vm144, %v769
        %802 = vst.msk [vmem:[#allocation3 + $0xf8] sm:$0xf] %vm144, %v770
        %v803 = vld [vmem:[#allocation2] sm:$0xf]
        %v804 = vld [vmem:[#allocation2 + $0x4] sm:$0xf]
        %v805 = vld [vmem:[#allocation2 + $0x8] sm:$0x1]
        %v806 = vld [vmem:[#allocation2 + $0xc] sm:$0xf]
        %v807 = vld [vmem:[#allocation2 + $0x10] sm:$0xf]
        %v808 = vld [vmem:[#allocation2 + $0x14] sm:$0x1]
        %v809 = vld [vmem:[#allocation2 + $0x18] sm:$0xf]
        %v810 = vld [vmem:[#allocation2 + $0x1c] sm:$0xf]
        %v811 = vld [vmem:[#allocation2 + $0x20] sm:$0x1]
        %v812 = vld [vmem:[#allocation2 + $0x24] sm:$0xf]
        %v813 = vld [vmem:[#allocation2 + $0x28] sm:$0xf]
        %v814 = vld [vmem:[#allocation2 + $0x2c] sm:$0x1]
        %v815 = vld [vmem:[#allocation2 + $0x30] sm:$0xf]
        %v816 = vld [vmem:[#allocation2 + $0x34] sm:$0xf]
        %v817 = vld [vmem:[#allocation2 + $0x38] sm:$0x1]
        %v818 = vld [vmem:[#allocation2 + $0x3c] sm:$0xf]
        %v819 = vld [vmem:[#allocation2 + $0x40] sm:$0xf]
        %v820 = vld [vmem:[#allocation2 + $0x44] sm:$0x1]
        %v821 = vld [vmem:[#allocation2 + $0x48] sm:$0xf]
        %v822 = vld [vmem:[#allocation2 + $0x4c] sm:$0xf]
        %v823 = vld [vmem:[#allocation2 + $0x50] sm:$0x1]
        %v824 = vld [vmem:[#allocation2 + $0x54] sm:$0xf]
        %v825 = vld [vmem:[#allocation2 + $0x58] sm:$0xf]
        %v826 = vld [vmem:[#allocation2 + $0x5c] sm:$0x1]
        %v827 = vld [vmem:[#allocation2 + $0x60] sm:$0xf]
        %v828 = vld [vmem:[#allocation2 + $0x64] sm:$0xf]
        %v829 = vld [vmem:[#allocation2 + $0x68] sm:$0x1]
        %v830 = vld [vmem:[#allocation2 + $0x6c] sm:$0xf]
        %v831 = vld [vmem:[#allocation2 + $0x70] sm:$0xf]
        %v832 = vld [vmem:[#allocation2 + $0x74] sm:$0x1]
        %v833 = vld [vmem:[#allocation2 + $0x78] sm:$0xf]
        %v834 = vld [vmem:[#allocation2 + $0x7c] sm:$0xf]
        %v835 = vld [vmem:[#allocation2 + $0x80] sm:$0x1]
        %v836 = vld [vmem:[#allocation2 + $0x84] sm:$0xf]
        %v837 = vld [vmem:[#allocation2 + $0x88] sm:$0xf]
        %v838 = vld [vmem:[#allocation2 + $0x8c] sm:$0x1]
        %v839 = vld [vmem:[#allocation2 + $0x90] sm:$0xf]
        %v840 = vld [vmem:[#allocation2 + $0x94] sm:$0xf]
        %v841 = vld [vmem:[#allocation2 + $0x98] sm:$0x1]
        %v842 = vld [vmem:[#allocation2 + $0x9c] sm:$0xf]
        %v843 = vld [vmem:[#allocation2 + $0xa0] sm:$0xf]
        %v844 = vld [vmem:[#allocation2 + $0xa4] sm:$0x1]
        %v845 = vld [vmem:[#allocation2 + $0xa8] sm:$0xf]
        %v846 = vld [vmem:[#allocation2 + $0xac] sm:$0xf]
        %v847 = vld [vmem:[#allocation2 + $0xb0] sm:$0x1]
        %v848 = vld [vmem:[#allocation2 + $0xb4] sm:$0xf]
        %v849 = vld [vmem:[#allocation2 + $0xb8] sm:$0xf]
        %v850 = vld [vmem:[#allocation2 + $0xbc] sm:$0x1]
        %vm851 = vsmask.f32 3328
        %vm852 = vsmask.f32 7440
        %vm853 = vmor %vm851, %vm852
        %v855 = vshrl.u32 %v803, 16
        %v857 = vrot.slane %v855, 4
        %v858 = vshll.u32 %v803, 16
        %v860 = vrot.slane %v858, 5
        %v861 = vor.u32 %v857, %v860
        %v862 = vrot.slane %v861, 4
        %v864 = vshll.u32 %v804, 16
        %v866 = vrot.slane %v864, 5
        %v867 = vsel %vm853, %v862, %v866
        %v868 = vshrl.u32 %v804, 16
        %v870 = vrot.slane %v868, 4
        %v871 = vor.u32 %v870, %v866
        %v872 = vrot.slane %v871, 4
        %v874 = vshll.u32 %v805, 16
        %v876 = vrot.slane %v874, 5
        %v877 = vsel %vm853, %v872, %v876
        %v879 = vshrl.u32 %v806, 16
        %v881 = vrot.slane %v879, 4
        %v882 = vshll.u32 %v806, 16
        %v884 = vrot.slane %v882, 5
        %v885 = vor.u32 %v881, %v884
        %v886 = vrot.slane %v885, 4
        %v888 = vshll.u32 %v807, 16
        %v890 = vrot.slane %v888, 5
        %v891 = vsel %vm853, %v886, %v890
        %v892 = vshrl.u32 %v807, 16
        %v894 = vrot.slane %v892, 4
        %v895 = vor.u32 %v894, %v890
        %v896 = vrot.slane %v895, 4
        %v898 = vshll.u32 %v808, 16
        %v900 = vrot.slane %v898, 5
        %v901 = vsel %vm853, %v896, %v900
        %v903 = vshrl.u32 %v809, 16
        %v905 = vrot.slane %v903, 4
        %v906 = vshll.u32 %v809, 16
        %v908 = vrot.slane %v906, 5
        %v909 = vor.u32 %v905, %v908
        %v910 = vrot.slane %v909, 4
        %v912 = vshll.u32 %v810, 16
        %v914 = vrot.slane %v912, 5
        %v915 = vsel %vm853, %v910, %v914
        %v916 = vshrl.u32 %v810, 16
        %v918 = vrot.slane %v916, 4
        %v919 = vor.u32 %v918, %v914
        %v920 = vrot.slane %v919, 4
        %v922 = vshll.u32 %v811, 16
        %v924 = vrot.slane %v922, 5
        %v925 = vsel %vm853, %v920, %v924
        %v927 = vshrl.u32 %v812, 16
        %v929 = vrot.slane %v927, 4
        %v930 = vshll.u32 %v812, 16
        %v932 = vrot.slane %v930, 5
        %v933 = vor.u32 %v929, %v932
        %v934 = vrot.slane %v933, 4
        %v936 = vshll.u32 %v813, 16
        %v938 = vrot.slane %v936, 5
        %v939 = vsel %vm853, %v934, %v938
        %v940 = vshrl.u32 %v813, 16
        %v942 = vrot.slane %v940, 4
        %v943 = vor.u32 %v942, %v938
        %v944 = vrot.slane %v943, 4
        %v946 = vshll.u32 %v814, 16
        %v948 = vrot.slane %v946, 5
        %v949 = vsel %vm853, %v944, %v948
        %v951 = vshrl.u32 %v815, 16
        %v953 = vrot.slane %v951, 4
        %v954 = vshll.u32 %v815, 16
        %v956 = vrot.slane %v954, 5
        %v957 = vor.u32 %v953, %v956
        %v958 = vrot.slane %v957, 4
        %v960 = vshll.u32 %v816, 16
        %v962 = vrot.slane %v960, 5
        %v963 = vsel %vm853, %v958, %v962
        %v964 = vshrl.u32 %v816, 16
        %v966 = vrot.slane %v964, 4
        %v967 = vor.u32 %v966, %v962
        %v968 = vrot.slane %v967, 4
        %v970 = vshll.u32 %v817, 16
        %v972 = vrot.slane %v970, 5
        %v973 = vsel %vm853, %v968, %v972
        %v975 = vshrl.u32 %v818, 16
        %v977 = vrot.slane %v975, 4
        %v978 = vshll.u32 %v818, 16
        %v980 = vrot.slane %v978, 5
        %v981 = vor.u32 %v977, %v980
        %v982 = vrot.slane %v981, 4
        %v984 = vshll.u32 %v819, 16
        %v986 = vrot.slane %v984, 5
        %v987 = vsel %vm853, %v982, %v986
        %v988 = vshrl.u32 %v819, 16
        %v990 = vrot.slane %v988, 4
        %v991 = vor.u32 %v990, %v986
        %v992 = vrot.slane %v991, 4
        %v994 = vshll.u32 %v820, 16
        %v996 = vrot.slane %v994, 5
        %v997 = vsel %vm853, %v992, %v996
        %v999 = vshrl.u32 %v821, 16
        %v1001 = vrot.slane %v999, 4
        %v1002 = vshll.u32 %v821, 16
        %v1004 = vrot.slane %v1002, 5
        %v1005 = vor.u32 %v1001, %v1004
        %v1006 = vrot.slane %v1005, 4
        %v1008 = vshll.u32 %v822, 16
        %v1010 = vrot.slane %v1008, 5
        %v1011 = vsel %vm853, %v1006, %v1010
        %v1012 = vshrl.u32 %v822, 16
        %v1014 = vrot.slane %v1012, 4
        %v1015 = vor.u32 %v1014, %v1010
        %v1016 = vrot.slane %v1015, 4
        %v1018 = vshll.u32 %v823, 16
        %v1020 = vrot.slane %v1018, 5
        %v1021 = vsel %vm853, %v1016, %v1020
        %v1023 = vshrl.u32 %v824, 16
        %v1025 = vrot.slane %v1023, 4
        %v1026 = vshll.u32 %v824, 16
        %v1028 = vrot.slane %v1026, 5
        %v1029 = vor.u32 %v1025, %v1028
        %v1030 = vrot.slane %v1029, 4
        %v1032 = vshll.u32 %v825, 16
        %v1034 = vrot.slane %v1032, 5
        %v1035 = vsel %vm853, %v1030, %v1034
        %v1036 = vshrl.u32 %v825, 16
        %v1038 = vrot.slane %v1036, 4
        %v1039 = vor.u32 %v1038, %v1034
        %v1040 = vrot.slane %v1039, 4
        %v1042 = vshll.u32 %v826, 16
        %v1044 = vrot.slane %v1042, 5
        %v1045 = vsel %vm853, %v1040, %v1044
        %v1047 = vshrl.u32 %v827, 16
        %v1049 = vrot.slane %v1047, 4
        %v1050 = vshll.u32 %v827, 16
        %v1052 = vrot.slane %v1050, 5
        %v1053 = vor.u32 %v1049, %v1052
        %v1054 = vrot.slane %v1053, 4
        %v1056 = vshll.u32 %v828, 16
        %v1058 = vrot.slane %v1056, 5
        %v1059 = vsel %vm853, %v1054, %v1058
        %v1060 = vshrl.u32 %v828, 16
        %v1062 = vrot.slane %v1060, 4
        %v1063 = vor.u32 %v1062, %v1058
        %v1064 = vrot.slane %v1063, 4
        %v1066 = vshll.u32 %v829, 16
        %v1068 = vrot.slane %v1066, 5
        %v1069 = vsel %vm853, %v1064, %v1068
        %v1071 = vshrl.u32 %v830, 16
        %v1073 = vrot.slane %v1071, 4
        %v1074 = vshll.u32 %v830, 16
        %v1076 = vrot.slane %v1074, 5
        %v1077 = vor.u32 %v1073, %v1076
        %v1078 = vrot.slane %v1077, 4
        %v1080 = vshll.u32 %v831, 16
        %v1082 = vrot.slane %v1080, 5
        %v1083 = vsel %vm853, %v1078, %v1082
        %v1084 = vshrl.u32 %v831, 16
        %v1086 = vrot.slane %v1084, 4
        %v1087 = vor.u32 %v1086, %v1082
        %v1088 = vrot.slane %v1087, 4
        %v1090 = vshll.u32 %v832, 16
        %v1092 = vrot.slane %v1090, 5
        %v1093 = vsel %vm853, %v1088, %v1092
        %v1095 = vshrl.u32 %v833, 16
        %v1097 = vrot.slane %v1095, 4
        %v1098 = vshll.u32 %v833, 16
        %v1100 = vrot.slane %v1098, 5
        %v1101 = vor.u32 %v1097, %v1100
        %v1102 = vrot.slane %v1101, 4
        %v1104 = vshll.u32 %v834, 16
        %v1106 = vrot.slane %v1104, 5
        %v1107 = vsel %vm853, %v1102, %v1106
        %v1108 = vshrl.u32 %v834, 16
        %v1110 = vrot.slane %v1108, 4
        %v1111 = vor.u32 %v1110, %v1106
        %v1112 = vrot.slane %v1111, 4
        %v1114 = vshll.u32 %v835, 16
        %v1116 = vrot.slane %v1114, 5
        %v1117 = vsel %vm853, %v1112, %v1116
        %v1119 = vshrl.u32 %v836, 16
        %v1121 = vrot.slane %v1119, 4
        %v1122 = vshll.u32 %v836, 16
        %v1124 = vrot.slane %v1122, 5
        %v1125 = vor.u32 %v1121, %v1124
        %v1126 = vrot.slane %v1125, 4
        %v1128 = vshll.u32 %v837, 16
        %v1130 = vrot.slane %v1128, 5
        %v1131 = vsel %vm853, %v1126, %v1130
        %v1132 = vshrl.u32 %v837, 16
        %v1134 = vrot.slane %v1132, 4
        %v1135 = vor.u32 %v1134, %v1130
        %v1136 = vrot.slane %v1135, 4
        %v1138 = vshll.u32 %v838, 16
        %v1140 = vrot.slane %v1138, 5
        %v1141 = vsel %vm853, %v1136, %v1140
        %v1143 = vshrl.u32 %v839, 16
        %v1145 = vrot.slane %v1143, 4
        %v1146 = vshll.u32 %v839, 16
        %v1148 = vrot.slane %v1146, 5
        %v1149 = vor.u32 %v1145, %v1148
        %v1150 = vrot.slane %v1149, 4
        %v1152 = vshll.u32 %v840, 16
        %v1154 = vrot.slane %v1152, 5
        %v1155 = vsel %vm853, %v1150, %v1154
        %v1156 = vshrl.u32 %v840, 16
        %v1158 = vrot.slane %v1156, 4
        %v1159 = vor.u32 %v1158, %v1154
        %v1160 = vrot.slane %v1159, 4
        %v1162 = vshll.u32 %v841, 16
        %v1164 = vrot.slane %v1162, 5
        %v1165 = vsel %vm853, %v1160, %v1164
        %v1167 = vshrl.u32 %v842, 16
        %v1169 = vrot.slane %v1167, 4
        %v1170 = vshll.u32 %v842, 16
        %v1172 = vrot.slane %v1170, 5
        %v1173 = vor.u32 %v1169, %v1172
        %v1174 = vrot.slane %v1173, 4
        %v1176 = vshll.u32 %v843, 16
        %v1178 = vrot.slane %v1176, 5
        %v1179 = vsel %vm853, %v1174, %v1178
        %v1180 = vshrl.u32 %v843, 16
        %v1182 = vrot.slane %v1180, 4
        %v1183 = vor.u32 %v1182, %v1178
        %v1184 = vrot.slane %v1183, 4
        %v1186 = vshll.u32 %v844, 16
        %v1188 = vrot.slane %v1186, 5
        %v1189 = vsel %vm853, %v1184, %v1188
        %v1191 = vshrl.u32 %v845, 16
        %v1193 = vrot.slane %v1191, 4
        %v1194 = vshll.u32 %v845, 16
        %v1196 = vrot.slane %v1194, 5
        %v1197 = vor.u32 %v1193, %v1196
        %v1198 = vrot.slane %v1197, 4
        %v1200 = vshll.u32 %v846, 16
        %v1202 = vrot.slane %v1200, 5
        %v1203 = vsel %vm853, %v1198, %v1202
        %v1204 = vshrl.u32 %v846, 16
        %v1206 = vrot.slane %v1204, 4
        %v1207 = vor.u32 %v1206, %v1202
        %v1208 = vrot.slane %v1207, 4
        %v1210 = vshll.u32 %v847, 16
        %v1212 = vrot.slane %v1210, 5
        %v1213 = vsel %vm853, %v1208, %v1212
        %v1215 = vshrl.u32 %v848, 16
        %v1217 = vrot.slane %v1215, 4
        %v1218 = vshll.u32 %v848, 16
        %v1220 = vrot.slane %v1218, 5
        %v1221 = vor.u32 %v1217, %v1220
        %v1222 = vrot.slane %v1221, 4
        %v1224 = vshll.u32 %v849, 16
        %v1226 = vrot.slane %v1224, 5
        %v1227 = vsel %vm853, %v1222, %v1226
        %v1228 = vshrl.u32 %v849, 16
        %v1230 = vrot.slane %v1228, 4
        %v1231 = vor.u32 %v1230, %v1226
        %v1232 = vrot.slane %v1231, 4
        %v1234 = vshll.u32 %v850, 16
        %v1236 = vrot.slane %v1234, 5
        %v1237 = vsel %vm853, %v1232, %v1236
        %1238 = vrot.lane.b32.xlu0 %v867, 15
        %v1239 = vpop.permute.xlu0 %1238
        %1240 = vrot.lane.b32.xlu0 %v877, 15
        %v1241 = vpop.permute.xlu0 %1240
        %1242 = vrot.lane.b32.xlu0 %v891, 15
        %v1243 = vpop.permute.xlu0 %1242
        %1244 = vrot.lane.b32.xlu0 %v901, 15
        %v1245 = vpop.permute.xlu0 %1244
        %1246 = vrot.lane.b32.xlu0 %v915, 15
        %v1247 = vpop.permute.xlu0 %1246
        %1248 = vrot.lane.b32.xlu0 %v925, 15
        %v1249 = vpop.permute.xlu0 %1248
        %1250 = vrot.lane.b32.xlu0 %v939, 15
        %v1251 = vpop.permute.xlu0 %1250
        %1252 = vrot.lane.b32.xlu0 %v949, 15
        %v1253 = vpop.permute.xlu0 %1252
        %1254 = vrot.lane.b32.xlu0 %v963, 15
        %v1255 = vpop.permute.xlu0 %1254
        %1256 = vrot.lane.b32.xlu0 %v973, 15
        %v1257 = vpop.permute.xlu0 %1256
        %1258 = vrot.lane.b32.xlu0 %v987, 15
        %v1259 = vpop.permute.xlu0 %1258
        %1260 = vrot.lane.b32.xlu0 %v997, 15
        %v1261 = vpop.permute.xlu0 %1260
        %1262 = vrot.lane.b32.xlu0 %v1011, 15
        %v1263 = vpop.permute.xlu0 %1262
        %1264 = vrot.lane.b32.xlu0 %v1021, 15
        %v1265 = vpop.permute.xlu0 %1264
        %1266 = vrot.lane.b32.xlu0 %v1035, 15
        %v1267 = vpop.permute.xlu0 %1266
        %1268 = vrot.lane.b32.xlu0 %v1045, 15
        %v1269 = vpop.permute.xlu0 %1268
        %1270 = vrot.lane.b32.xlu0 %v1059, 15
        %v1271 = vpop.permute.xlu0 %1270
        %1272 = vrot.lane.b32.xlu0 %v1069, 15
        %v1273 = vpop.permute.xlu0 %1272
        %1274 = vrot.lane.b32.xlu0 %v1083, 15
        %v1275 = vpop.permute.xlu0 %1274
        %1276 = vrot.lane.b32.xlu0 %v1093, 15
        %v1277 = vpop.permute.xlu0 %1276
        %1278 = vrot.lane.b32.xlu0 %v1107, 15
        %v1279 = vpop.permute.xlu0 %1278
        %1280 = vrot.lane.b32.xlu0 %v1117, 15
        %v1281 = vpop.permute.xlu0 %1280
        %1282 = vrot.lane.b32.xlu0 %v1131, 15
        %v1283 = vpop.permute.xlu0 %1282
        %1284 = vrot.lane.b32.xlu0 %v1141, 15
        %v1285 = vpop.permute.xlu0 %1284
        %1286 = vrot.lane.b32.xlu0 %v1155, 15
        %v1287 = vpop.permute.xlu0 %1286
        %1288 = vrot.lane.b32.xlu0 %v1165, 15
        %v1289 = vpop.permute.xlu0 %1288
        %1290 = vrot.lane.b32.xlu0 %v1179, 15
        %v1291 = vpop.permute.xlu0 %1290
        %1292 = vrot.lane.b32.xlu0 %v1189, 15
        %v1293 = vpop.permute.xlu0 %1292
        %1294 = vrot.lane.b32.xlu0 %v1203, 15
        %v1295 = vpop.permute.xlu0 %1294
        %1296 = vrot.lane.b32.xlu0 %v1213, 15
        %v1297 = vpop.permute.xlu0 %1296
        %1298 = vrot.lane.b32.xlu0 %v1227, 15
        %v1299 = vpop.permute.xlu0 %1298
        %1300 = vrot.lane.b32.xlu0 %v1237, 15
        %v1301 = vpop.permute.xlu0 %1300
        %vm1334 = vcmask 240760
        %1335 = vst.msk [vmem:[#allocation3] sm:$0xf] %vm1334, %v1239
        %1336 = vst.msk [vmem:[#allocation3 + $0x8] sm:$0xf] %vm1334, %v1241
        %1337 = vst.msk [vmem:[#allocation3 + $0x10] sm:$0xf] %vm1334, %v1243
        %1338 = vst.msk [vmem:[#allocation3 + $0x18] sm:$0xf] %vm1334, %v1245
        %1339 = vst.msk [vmem:[#allocation3 + $0x20] sm:$0xf] %vm1334, %v1247
        %1340 = vst.msk [vmem:[#allocation3 + $0x28] sm:$0xf] %vm1334, %v1249
        %1341 = vst.msk [vmem:[#allocation3 + $0x30] sm:$0xf] %vm1334, %v1251
        %1342 = vst.msk [vmem:[#allocation3 + $0x38] sm:$0xf] %vm1334, %v1253
        %1343 = vst.msk [vmem:[#allocation3 + $0x40] sm:$0xf] %vm1334, %v1255
        %1344 = vst.msk [vmem:[#allocation3 + $0x48] sm:$0xf] %vm1334, %v1257
        %1345 = vst.msk [vmem:[#allocation3 + $0x50] sm:$0xf] %vm1334, %v1259
        %1346 = vst.msk [vmem:[#allocation3 + $0x58] sm:$0xf] %vm1334, %v1261
        %1347 = vst.msk [vmem:[#allocation3 + $0x60] sm:$0xf] %vm1334, %v1263
        %1348 = vst.msk [vmem:[#allocation3 + $0x68] sm:$0xf] %vm1334, %v1265
        %1349 = vst.msk [vmem:[#allocation3 + $0x70] sm:$0xf] %vm1334, %v1267
        %1350 = vst.msk [vmem:[#allocation3 + $0x78] sm:$0xf] %vm1334, %v1269
        %1351 = vst.msk [vmem:[#allocation3 + $0x80] sm:$0xf] %vm1334, %v1271
        %1352 = vst.msk [vmem:[#allocation3 + $0x88] sm:$0xf] %vm1334, %v1273
        %1353 = vst.msk [vmem:[#allocation3 + $0x90] sm:$0xf] %vm1334, %v1275
        %1354 = vst.msk [vmem:[#allocation3 + $0x98] sm:$0xf] %vm1334, %v1277
        %1355 = vst.msk [vmem:[#allocation3 + $0xa0] sm:$0xf] %vm1334, %v1279
        %1356 = vst.msk [vmem:[#allocation3 + $0xa8] sm:$0xf] %vm1334, %v1281
        %1357 = vst.msk [vmem:[#allocation3 + $0xb0] sm:$0xf] %vm1334, %v1283
        %1358 = vst.msk [vmem:[#allocation3 + $0xb8] sm:$0xf] %vm1334, %v1285
        %1359 = vst.msk [vmem:[#allocation3 + $0xc0] sm:$0xf] %vm1334, %v1287
        %1360 = vst.msk [vmem:[#allocation3 + $0xc8] sm:$0xf] %vm1334, %v1289
        %1361 = vst.msk [vmem:[#allocation3 + $0xd0] sm:$0xf] %vm1334, %v1291
        %1362 = vst.msk [vmem:[#allocation3 + $0xd8] sm:$0xf] %vm1334, %v1293
        %1363 = vst.msk [vmem:[#allocation3 + $0xe0] sm:$0xf] %vm1334, %v1295
        %1364 = vst.msk [vmem:[#allocation3 + $0xe8] sm:$0xf] %vm1334, %v1297
        %1365 = vst.msk [vmem:[#allocation3 + $0xf0] sm:$0xf] %vm1334, %v1299
        %1366 = vst.msk [vmem:[#allocation3 + $0xf8] sm:$0xf] %vm1334, %v1301
        %v1367 = vld [vmem:[#allocation2] sm:$0xe]
        %v1368 = vld [vmem:[#allocation2 + $0x4] sm:$0xf]
        %v1369 = vld [vmem:[#allocation2 + $0x8] sm:$0x1]
        %v1370 = vld [vmem:[#allocation2 + $0xc] sm:$0xe]
        %v1371 = vld [vmem:[#allocation2 + $0x10] sm:$0xf]
        %v1372 = vld [vmem:[#allocation2 + $0x14] sm:$0x1]
        %v1373 = vld [vmem:[#allocation2 + $0x18] sm:$0xe]
        %v1374 = vld [vmem:[#allocation2 + $0x1c] sm:$0xf]
        %v1375 = vld [vmem:[#allocation2 + $0x20] sm:$0x1]
        %v1376 = vld [vmem:[#allocation2 + $0x24] sm:$0xe]
        %v1377 = vld [vmem:[#allocation2 + $0x28] sm:$0xf]
        %v1378 = vld [vmem:[#allocation2 + $0x2c] sm:$0x1]
        %v1379 = vld [vmem:[#allocation2 + $0x30] sm:$0xe]
        %v1380 = vld [vmem:[#allocation2 + $0x34] sm:$0xf]
        %v1381 = vld [vmem:[#allocation2 + $0x38] sm:$0x1]
        %v1382 = vld [vmem:[#allocation2 + $0x3c] sm:$0xe]
        %v1383 = vld [vmem:[#allocation2 + $0x40] sm:$0xf]
        %v1384 = vld [vmem:[#allocation2 + $0x44] sm:$0x1]
        %v1385 = vld [vmem:[#allocation2 + $0x48] sm:$0xe]
        %v1386 = vld [vmem:[#allocation2 + $0x4c] sm:$0xf]
        %v1387 = vld [vmem:[#allocation2 + $0x50] sm:$0x1]
        %v1388 = vld [vmem:[#allocation2 + $0x54] sm:$0xe]
        %v1389 = vld [vmem:[#allocation2 + $0x58] sm:$0xf]
        %v1390 = vld [vmem:[#allocation2 + $0x5c] sm:$0x1]
        %v1391 = vld [vmem:[#allocation2 + $0x60] sm:$0xe]
        %v1392 = vld [vmem:[#allocation2 + $0x64] sm:$0xf]
        %v1393 = vld [vmem:[#allocation2 + $0x68] sm:$0x1]
        %v1394 = vld [vmem:[#allocation2 + $0x6c] sm:$0xe]
        %v1395 = vld [vmem:[#allocation2 + $0x70] sm:$0xf]
        %v1396 = vld [vmem:[#allocation2 + $0x74] sm:$0x1]
        %v1397 = vld [vmem:[#allocation2 + $0x78] sm:$0xe]
        %v1398 = vld [vmem:[#allocation2 + $0x7c] sm:$0xf]
        %v1399 = vld [vmem:[#allocation2 + $0x80] sm:$0x1]
        %v1400 = vld [vmem:[#allocation2 + $0x84] sm:$0xe]
        %v1401 = vld [vmem:[#allocation2 + $0x88] sm:$0xf]
        %v1402 = vld [vmem:[#allocation2 + $0x8c] sm:$0x1]
        %v1403 = vld [vmem:[#allocation2 + $0x90] sm:$0xe]
        %v1404 = vld [vmem:[#allocation2 + $0x94] sm:$0xf]
        %v1405 = vld [vmem:[#allocation2 + $0x98] sm:$0x1]
        %v1406 = vld [vmem:[#allocation2 + $0x9c] sm:$0xe]
        %v1407 = vld [vmem:[#allocation2 + $0xa0] sm:$0xf]
        %v1408 = vld [vmem:[#allocation2 + $0xa4] sm:$0x1]
        %v1409 = vld [vmem:[#allocation2 + $0xa8] sm:$0xe]
        %v1410 = vld [vmem:[#allocation2 + $0xac] sm:$0xf]
        %v1411 = vld [vmem:[#allocation2 + $0xb0] sm:$0x1]
        %v1412 = vld [vmem:[#allocation2 + $0xb4] sm:$0xe]
        %v1413 = vld [vmem:[#allocation2 + $0xb8] sm:$0xf]
        %v1414 = vld [vmem:[#allocation2 + $0xbc] sm:$0x1]
        %vm1463 = vcmask 1042432
        %vm1464 = vcmask 1046532
        %vm1465 = vmor %vm1463, %vm1464
        %v1466 = vrot.slane %v1367, 5
        %v1467 = vrot.slane %v1466, 4
        %v1468 = vrot.slane %v1368, 5
        %v1469 = vsel %vm1465, %v1467, %v1468
        %v1470 = vrot.slane %v1468, 4
        %v1471 = vrot.slane %v1369, 5
        %v1472 = vsel %vm1465, %v1470, %v1471
        %v1473 = vrot.slane %v1370, 5
        %v1474 = vrot.slane %v1473, 4
        %v1475 = vrot.slane %v1371, 5
        %v1476 = vsel %vm1465, %v1474, %v1475
        %v1477 = vrot.slane %v1475, 4
        %v1478 = vrot.slane %v1372, 5
        %v1479 = vsel %vm1465, %v1477, %v1478
        %v1480 = vrot.slane %v1373, 5
        %v1481 = vrot.slane %v1480, 4
        %v1482 = vrot.slane %v1374, 5
        %v1483 = vsel %vm1465, %v1481, %v1482
        %v1484 = vrot.slane %v1482, 4
        %v1485 = vrot.slane %v1375, 5
        %v1486 = vsel %vm1465, %v1484, %v1485
        %v1487 = vrot.slane %v1376, 5
        %v1488 = vrot.slane %v1487, 4
        %v1489 = vrot.slane %v1377, 5
        %v1490 = vsel %vm1465, %v1488, %v1489
        %v1491 = vrot.slane %v1489, 4
        %v1492 = vrot.slane %v1378, 5
        %v1493 = vsel %vm1465, %v1491, %v1492
        %v1494 = vrot.slane %v1379, 5
        %v1495 = vrot.slane %v1494, 4
        %v1496 = vrot.slane %v1380, 5
        %v1497 = vsel %vm1465, %v1495, %v1496
        %v1498 = vrot.slane %v1496, 4
        %v1499 = vrot.slane %v1381, 5
        %v1500 = vsel %vm1465, %v1498, %v1499
        %v1501 = vrot.slane %v1382, 5
        %v1502 = vrot.slane %v1501, 4
        %v1503 = vrot.slane %v1383, 5
        %v1504 = vsel %vm1465, %v1502, %v1503
        %v1505 = vrot.slane %v1503, 4
        %v1506 = vrot.slane %v1384, 5
        %v1507 = vsel %vm1465, %v1505, %v1506
        %v1508 = vrot.slane %v1385, 5
        %v1509 = vrot.slane %v1508, 4
        %v1510 = vrot.slane %v1386, 5
        %v1511 = vsel %vm1465, %v1509, %v1510
        %v1512 = vrot.slane %v1510, 4
        %v1513 = vrot.slane %v1387, 5
        %v1514 = vsel %vm1465, %v1512, %v1513
        %v1515 = vrot.slane %v1388, 5
        %v1516 = vrot.slane %v1515, 4
        %v1517 = vrot.slane %v1389, 5
        %v1518 = vsel %vm1465, %v1516, %v1517
        %v1519 = vrot.slane %v1517, 4
        %v1520 = vrot.slane %v1390, 5
        %v1521 = vsel %vm1465, %v1519, %v1520
        %v1522 = vrot.slane %v1391, 5
        %v1523 = vrot.slane %v1522, 4
        %v1524 = vrot.slane %v1392, 5
        %v1525 = vsel %vm1465, %v1523, %v1524
        %v1526 = vrot.slane %v1524, 4
        %v1527 = vrot.slane %v1393, 5
        %v1528 = vsel %vm1465, %v1526, %v1527
        %v1529 = vrot.slane %v1394, 5
        %v1530 = vrot.slane %v1529, 4
        %v1531 = vrot.slane %v1395, 5
        %v1532 = vsel %vm1465, %v1530, %v1531
        %v1533 = vrot.slane %v1531, 4
        %v1534 = vrot.slane %v1396, 5
        %v1535 = vsel %vm1465, %v1533, %v1534
        %v1536 = vrot.slane %v1397, 5
        %v1537 = vrot.slane %v1536, 4
        %v1538 = vrot.slane %v1398, 5
        %v1539 = vsel %vm1465, %v1537, %v1538
        %v1540 = vrot.slane %v1538, 4
        %v1541 = vrot.slane %v1399, 5
        %v1542 = vsel %vm1465, %v1540, %v1541
        %v1543 = vrot.slane %v1400, 5
        %v1544 = vrot.slane %v1543, 4
        %v1545 = vrot.slane %v1401, 5
        %v1546 = vsel %vm1465, %v1544, %v1545
        %v1547 = vrot.slane %v1545, 4
        %v1548 = vrot.slane %v1402, 5
        %v1549 = vsel %vm1465, %v1547, %v1548
        %v1550 = vrot.slane %v1403, 5
        %v1551 = vrot.slane %v1550, 4
        %v1552 = vrot.slane %v1404, 5
        %v1553 = vsel %vm1465, %v1551, %v1552
        %v1554 = vrot.slane %v1552, 4
        %v1555 = vrot.slane %v1405, 5
        %v1556 = vsel %vm1465, %v1554, %v1555
        %v1557 = vrot.slane %v1406, 5
        %v1558 = vrot.slane %v1557, 4
        %v1559 = vrot.slane %v1407, 5
        %v1560 = vsel %vm1465, %v1558, %v1559
        %v1561 = vrot.slane %v1559, 4
        %v1562 = vrot.slane %v1408, 5
        %v1563 = vsel %vm1465, %v1561, %v1562
        %v1564 = vrot.slane %v1409, 5
        %v1565 = vrot.slane %v1564, 4
        %v1566 = vrot.slane %v1410, 5
        %v1567 = vsel %vm1465, %v1565, %v1566
        %v1568 = vrot.slane %v1566, 4
        %v1569 = vrot.slane %v1411, 5
        %v1570 = vsel %vm1465, %v1568, %v1569
        %v1571 = vrot.slane %v1412, 5
        %v1572 = vrot.slane %v1571, 4
        %v1573 = vrot.slane %v1413, 5
        %v1574 = vsel %vm1465, %v1572, %v1573
        %v1575 = vrot.slane %v1573, 4
        %v1576 = vrot.slane %v1414, 5
        %v1577 = vsel %vm1465, %v1575, %v1576
        %1578 = vrot.lane.b32.xlu0 %v1469, 30
        %v1579 = vpop.permute.xlu0 %1578
        %1580 = vrot.lane.b32.xlu0 %v1472, 30
        %v1581 = vpop.permute.xlu0 %1580
        %1582 = vrot.lane.b32.xlu0 %v1476, 30
        %v1583 = vpop.permute.xlu0 %1582
        %1584 = vrot.lane.b32.xlu0 %v1479, 30
        %v1585 = vpop.permute.xlu0 %1584
        %1586 = vrot.lane.b32.xlu0 %v1483, 30
        %v1587 = vpop.permute.xlu0 %1586
        %1588 = vrot.lane.b32.xlu0 %v1486, 30
        %v1589 = vpop.permute.xlu0 %1588
        %1590 = vrot.lane.b32.xlu0 %v1490, 30
        %v1591 = vpop.permute.xlu0 %1590
        %1592 = vrot.lane.b32.xlu0 %v1493, 30
        %v1593 = vpop.permute.xlu0 %1592
        %1594 = vrot.lane.b32.xlu0 %v1497, 30
        %v1595 = vpop.permute.xlu0 %1594
        %1596 = vrot.lane.b32.xlu0 %v1500, 30
        %v1597 = vpop.permute.xlu0 %1596
        %1598 = vrot.lane.b32.xlu0 %v1504, 30
        %v1599 = vpop.permute.xlu0 %1598
        %1600 = vrot.lane.b32.xlu0 %v1507, 30
        %v1601 = vpop.permute.xlu0 %1600
        %1602 = vrot.lane.b32.xlu0 %v1511, 30
        %v1603 = vpop.permute.xlu0 %1602
        %1604 = vrot.lane.b32.xlu0 %v1514, 30
        %v1605 = vpop.permute.xlu0 %1604
        %1606 = vrot.lane.b32.xlu0 %v1518, 30
        %v1607 = vpop.permute.xlu0 %1606
        %1608 = vrot.lane.b32.xlu0 %v1521, 30
        %v1609 = vpop.permute.xlu0 %1608
        %1610 = vrot.lane.b32.xlu0 %v1525, 30
        %v1611 = vpop.permute.xlu0 %1610
        %1612 = vrot.lane.b32.xlu0 %v1528, 30
        %v1613 = vpop.permute.xlu0 %1612
        %1614 = vrot.lane.b32.xlu0 %v1532, 30
        %v1615 = vpop.permute.xlu0 %1614
        %1616 = vrot.lane.b32.xlu0 %v1535, 30
        %v1617 = vpop.permute.xlu0 %1616
        %1618 = vrot.lane.b32.xlu0 %v1539, 30
        %v1619 = vpop.permute.xlu0 %1618
        %1620 = vrot.lane.b32.xlu0 %v1542, 30
        %v1621 = vpop.permute.xlu0 %1620
        %1622 = vrot.lane.b32.xlu0 %v1546, 30
        %v1623 = vpop.permute.xlu0 %1622
        %1624 = vrot.lane.b32.xlu0 %v1549, 30
        %v1625 = vpop.permute.xlu0 %1624
        %1626 = vrot.lane.b32.xlu0 %v1553, 30
        %v1627 = vpop.permute.xlu0 %1626
        %1628 = vrot.lane.b32.xlu0 %v1556, 30
        %v1629 = vpop.permute.xlu0 %1628
        %1630 = vrot.lane.b32.xlu0 %v1560, 30
        %v1631 = vpop.permute.xlu0 %1630
        %1632 = vrot.lane.b32.xlu0 %v1563, 30
        %v1633 = vpop.permute.xlu0 %1632
        %1634 = vrot.lane.b32.xlu0 %v1567, 30
        %v1635 = vpop.permute.xlu0 %1634
        %1636 = vrot.lane.b32.xlu0 %v1570, 30
        %v1637 = vpop.permute.xlu0 %1636
        %1638 = vrot.lane.b32.xlu0 %v1574, 30
        %v1639 = vpop.permute.xlu0 %1638
        %1640 = vrot.lane.b32.xlu0 %v1577, 30
        %v1641 = vpop.permute.xlu0 %1640
        %vm1674 = vcmask 363760
        %1675 = vst.msk [vmem:[#allocation3] sm:$0xf] %vm1674, %v1579
        %1676 = vst.msk [vmem:[#allocation3 + $0x8] sm:$0xf] %vm1674, %v1581
        %1677 = vst.msk [vmem:[#allocation3 + $0x10] sm:$0xf] %vm1674, %v1583
        %1678 = vst.msk [vmem:[#allocation3 + $0x18] sm:$0xf] %vm1674, %v1585
        %1679 = vst.msk [vmem:[#allocation3 + $0x20] sm:$0xf] %vm1674, %v1587
        %1680 = vst.msk [vmem:[#allocation3 + $0x28] sm:$0xf] %vm1674, %v1589
        %1681 = vst.msk [vmem:[#allocation3 + $0x30] sm:$0xf] %vm1674, %v1591
        %1682 = vst.msk [vmem:[#allocation3 + $0x38] sm:$0xf] %vm1674, %v1593
        %1683 = vst.msk [vmem:[#allocation3 + $0x40] sm:$0xf] %vm1674, %v1595
        %1684 = vst.msk [vmem:[#allocation3 + $0x48] sm:$0xf] %vm1674, %v1597
        %1685 = vst.msk [vmem:[#allocation3 + $0x50] sm:$0xf] %vm1674, %v1599
        %1686 = vst.msk [vmem:[#allocation3 + $0x58] sm:$0xf] %vm1674, %v1601
        %1687 = vst.msk [vmem:[#allocation3 + $0x60] sm:$0xf] %vm1674, %v1603
        %1688 = vst.msk [vmem:[#allocation3 + $0x68] sm:$0xf] %vm1674, %v1605
        %1689 = vst.msk [vmem:[#allocation3 + $0x70] sm:$0xf] %vm1674, %v1607
        %1690 = vst.msk [vmem:[#allocation3 + $0x78] sm:$0xf] %vm1674, %v1609
        %1691 = vst.msk [vmem:[#allocation3 + $0x80] sm:$0xf] %vm1674, %v1611
        %1692 = vst.msk [vmem:[#allocation3 + $0x88] sm:$0xf] %vm1674, %v1613
        %1693 = vst.msk [vmem:[#allocation3 + $0x90] sm:$0xf] %vm1674, %v1615
        %1694 = vst.msk [vmem:[#allocation3 + $0x98] sm:$0xf] %vm1674, %v1617
        %1695 = vst.msk [vmem:[#allocation3 + $0xa0] sm:$0xf] %vm1674, %v1619
        %1696 = vst.msk [vmem:[#allocation3 + $0xa8] sm:$0xf] %vm1674, %v1621
        %1697 = vst.msk [vmem:[#allocation3 + $0xb0] sm:$0xf] %vm1674, %v1623
        %1698 = vst.msk [vmem:[#allocation3 + $0xb8] sm:$0xf] %vm1674, %v1625
        %1699 = vst.msk [vmem:[#allocation3 + $0xc0] sm:$0xf] %vm1674, %v1627
        %1700 = vst.msk [vmem:[#allocation3 + $0xc8] sm:$0xf] %vm1674, %v1629
        %1701 = vst.msk [vmem:[#allocation3 + $0xd0] sm:$0xf] %vm1674, %v1631
        %1702 = vst.msk [vmem:[#allocation3 + $0xd8] sm:$0xf] %vm1674, %v1633
        %1703 = vst.msk [vmem:[#allocation3 + $0xe0] sm:$0xf] %vm1674, %v1635
        %1704 = vst.msk [vmem:[#allocation3 + $0xe8] sm:$0xf] %vm1674, %v1637
        %1705 = vst.msk [vmem:[#allocation3 + $0xf0] sm:$0xf] %vm1674, %v1639
        %1706 = vst.msk [vmem:[#allocation3 + $0xf8] sm:$0xf] %vm1674, %v1641
        %v1707 = vld [vmem:[%s621] sm:$0xf]
        %v1708 = vld [vmem:[%s621 + $0x4] sm:$0xf]
        %v1709 = vld [vmem:[%s621 + $0xc] sm:$0xf]
        %v1710 = vld [vmem:[%s621 + $0x10] sm:$0xf]
        %v1711 = vld [vmem:[%s621 + $0x18] sm:$0xf]
        %v1712 = vld [vmem:[%s621 + $0x1c] sm:$0xf]
        %v1713 = vld [vmem:[%s621 + $0x24] sm:$0xf]
        %v1714 = vld [vmem:[%s621 + $0x28] sm:$0xf]
        %v1715 = vld [vmem:[%s621 + $0x30] sm:$0xf]
        %v1716 = vld [vmem:[%s621 + $0x34] sm:$0xf]
        %v1717 = vld [vmem:[%s621 + $0x3c] sm:$0xf]
        %v1718 = vld [vmem:[%s621 + $0x40] sm:$0xf]
        %v1719 = vld [vmem:[%s621 + $0x48] sm:$0xf]
        %v1720 = vld [vmem:[%s621 + $0x4c] sm:$0xf]
        %v1721 = vld [vmem:[%s621 + $0x54] sm:$0xf]
        %v1722 = vld [vmem:[%s621 + $0x58] sm:$0xf]
        %v1723 = vld [vmem:[%s621 + $0x60] sm:$0xf]
        %v1724 = vld [vmem:[%s621 + $0x64] sm:$0xf]
        %v1725 = vld [vmem:[%s621 + $0x6c] sm:$0xf]
        %v1726 = vld [vmem:[%s621 + $0x70] sm:$0xf]
        %v1727 = vld [vmem:[%s621 + $0x78] sm:$0xf]
        %v1728 = vld [vmem:[%s621 + $0x7c] sm:$0xf]
        %v1729 = vld [vmem:[%s621 + $0x84] sm:$0xf]
        %v1730 = vld [vmem:[%s621 + $0x88] sm:$0xf]
        %v1731 = vld [vmem:[%s621 + $0x90] sm:$0xf]
        %v1732 = vld [vmem:[%s621 + $0x94] sm:$0xf]
        %v1733 = vld [vmem:[%s621 + $0x9c] sm:$0xf]
        %v1734 = vld [vmem:[%s621 + $0xa0] sm:$0xf]
        %v1735 = vld [vmem:[%s621 + $0xa8] sm:$0xf]
        %v1736 = vld [vmem:[%s621 + $0xac] sm:$0xf]
        %v1737 = vld [vmem:[%s621 + $0xb4] sm:$0xf]
        %v1738 = vld [vmem:[%s621 + $0xb8] sm:$0xf]
        %1771 = vrot.lane.b32.xlu0 %v1707, 45
        %v1772 = vpop.permute.xlu0 %1771
        %1773 = vrot.lane.b32.xlu0 %v1708, 45
        %v1774 = vpop.permute.xlu0 %1773
        %1775 = vrot.lane.b32.xlu0 %v1709, 45
        %v1776 = vpop.permute.xlu0 %1775
        %1777 = vrot.lane.b32.xlu0 %v1710, 45
        %v1778 = vpop.permute.xlu0 %1777
        %1779 = vrot.lane.b32.xlu0 %v1711, 45
        %v1780 = vpop.permute.xlu0 %1779
        %1781 = vrot.lane.b32.xlu0 %v1712, 45
        %v1782 = vpop.permute.xlu0 %1781
        %1783 = vrot.lane.b32.xlu0 %v1713, 45
        %v1784 = vpop.permute.xlu0 %1783
        %1785 = vrot.lane.b32.xlu0 %v1714, 45
        %v1786 = vpop.permute.xlu0 %1785
        %1787 = vrot.lane.b32.xlu0 %v1715, 45
        %v1788 = vpop.permute.xlu0 %1787
        %1789 = vrot.lane.b32.xlu0 %v1716, 45
        %v1790 = vpop.permute.xlu0 %1789
        %1791 = vrot.lane.b32.xlu0 %v1717, 45
        %v1792 = vpop.permute.xlu0 %1791
        %1793 = vrot.lane.b32.xlu0 %v1718, 45
        %v1794 = vpop.permute.xlu0 %1793
        %1795 = vrot.lane.b32.xlu0 %v1719, 45
        %v1796 = vpop.permute.xlu0 %1795
        %1797 = vrot.lane.b32.xlu0 %v1720, 45
        %v1798 = vpop.permute.xlu0 %1797
        %1799 = vrot.lane.b32.xlu0 %v1721, 45
        %v1800 = vpop.permute.xlu0 %1799
        %1801 = vrot.lane.b32.xlu0 %v1722, 45
        %v1802 = vpop.permute.xlu0 %1801
        %1803 = vrot.lane.b32.xlu0 %v1723, 45
        %v1804 = vpop.permute.xlu0 %1803
        %1805 = vrot.lane.b32.xlu0 %v1724, 45
        %v1806 = vpop.permute.xlu0 %1805
        %1807 = vrot.lane.b32.xlu0 %v1725, 45
        %v1808 = vpop.permute.xlu0 %1807
        %1809 = vrot.lane.b32.xlu0 %v1726, 45
        %v1810 = vpop.permute.xlu0 %1809
        %1811 = vrot.lane.b32.xlu0 %v1727, 45
        %v1812 = vpop.permute.xlu0 %1811
        %1813 = vrot.lane.b32.xlu0 %v1728, 45
        %v1814 = vpop.permute.xlu0 %1813
        %1815 = vrot.lane.b32.xlu0 %v1729, 45
        %v1816 = vpop.permute.xlu0 %1815
        %1817 = vrot.lane.b32.xlu0 %v1730, 45
        %v1818 = vpop.permute.xlu0 %1817
        %1819 = vrot.lane.b32.xlu0 %v1731, 45
        %v1820 = vpop.permute.xlu0 %1819
        %1821 = vrot.lane.b32.xlu0 %v1732, 45
        %v1822 = vpop.permute.xlu0 %1821
        %1823 = vrot.lane.b32.xlu0 %v1733, 45
        %v1824 = vpop.permute.xlu0 %1823
        %1825 = vrot.lane.b32.xlu0 %v1734, 45
        %v1826 = vpop.permute.xlu0 %1825
        %1827 = vrot.lane.b32.xlu0 %v1735, 45
        %v1828 = vpop.permute.xlu0 %1827
        %1829 = vrot.lane.b32.xlu0 %v1736, 45
        %v1830 = vpop.permute.xlu0 %1829
        %1831 = vrot.lane.b32.xlu0 %v1737, 45
        %v1832 = vpop.permute.xlu0 %1831
        %1833 = vrot.lane.b32.xlu0 %v1738, 45
        %v1834 = vpop.permute.xlu0 %1833
        %vm1867 = vcmask 486760
        %1868 = vst.msk [vmem:[#allocation3] sm:$0xf] %vm1867, %v1772
        %1869 = vst.msk [vmem:[#allocation3 + $0x8] sm:$0xf] %vm1867, %v1774
        %1870 = vst.msk [vmem:[#allocation3 + $0x10] sm:$0xf] %vm1867, %v1776
        %1871 = vst.msk [vmem:[#allocation3 + $0x18] sm:$0xf] %vm1867, %v1778
        %1872 = vst.msk [vmem:[#allocation3 + $0x20] sm:$0xf] %vm1867, %v1780
        %1873 = vst.msk [vmem:[#allocation3 + $0x28] sm:$0xf] %vm1867, %v1782
        %1874 = vst.msk [vmem:[#allocation3 + $0x30] sm:$0xf] %vm1867, %v1784
        %1875 = vst.msk [vmem:[#allocation3 + $0x38] sm:$0xf] %vm1867, %v1786
        %1876 = vst.msk [vmem:[#allocation3 + $0x40] sm:$0xf] %vm1867, %v1788
        %1877 = vst.msk [vmem:[#allocation3 + $0x48] sm:$0xf] %vm1867, %v1790
        %1878 = vst.msk [vmem:[#allocation3 + $0x50] sm:$0xf] %vm1867, %v1792
        %1879 = vst.msk [vmem:[#allocation3 + $0x58] sm:$0xf] %vm1867, %v1794
        %1880 = vst.msk [vmem:[#allocation3 + $0x60] sm:$0xf] %vm1867, %v1796
        %1881 = vst.msk [vmem:[#allocation3 + $0x68] sm:$0xf] %vm1867, %v1798
        %1882 = vst.msk [vmem:[#allocation3 + $0x70] sm:$0xf] %vm1867, %v1800
        %1883 = vst.msk [vmem:[#allocation3 + $0x78] sm:$0xf] %vm1867, %v1802
        %1884 = vst.msk [vmem:[#allocation3 + $0x80] sm:$0xf] %vm1867, %v1804
        %1885 = vst.msk [vmem:[#allocation3 + $0x88] sm:$0xf] %vm1867, %v1806
        %1886 = vst.msk [vmem:[#allocation3 + $0x90] sm:$0xf] %vm1867, %v1808
        %1887 = vst.msk [vmem:[#allocation3 + $0x98] sm:$0xf] %vm1867, %v1810
        %1888 = vst.msk [vmem:[#allocation3 + $0xa0] sm:$0xf] %vm1867, %v1812
        %1889 = vst.msk [vmem:[#allocation3 + $0xa8] sm:$0xf] %vm1867, %v1814
        %1890 = vst.msk [vmem:[#allocation3 + $0xb0] sm:$0xf] %vm1867, %v1816
        %1891 = vst.msk [vmem:[#allocation3 + $0xb8] sm:$0xf] %vm1867, %v1818
        %1892 = vst.msk [vmem:[#allocation3 + $0xc0] sm:$0xf] %vm1867, %v1820
        %1893 = vst.msk [vmem:[#allocation3 + $0xc8] sm:$0xf] %vm1867, %v1822
        %1894 = vst.msk [vmem:[#allocation3 + $0xd0] sm:$0xf] %vm1867, %v1824
        %1895 = vst.msk [vmem:[#allocation3 + $0xd8] sm:$0xf] %vm1867, %v1826
        %1896 = vst.msk [vmem:[#allocation3 + $0xe0] sm:$0xf] %vm1867, %v1828
        %1897 = vst.msk [vmem:[#allocation3 + $0xe8] sm:$0xf] %vm1867, %v1830
        %1898 = vst.msk [vmem:[#allocation3 + $0xf0] sm:$0xf] %vm1867, %v1832
        %1899 = vst.msk [vmem:[#allocation3 + $0xf8] sm:$0xf] %vm1867, %v1834
        %v1900 = vld [vmem:[%s621] sm:$0xf]
        %v1901 = vld [vmem:[%s621 + $0x4] sm:$0xf]
        %v1902 = vld [vmem:[%s621 + $0x8] sm:$0x1]
        %v1903 = vld [vmem:[%s621 + $0xc] sm:$0xf]
        %v1904 = vld [vmem:[%s621 + $0x10] sm:$0xf]
        %v1905 = vld [vmem:[%s621 + $0x14] sm:$0x1]
        %v1906 = vld [vmem:[%s621 + $0x18] sm:$0xf]
        %v1907 = vld [vmem:[%s621 + $0x1c] sm:$0xf]
        %v1908 = vld [vmem:[%s621 + $0x20] sm:$0x1]
        %v1909 = vld [vmem:[%s621 + $0x24] sm:$0xf]
        %v1910 = vld [vmem:[%s621 + $0x28] sm:$0xf]
        %v1911 = vld [vmem:[%s621 + $0x2c] sm:$0x1]
        %v1912 = vld [vmem:[%s621 + $0x30] sm:$0xf]
        %v1913 = vld [vmem:[%s621 + $0x34] sm:$0xf]
        %v1914 = vld [vmem:[%s621 + $0x38] sm:$0x1]
        %v1915 = vld [vmem:[%s621 + $0x3c] sm:$0xf]
        %v1916 = vld [vmem:[%s621 + $0x40] sm:$0xf]
        %v1917 = vld [vmem:[%s621 + $0x44] sm:$0x1]
        %v1918 = vld [vmem:[%s621 + $0x48] sm:$0xf]
        %v1919 = vld [vmem:[%s621 + $0x4c] sm:$0xf]
        %v1920 = vld [vmem:[%s621 + $0x50] sm:$0x1]
        %v1921 = vld [vmem:[%s621 + $0x54] sm:$0xf]
        %v1922 = vld [vmem:[%s621 + $0x58] sm:$0xf]
        %v1923 = vld [vmem:[%s621 + $0x5c] sm:$0x1]
        %v1924 = vld [vmem:[%s621 + $0x60] sm:$0xf]
        %v1925 = vld [vmem:[%s621 + $0x64] sm:$0xf]
        %v1926 = vld [vmem:[%s621 + $0x68] sm:$0x1]
        %v1927 = vld [vmem:[%s621 + $0x6c] sm:$0xf]
        %v1928 = vld [vmem:[%s621 + $0x70] sm:$0xf]
        %v1929 = vld [vmem:[%s621 + $0x74] sm:$0x1]
        %v1930 = vld [vmem:[%s621 + $0x78] sm:$0xf]
        %v1931 = vld [vmem:[%s621 + $0x7c] sm:$0xf]
        %v1932 = vld [vmem:[%s621 + $0x80] sm:$0x1]
        %v1933 = vld [vmem:[%s621 + $0x84] sm:$0xf]
        %v1934 = vld [vmem:[%s621 + $0x88] sm:$0xf]
        %v1935 = vld [vmem:[%s621 + $0x8c] sm:$0x1]
        %v1936 = vld [vmem:[%s621 + $0x90] sm:$0xf]
        %v1937 = vld [vmem:[%s621 + $0x94] sm:$0xf]
        %v1938 = vld [vmem:[%s621 + $0x98] sm:$0x1]
        %v1939 = vld [vmem:[%s621 + $0x9c] sm:$0xf]
        %v1940 = vld [vmem:[%s621 + $0xa0] sm:$0xf]
        %v1941 = vld [vmem:[%s621 + $0xa4] sm:$0x1]
        %v1942 = vld [vmem:[%s621 + $0xa8] sm:$0xf]
        %v1943 = vld [vmem:[%s621 + $0xac] sm:$0xf]
        %v1944 = vld [vmem:[%s621 + $0xb0] sm:$0x1]
        %v1945 = vld [vmem:[%s621 + $0xb4] sm:$0xf]
        %v1946 = vld [vmem:[%s621 + $0xb8] sm:$0xf]
        %v1947 = vld [vmem:[%s621 + $0xbc] sm:$0x1]
        %v1949 = vshrl.u32 %v1900, 16
        %v1951 = vrot.slane %v1949, 4
        %v1952 = vshll.u32 %v1900, 16
        %v1954 = vrot.slane %v1952, 5
        %v1955 = vor.u32 %v1951, %v1954
        %v1956 = vrot.slane %v1955, 4
        %v1958 = vshll.u32 %v1901, 16
        %v1960 = vrot.slane %v1958, 5
        %v1961 = vsel %vm853, %v1956, %v1960
        %v1962 = vshrl.u32 %v1901, 16
        %v1964 = vrot.slane %v1962, 4
        %v1965 = vor.u32 %v1964, %v1960
        %v1966 = vrot.slane %v1965, 4
        %v1968 = vshll.u32 %v1902, 16
        %v1970 = vrot.slane %v1968, 5
        %v1971 = vsel %vm853, %v1966, %v1970
        %v1973 = vshrl.u32 %v1903, 16
        %v1975 = vrot.slane %v1973, 4
        %v1976 = vshll.u32 %v1903, 16
        %v1978 = vrot.slane %v1976, 5
        %v1979 = vor.u32 %v1975, %v1978
        %v1980 = vrot.slane %v1979, 4
        %v1982 = vshll.u32 %v1904, 16
        %v1984 = vrot.slane %v1982, 5
        %v1985 = vsel %vm853, %v1980, %v1984
        %v1986 = vshrl.u32 %v1904, 16
        %v1988 = vrot.slane %v1986, 4
        %v1989 = vor.u32 %v1988, %v1984
        %v1990 = vrot.slane %v1989, 4
        %v1992 = vshll.u32 %v1905, 16
        %v1994 = vrot.slane %v1992, 5
        %v1995 = vsel %vm853, %v1990, %v1994
        %v1997 = vshrl.u32 %v1906, 16
        %v1999 = vrot.slane %v1997, 4
        %v2000 = vshll.u32 %v1906, 16
        %v2002 = vrot.slane %v2000, 5
        %v2003 = vor.u32 %v1999, %v2002
        %v2004 = vrot.slane %v2003, 4
        %v2006 = vshll.u32 %v1907, 16
        %v2008 = vrot.slane %v2006, 5
        %v2009 = vsel %vm853, %v2004, %v2008
        %v2010 = vshrl.u32 %v1907, 16
        %v2012 = vrot.slane %v2010, 4
        %v2013 = vor.u32 %v2012, %v2008
        %v2014 = vrot.slane %v2013, 4
        %v2016 = vshll.u32 %v1908, 16
        %v2018 = vrot.slane %v2016, 5
        %v2019 = vsel %vm853, %v2014, %v2018
        %v2021 = vshrl.u32 %v1909, 16
        %v2023 = vrot.slane %v2021, 4
        %v2024 = vshll.u32 %v1909, 16
        %v2026 = vrot.slane %v2024, 5
        %v2027 = vor.u32 %v2023, %v2026
        %v2028 = vrot.slane %v2027, 4
        %v2030 = vshll.u32 %v1910, 16
        %v2032 = vrot.slane %v2030, 5
        %v2033 = vsel %vm853, %v2028, %v2032
        %v2034 = vshrl.u32 %v1910, 16
        %v2036 = vrot.slane %v2034, 4
        %v2037 = vor.u32 %v2036, %v2032
        %v2038 = vrot.slane %v2037, 4
        %v2040 = vshll.u32 %v1911, 16
        %v2042 = vrot.slane %v2040, 5
        %v2043 = vsel %vm853, %v2038, %v2042
        %v2045 = vshrl.u32 %v1912, 16
        %v2047 = vrot.slane %v2045, 4
        %v2048 = vshll.u32 %v1912, 16
        %v2050 = vrot.slane %v2048, 5
        %v2051 = vor.u32 %v2047, %v2050
        %v2052 = vrot.slane %v2051, 4
        %v2054 = vshll.u32 %v1913, 16
        %v2056 = vrot.slane %v2054, 5
        %v2057 = vsel %vm853, %v2052, %v2056
        %v2058 = vshrl.u32 %v1913, 16
        %v2060 = vrot.slane %v2058, 4
        %v2061 = vor.u32 %v2060, %v2056
        %v2062 = vrot.slane %v2061, 4
        %v2064 = vshll.u32 %v1914, 16
        %v2066 = vrot.slane %v2064, 5
        %v2067 = vsel %vm853, %v2062, %v2066
        %v2069 = vshrl.u32 %v1915, 16
        %v2071 = vrot.slane %v2069, 4
        %v2072 = vshll.u32 %v1915, 16
        %v2074 = vrot.slane %v2072, 5
        %v2075 = vor.u32 %v2071, %v2074
        %v2076 = vrot.slane %v2075, 4
        %v2078 = vshll.u32 %v1916, 16
        %v2080 = vrot.slane %v2078, 5
        %v2081 = vsel %vm853, %v2076, %v2080
        %v2082 = vshrl.u32 %v1916, 16
        %v2084 = vrot.slane %v2082, 4
        %v2085 = vor.u32 %v2084, %v2080
        %v2086 = vrot.slane %v2085, 4
        %v2088 = vshll.u32 %v1917, 16
        %v2090 = vrot.slane %v2088, 5
        %v2091 = vsel %vm853, %v2086, %v2090
        %v2093 = vshrl.u32 %v1918, 16
        %v2095 = vrot.slane %v2093, 4
        %v2096 = vshll.u32 %v1918, 16
        %v2098 = vrot.slane %v2096, 5
        %v2099 = vor.u32 %v2095, %v2098
        %v2100 = vrot.slane %v2099, 4
        %v2102 = vshll.u32 %v1919, 16
        %v2104 = vrot.slane %v2102, 5
        %v2105 = vsel %vm853, %v2100, %v2104
        %v2106 = vshrl.u32 %v1919, 16
        %v2108 = vrot.slane %v2106, 4
        %v2109 = vor.u32 %v2108, %v2104
        %v2110 = vrot.slane %v2109, 4
        %v2112 = vshll.u32 %v1920, 16
        %v2114 = vrot.slane %v2112, 5
        %v2115 = vsel %vm853, %v2110, %v2114
        %v2117 = vshrl.u32 %v1921, 16
        %v2119 = vrot.slane %v2117, 4
        %v2120 = vshll.u32 %v1921, 16
        %v2122 = vrot.slane %v2120, 5
        %v2123 = vor.u32 %v2119, %v2122
        %v2124 = vrot.slane %v2123, 4
        %v2126 = vshll.u32 %v1922, 16
        %v2128 = vrot.slane %v2126, 5
        %v2129 = vsel %vm853, %v2124, %v2128
        %v2130 = vshrl.u32 %v1922, 16
        %v2132 = vrot.slane %v2130, 4
        %v2133 = vor.u32 %v2132, %v2128
        %v2134 = vrot.slane %v2133, 4
        %v2136 = vshll.u32 %v1923, 16
        %v2138 = vrot.slane %v2136, 5
        %v2139 = vsel %vm853, %v2134, %v2138
        %v2141 = vshrl.u32 %v1924, 16
        %v2143 = vrot.slane %v2141, 4
        %v2144 = vshll.u32 %v1924, 16
        %v2146 = vrot.slane %v2144, 5
        %v2147 = vor.u32 %v2143, %v2146
        %v2148 = vrot.slane %v2147, 4
        %v2150 = vshll.u32 %v1925, 16
        %v2152 = vrot.slane %v2150, 5
        %v2153 = vsel %vm853, %v2148, %v2152
        %v2154 = vshrl.u32 %v1925, 16
        %v2156 = vrot.slane %v2154, 4
        %v2157 = vor.u32 %v2156, %v2152
        %v2158 = vrot.slane %v2157, 4
        %v2160 = vshll.u32 %v1926, 16
        %v2162 = vrot.slane %v2160, 5
        %v2163 = vsel %vm853, %v2158, %v2162
        %v2165 = vshrl.u32 %v1927, 16
        %v2167 = vrot.slane %v2165, 4
        %v2168 = vshll.u32 %v1927, 16
        %v2170 = vrot.slane %v2168, 5
        %v2171 = vor.u32 %v2167, %v2170
        %v2172 = vrot.slane %v2171, 4
        %v2174 = vshll.u32 %v1928, 16
        %v2176 = vrot.slane %v2174, 5
        %v2177 = vsel %vm853, %v2172, %v2176
        %v2178 = vshrl.u32 %v1928, 16
        %v2180 = vrot.slane %v2178, 4
        %v2181 = vor.u32 %v2180, %v2176
        %v2182 = vrot.slane %v2181, 4
        %v2184 = vshll.u32 %v1929, 16
        %v2186 = vrot.slane %v2184, 5
        %v2187 = vsel %vm853, %v2182, %v2186
        %v2189 = vshrl.u32 %v1930, 16
        %v2191 = vrot.slane %v2189, 4
        %v2192 = vshll.u32 %v1930, 16
        %v2194 = vrot.slane %v2192, 5
        %v2195 = vor.u32 %v2191, %v2194
        %v2196 = vrot.slane %v2195, 4
        %v2198 = vshll.u32 %v1931, 16
        %v2200 = vrot.slane %v2198, 5
        %v2201 = vsel %vm853, %v2196, %v2200
        %v2202 = vshrl.u32 %v1931, 16
        %v2204 = vrot.slane %v2202, 4
        %v2205 = vor.u32 %v2204, %v2200
        %v2206 = vrot.slane %v2205, 4
        %v2208 = vshll.u32 %v1932, 16
        %v2210 = vrot.slane %v2208, 5
        %v2211 = vsel %vm853, %v2206, %v2210
        %v2213 = vshrl.u32 %v1933, 16
        %v2215 = vrot.slane %v2213, 4
        %v2216 = vshll.u32 %v1933, 16
        %v2218 = vrot.slane %v2216, 5
        %v2219 = vor.u32 %v2215, %v2218
        %v2220 = vrot.slane %v2219, 4
        %v2222 = vshll.u32 %v1934, 16
        %v2224 = vrot.slane %v2222, 5
        %v2225 = vsel %vm853, %v2220, %v2224
        %v2226 = vshrl.u32 %v1934, 16
        %v2228 = vrot.slane %v2226, 4
        %v2229 = vor.u32 %v2228, %v2224
        %v2230 = vrot.slane %v2229, 4
        %v2232 = vshll.u32 %v1935, 16
        %v2234 = vrot.slane %v2232, 5
        %v2235 = vsel %vm853, %v2230, %v2234
        %v2237 = vshrl.u32 %v1936, 16
        %v2239 = vrot.slane %v2237, 4
        %v2240 = vshll.u32 %v1936, 16
        %v2242 = vrot.slane %v2240, 5
        %v2243 = vor.u32 %v2239, %v2242
        %v2244 = vrot.slane %v2243, 4
        %v2246 = vshll.u32 %v1937, 16
        %v2248 = vrot.slane %v2246, 5
        %v2249 = vsel %vm853, %v2244, %v2248
        %v2250 = vshrl.u32 %v1937, 16
        %v2252 = vrot.slane %v2250, 4
        %v2253 = vor.u32 %v2252, %v2248
        %v2254 = vrot.slane %v2253, 4
        %v2256 = vshll.u32 %v1938, 16
        %v2258 = vrot.slane %v2256, 5
        %v2259 = vsel %vm853, %v2254, %v2258
        %v2261 = vshrl.u32 %v1939, 16
        %v2263 = vrot.slane %v2261, 4
        %v2264 = vshll.u32 %v1939, 16
        %v2266 = vrot.slane %v2264, 5
        %v2267 = vor.u32 %v2263, %v2266
        %v2268 = vrot.slane %v2267, 4
        %v2270 = vshll.u32 %v1940, 16
        %v2272 = vrot.slane %v2270, 5
        %v2273 = vsel %vm853, %v2268, %v2272
        %v2274 = vshrl.u32 %v1940, 16
        %v2276 = vrot.slane %v2274, 4
        %v2277 = vor.u32 %v2276, %v2272
        %v2278 = vrot.slane %v2277, 4
        %v2280 = vshll.u32 %v1941, 16
        %v2282 = vrot.slane %v2280, 5
        %v2283 = vsel %vm853, %v2278, %v2282
        %v2285 = vshrl.u32 %v1942, 16
        %v2287 = vrot.slane %v2285, 4
        %v2288 = vshll.u32 %v1942, 16
        %v2290 = vrot.slane %v2288, 5
        %v2291 = vor.u32 %v2287, %v2290
        %v2292 = vrot.slane %v2291, 4
        %v2294 = vshll.u32 %v1943, 16
        %v2296 = vrot.slane %v2294, 5
        %v2297 = vsel %vm853, %v2292, %v2296
        %v2298 = vshrl.u32 %v1943, 16
        %v2300 = vrot.slane %v2298, 4
        %v2301 = vor.u32 %v2300, %v2296
        %v2302 = vrot.slane %v2301, 4
        %v2304 = vshll.u32 %v1944, 16
        %v2306 = vrot.slane %v2304, 5
        %v2307 = vsel %vm853, %v2302, %v2306
        %v2309 = vshrl.u32 %v1945, 16
        %v2311 = vrot.slane %v2309, 4
        %v2312 = vshll.u32 %v1945, 16
        %v2314 = vrot.slane %v2312, 5
        %v2315 = vor.u32 %v2311, %v2314
        %v2316 = vrot.slane %v2315, 4
        %v2318 = vshll.u32 %v1946, 16
        %v2320 = vrot.slane %v2318, 5
        %v2321 = vsel %vm853, %v2316, %v2320
        %v2322 = vshrl.u32 %v1946, 16
        %v2324 = vrot.slane %v2322, 4
        %v2325 = vor.u32 %v2324, %v2320
        %v2326 = vrot.slane %v2325, 4
        %v2328 = vshll.u32 %v1947, 16
        %v2330 = vrot.slane %v2328, 5
        %v2331 = vsel %vm853, %v2326, %v2330
        %2332 = vrot.lane.b32.xlu0 %v1961, 60
        %v2333 = vpop.permute.xlu0 %2332
        %2334 = vrot.lane.b32.xlu0 %v1971, 60
        %v2335 = vpop.permute.xlu0 %2334
        %2336 = vrot.lane.b32.xlu0 %v1985, 60
        %v2337 = vpop.permute.xlu0 %2336
        %2338 = vrot.lane.b32.xlu0 %v1995, 60
        %v2339 = vpop.permute.xlu0 %2338
        %2340 = vrot.lane.b32.xlu0 %v2009, 60
        %v2341 = vpop.permute.xlu0 %2340
        %2342 = vrot.lane.b32.xlu0 %v2019, 60
        %v2343 = vpop.permute.xlu0 %2342
        %2344 = vrot.lane.b32.xlu0 %v2033, 60
        %v2345 = vpop.permute.xlu0 %2344
        %2346 = vrot.lane.b32.xlu0 %v2043, 60
        %v2347 = vpop.permute.xlu0 %2346
        %2348 = vrot.lane.b32.xlu0 %v2057, 60
        %v2349 = vpop.permute.xlu0 %2348
        %2350 = vrot.lane.b32.xlu0 %v2067, 60
        %v2351 = vpop.permute.xlu0 %2350
        %2352 = vrot.lane.b32.xlu0 %v2081, 60
        %v2353 = vpop.permute.xlu0 %2352
        %2354 = vrot.lane.b32.xlu0 %v2091, 60
        %v2355 = vpop.permute.xlu0 %2354
        %2356 = vrot.lane.b32.xlu0 %v2105, 60
        %v2357 = vpop.permute.xlu0 %2356
        %2358 = vrot.lane.b32.xlu0 %v2115, 60
        %v2359 = vpop.permute.xlu0 %2358
        %2360 = vrot.lane.b32.xlu0 %v2129, 60
        %v2361 = vpop.permute.xlu0 %2360
        %2362 = vrot.lane.b32.xlu0 %v2139, 60
        %v2363 = vpop.permute.xlu0 %2362
        %2364 = vrot.lane.b32.xlu0 %v2153, 60
        %v2365 = vpop.permute.xlu0 %2364
        %2366 = vrot.lane.b32.xlu0 %v2163, 60
        %v2367 = vpop.permute.xlu0 %2366
        %2368 = vrot.lane.b32.xlu0 %v2177, 60
        %v2369 = vpop.permute.xlu0 %2368
        %2370 = vrot.lane.b32.xlu0 %v2187, 60
        %v2371 = vpop.permute.xlu0 %2370
        %2372 = vrot.lane.b32.xlu0 %v2201, 60
        %v2373 = vpop.permute.xlu0 %2372
        %2374 = vrot.lane.b32.xlu0 %v2211, 60
        %v2375 = vpop.permute.xlu0 %2374
        %2376 = vrot.lane.b32.xlu0 %v2225, 60
        %v2377 = vpop.permute.xlu0 %2376
        %2378 = vrot.lane.b32.xlu0 %v2235, 60
        %v2379 = vpop.permute.xlu0 %2378
        %2380 = vrot.lane.b32.xlu0 %v2249, 60
        %v2381 = vpop.permute.xlu0 %2380
        %2382 = vrot.lane.b32.xlu0 %v2259, 60
        %v2383 = vpop.permute.xlu0 %2382
        %2384 = vrot.lane.b32.xlu0 %v2273, 60
        %v2385 = vpop.permute.xlu0 %2384
        %2386 = vrot.lane.b32.xlu0 %v2283, 60
        %v2387 = vpop.permute.xlu0 %2386
        %2388 = vrot.lane.b32.xlu0 %v2297, 60
        %v2389 = vpop.permute.xlu0 %2388
        %2390 = vrot.lane.b32.xlu0 %v2307, 60
        %v2391 = vpop.permute.xlu0 %2390
        %2392 = vrot.lane.b32.xlu0 %v2321, 60
        %v2393 = vpop.permute.xlu0 %2392
        %2394 = vrot.lane.b32.xlu0 %v2331, 60
        %v2395 = vpop.permute.xlu0 %2394
        %vm2428 = vcmask 609760
        %2429 = vst.msk [vmem:[#allocation3] sm:$0xf] %vm2428, %v2333
        %2430 = vst.msk [vmem:[#allocation3 + $0x8] sm:$0xf] %vm2428, %v2335
        %2431 = vst.msk [vmem:[#allocation3 + $0x10] sm:$0xf] %vm2428, %v2337
        %2432 = vst.msk [vmem:[#allocation3 + $0x18] sm:$0xf] %vm2428, %v2339
        %2433 = vst.msk [vmem:[#allocation3 + $0x20] sm:$0xf] %vm2428, %v2341
        %2434 = vst.msk [vmem:[#allocation3 + $0x28] sm:$0xf] %vm2428, %v2343
        %2435 = vst.msk [vmem:[#allocation3 + $0x30] sm:$0xf] %vm2428, %v2345
        %2436 = vst.msk [vmem:[#allocation3 + $0x38] sm:$0xf] %vm2428, %v2347
        %2437 = vst.msk [vmem:[#allocation3 + $0x40] sm:$0xf] %vm2428, %v2349
        %2438 = vst.msk [vmem:[#allocation3 + $0x48] sm:$0xf] %vm2428, %v2351
        %2439 = vst.msk [vmem:[#allocation3 + $0x50] sm:$0xf] %vm2428, %v2353
        %2440 = vst.msk [vmem:[#allocation3 + $0x58] sm:$0xf] %vm2428, %v2355
        %2441 = vst.msk [vmem:[#allocation3 + $0x60] sm:$0xf] %vm2428, %v2357
        %2442 = vst.msk [vmem:[#allocation3 + $0x68] sm:$0xf] %vm2428, %v2359
        %2443 = vst.msk [vmem:[#allocation3 + $0x70] sm:$0xf] %vm2428, %v2361
        %2444 = vst.msk [vmem:[#allocation3 + $0x78] sm:$0xf] %vm2428, %v2363
        %2445 = vst.msk [vmem:[#allocation3 + $0x80] sm:$0xf] %vm2428, %v2365
        %2446 = vst.msk [vmem:[#allocation3 + $0x88] sm:$0xf] %vm2428, %v2367
        %2447 = vst.msk [vmem:[#allocation3 + $0x90] sm:$0xf] %vm2428, %v2369
        %2448 = vst.msk [vmem:[#allocation3 + $0x98] sm:$0xf] %vm2428, %v2371
        %2449 = vst.msk [vmem:[#allocation3 + $0xa0] sm:$0xf] %vm2428, %v2373
        %2450 = vst.msk [vmem:[#allocation3 + $0xa8] sm:$0xf] %vm2428, %v2375
        %2451 = vst.msk [vmem:[#allocation3 + $0xb0] sm:$0xf] %vm2428, %v2377
        %2452 = vst.msk [vmem:[#allocation3 + $0xb8] sm:$0xf] %vm2428, %v2379
        %2453 = vst.msk [vmem:[#allocation3 + $0xc0] sm:$0xf] %vm2428, %v2381
        %2454 = vst.msk [vmem:[#allocation3 + $0xc8] sm:$0xf] %vm2428, %v2383
        %2455 = vst.msk [vmem:[#allocation3 + $0xd0] sm:$0xf] %vm2428, %v2385
        %2456 = vst.msk [vmem:[#allocation3 + $0xd8] sm:$0xf] %vm2428, %v2387
        %2457 = vst.msk [vmem:[#allocation3 + $0xe0] sm:$0xf] %vm2428, %v2389
        %2458 = vst.msk [vmem:[#allocation3 + $0xe8] sm:$0xf] %vm2428, %v2391
        %2459 = vst.msk [vmem:[#allocation3 + $0xf0] sm:$0xf] %vm2428, %v2393
        %2460 = vst.msk [vmem:[#allocation3 + $0xf8] sm:$0xf] %vm2428, %v2395
        %v2461 = vld [vmem:[%s621] sm:$0xe]
        %v2462 = vld [vmem:[%s621 + $0x4] sm:$0xf]
        %v2463 = vld [vmem:[%s621 + $0x8] sm:$0x1]
        %v2464 = vld [vmem:[%s621 + $0xc] sm:$0xe]
        %v2465 = vld [vmem:[%s621 + $0x10] sm:$0xf]
        %v2466 = vld [vmem:[%s621 + $0x14] sm:$0x1]
        %v2467 = vld [vmem:[%s621 + $0x18] sm:$0xe]
        %v2468 = vld [vmem:[%s621 + $0x1c] sm:$0xf]
        %v2469 = vld [vmem:[%s621 + $0x20] sm:$0x1]
        %v2470 = vld [vmem:[%s621 + $0x24] sm:$0xe]
        %v2471 = vld [vmem:[%s621 + $0x28] sm:$0xf]
        %v2472 = vld [vmem:[%s621 + $0x2c] sm:$0x1]
        %v2473 = vld [vmem:[%s621 + $0x30] sm:$0xe]
        %v2474 = vld [vmem:[%s621 + $0x34] sm:$0xf]
        %v2475 = vld [vmem:[%s621 + $0x38] sm:$0x1]
        %v2476 = vld [vmem:[%s621 + $0x3c] sm:$0xe]
        %v2477 = vld [vmem:[%s621 + $0x40] sm:$0xf]
        %v2478 = vld [vmem:[%s621 + $0x44] sm:$0x1]
        %v2479 = vld [vmem:[%s621 + $0x48] sm:$0xe]
        %v2480 = vld [vmem:[%s621 + $0x4c] sm:$0xf]
        %v2481 = vld [vmem:[%s621 + $0x50] sm:$0x1]
        %v2482 = vld [vmem:[%s621 + $0x54] sm:$0xe]
        %v2483 = vld [vmem:[%s621 + $0x58] sm:$0xf]
        %v2484 = vld [vmem:[%s621 + $0x5c] sm:$0x1]
        %v2485 = vld [vmem:[%s621 + $0x60] sm:$0xe]
        %v2486 = vld [vmem:[%s621 + $0x64] sm:$0xf]
        %v2487 = vld [vmem:[%s621 + $0x68] sm:$0x1]
        %v2488 = vld [vmem:[%s621 + $0x6c] sm:$0xe]
        %v2489 = vld [vmem:[%s621 + $0x70] sm:$0xf]
        %v2490 = vld [vmem:[%s621 + $0x74] sm:$0x1]
        %v2491 = vld [vmem:[%s621 + $0x78] sm:$0xe]
        %v2492 = vld [vmem:[%s621 + $0x7c] sm:$0xf]
        %v2493 = vld [vmem:[%s621 + $0x80] sm:$0x1]
        %v2494 = vld [vmem:[%s621 + $0x84] sm:$0xe]
        %v2495 = vld [vmem:[%s621 + $0x88] sm:$0xf]
        %v2496 = vld [vmem:[%s621 + $0x8c] sm:$0x1]
        %v2497 = vld [vmem:[%s621 + $0x90] sm:$0xe]
        %v2498 = vld [vmem:[%s621 + $0x94] sm:$0xf]
        %v2499 = vld [vmem:[%s621 + $0x98] sm:$0x1]
        %v2500 = vld [vmem:[%s621 + $0x9c] sm:$0xe]
        %v2501 = vld [vmem:[%s621 + $0xa0] sm:$0xf]
        %v2502 = vld [vmem:[%s621 + $0xa4] sm:$0x1]
        %v2503 = vld [vmem:[%s621 + $0xa8] sm:$0xe]
        %v2504 = vld [vmem:[%s621 + $0xac] sm:$0xf]
        %v2505 = vld [vmem:[%s621 + $0xb0] sm:$0x1]
        %v2506 = vld [vmem:[%s621 + $0xb4] sm:$0xe]
        %v2507 = vld [vmem:[%s621 + $0xb8] sm:$0xf]
        %v2508 = vld [vmem:[%s621 + $0xbc] sm:$0x1]
        %v2557 = vrot.slane %v2461, 5
        %v2558 = vrot.slane %v2557, 4
        %v2559 = vrot.slane %v2462, 5
        %v2560 = vsel %vm1465, %v2558, %v2559
        %v2561 = vrot.slane %v2559, 4
        %v2562 = vrot.slane %v2463, 5
        %v2563 = vsel %vm1465, %v2561, %v2562
        %v2564 = vrot.slane %v2464, 5
        %v2565 = vrot.slane %v2564, 4
        %v2566 = vrot.slane %v2465, 5
        %v2567 = vsel %vm1465, %v2565, %v2566
        %v2568 = vrot.slane %v2566, 4
        %v2569 = vrot.slane %v2466, 5
        %v2570 = vsel %vm1465, %v2568, %v2569
        %v2571 = vrot.slane %v2467, 5
        %v2572 = vrot.slane %v2571, 4
        %v2573 = vrot.slane %v2468, 5
        %v2574 = vsel %vm1465, %v2572, %v2573
        %v2575 = vrot.slane %v2573, 4
        %v2576 = vrot.slane %v2469, 5
        %v2577 = vsel %vm1465, %v2575, %v2576
        %v2578 = vrot.slane %v2470, 5
        %v2579 = vrot.slane %v2578, 4
        %v2580 = vrot.slane %v2471, 5
        %v2581 = vsel %vm1465, %v2579, %v2580
        %v2582 = vrot.slane %v2580, 4
        %v2583 = vrot.slane %v2472, 5
        %v2584 = vsel %vm1465, %v2582, %v2583
        %v2585 = vrot.slane %v2473, 5
        %v2586 = vrot.slane %v2585, 4
        %v2587 = vrot.slane %v2474, 5
        %v2588 = vsel %vm1465, %v2586, %v2587
        %v2589 = vrot.slane %v2587, 4
        %v2590 = vrot.slane %v2475, 5
        %v2591 = vsel %vm1465, %v2589, %v2590
        %v2592 = vrot.slane %v2476, 5
        %v2593 = vrot.slane %v2592, 4
        %v2594 = vrot.slane %v2477, 5
        %v2595 = vsel %vm1465, %v2593, %v2594
        %v2596 = vrot.slane %v2594, 4
        %v2597 = vrot.slane %v2478, 5
        %v2598 = vsel %vm1465, %v2596, %v2597
        %v2599 = vrot.slane %v2479, 5
        %v2600 = vrot.slane %v2599, 4
        %v2601 = vrot.slane %v2480, 5
        %v2602 = vsel %vm1465, %v2600, %v2601
        %v2603 = vrot.slane %v2601, 4
        %v2604 = vrot.slane %v2481, 5
        %v2605 = vsel %vm1465, %v2603, %v2604
        %v2606 = vrot.slane %v2482, 5
        %v2607 = vrot.slane %v2606, 4
        %v2608 = vrot.slane %v2483, 5
        %v2609 = vsel %vm1465, %v2607, %v2608
        %v2610 = vrot.slane %v2608, 4
        %v2611 = vrot.slane %v2484, 5
        %v2612 = vsel %vm1465, %v2610, %v2611
        %v2613 = vrot.slane %v2485, 5
        %v2614 = vrot.slane %v2613, 4
        %v2615 = vrot.slane %v2486, 5
        %v2616 = vsel %vm1465, %v2614, %v2615
        %v2617 = vrot.slane %v2615, 4
        %v2618 = vrot.slane %v2487, 5
        %v2619 = vsel %vm1465, %v2617, %v2618
        %v2620 = vrot.slane %v2488, 5
        %v2621 = vrot.slane %v2620, 4
        %v2622 = vrot.slane %v2489, 5
        %v2623 = vsel %vm1465, %v2621, %v2622
        %v2624 = vrot.slane %v2622, 4
        %v2625 = vrot.slane %v2490, 5
        %v2626 = vsel %vm1465, %v2624, %v2625
        %v2627 = vrot.slane %v2491, 5
        %v2628 = vrot.slane %v2627, 4
        %v2629 = vrot.slane %v2492, 5
        %v2630 = vsel %vm1465, %v2628, %v2629
        %v2631 = vrot.slane %v2629, 4
        %v2632 = vrot.slane %v2493, 5
        %v2633 = vsel %vm1465, %v2631, %v2632
        %v2634 = vrot.slane %v2494, 5
        %v2635 = vrot.slane %v2634, 4
        %v2636 = vrot.slane %v2495, 5
        %v2637 = vsel %vm1465, %v2635, %v2636
        %v2638 = vrot.slane %v2636, 4
        %v2639 = vrot.slane %v2496, 5
        %v2640 = vsel %vm1465, %v2638, %v2639
        %v2641 = vrot.slane %v2497, 5
        %v2642 = vrot.slane %v2641, 4
        %v2643 = vrot.slane %v2498, 5
        %v2644 = vsel %vm1465, %v2642, %v2643
        %v2645 = vrot.slane %v2643, 4
        %v2646 = vrot.slane %v2499, 5
        %v2647 = vsel %vm1465, %v2645, %v2646
        %v2648 = vrot.slane %v2500, 5
        %v2649 = vrot.slane %v2648, 4
        %v2650 = vrot.slane %v2501, 5
        %v2651 = vsel %vm1465, %v2649, %v2650
        %v2652 = vrot.slane %v2650, 4
        %v2653 = vrot.slane %v2502, 5
        %v2654 = vsel %vm1465, %v2652, %v2653
        %v2655 = vrot.slane %v2503, 5
        %v2656 = vrot.slane %v2655, 4
        %v2657 = vrot.slane %v2504, 5
        %v2658 = vsel %vm1465, %v2656, %v2657
        %v2659 = vrot.slane %v2657, 4
        %v2660 = vrot.slane %v2505, 5
        %v2661 = vsel %vm1465, %v2659, %v2660
        %v2662 = vrot.slane %v2506, 5
        %v2663 = vrot.slane %v2662, 4
        %v2664 = vrot.slane %v2507, 5
        %v2665 = vsel %vm1465, %v2663, %v2664
        %v2666 = vrot.slane %v2664, 4
        %v2667 = vrot.slane %v2508, 5
        %v2668 = vsel %vm1465, %v2666, %v2667
        %2669 = vrot.lane.b32.xlu0 %v2560, 75
        %v2670 = vpop.permute.xlu0 %2669
        %2671 = vrot.lane.b32.xlu0 %v2563, 75
        %v2672 = vpop.permute.xlu0 %2671
        %2673 = vrot.lane.b32.xlu0 %v2567, 75
        %v2674 = vpop.permute.xlu0 %2673
        %2675 = vrot.lane.b32.xlu0 %v2570, 75
        %v2676 = vpop.permute.xlu0 %2675
        %2677 = vrot.lane.b32.xlu0 %v2574, 75
        %v2678 = vpop.permute.xlu0 %2677
        %2679 = vrot.lane.b32.xlu0 %v2577, 75
        %v2680 = vpop.permute.xlu0 %2679
        %2681 = vrot.lane.b32.xlu0 %v2581, 75
        %v2682 = vpop.permute.xlu0 %2681
        %2683 = vrot.lane.b32.xlu0 %v2584, 75
        %v2684 = vpop.permute.xlu0 %2683
        %2685 = vrot.lane.b32.xlu0 %v2588, 75
        %v2686 = vpop.permute.xlu0 %2685
        %2687 = vrot.lane.b32.xlu0 %v2591, 75
        %v2688 = vpop.permute.xlu0 %2687
        %2689 = vrot.lane.b32.xlu0 %v2595, 75
        %v2690 = vpop.permute.xlu0 %2689
        %2691 = vrot.lane.b32.xlu0 %v2598, 75
        %v2692 = vpop.permute.xlu0 %2691
        %2693 = vrot.lane.b32.xlu0 %v2602, 75
        %v2694 = vpop.permute.xlu0 %2693
        %2695 = vrot.lane.b32.xlu0 %v2605, 75
        %v2696 = vpop.permute.xlu0 %2695
        %2697 = vrot.lane.b32.xlu0 %v2609, 75
        %v2698 = vpop.permute.xlu0 %2697
        %2699 = vrot.lane.b32.xlu0 %v2612, 75
        %v2700 = vpop.permute.xlu0 %2699
        %2701 = vrot.lane.b32.xlu0 %v2616, 75
        %v2702 = vpop.permute.xlu0 %2701
        %2703 = vrot.lane.b32.xlu0 %v2619, 75
        %v2704 = vpop.permute.xlu0 %2703
        %2705 = vrot.lane.b32.xlu0 %v2623, 75
        %v2706 = vpop.permute.xlu0 %2705
        %2707 = vrot.lane.b32.xlu0 %v2626, 75
        %v2708 = vpop.permute.xlu0 %2707
        %2709 = vrot.lane.b32.xlu0 %v2630, 75
        %v2710 = vpop.permute.xlu0 %2709
        %2711 = vrot.lane.b32.xlu0 %v2633, 75
        %v2712 = vpop.permute.xlu0 %2711
        %2713 = vrot.lane.b32.xlu0 %v2637, 75
        %v2714 = vpop.permute.xlu0 %2713
        %2715 = vrot.lane.b32.xlu0 %v2640, 75
        %v2716 = vpop.permute.xlu0 %2715
        %2717 = vrot.lane.b32.xlu0 %v2644, 75
        %v2718 = vpop.permute.xlu0 %2717
        %2719 = vrot.lane.b32.xlu0 %v2647, 75
        %v2720 = vpop.permute.xlu0 %2719
        %2721 = vrot.lane.b32.xlu0 %v2651, 75
        %v2722 = vpop.permute.xlu0 %2721
        %2723 = vrot.lane.b32.xlu0 %v2654, 75
        %v2724 = vpop.permute.xlu0 %2723
        %2725 = vrot.lane.b32.xlu0 %v2658, 75
        %v2726 = vpop.permute.xlu0 %2725
        %2727 = vrot.lane.b32.xlu0 %v2661, 75
        %v2728 = vpop.permute.xlu0 %2727
        %2729 = vrot.lane.b32.xlu0 %v2665, 75
        %v2730 = vpop.permute.xlu0 %2729
        %2731 = vrot.lane.b32.xlu0 %v2668, 75
        %v2732 = vpop.permute.xlu0 %2731
        %vm2765 = vcmask 732760
        %2766 = vst.msk [vmem:[#allocation3] sm:$0xf] %vm2765, %v2670
        %2767 = vst.msk [vmem:[#allocation3 + $0x8] sm:$0xf] %vm2765, %v2672
        %2768 = vst.msk [vmem:[#allocation3 + $0x10] sm:$0xf] %vm2765, %v2674
        %2769 = vst.msk [vmem:[#allocation3 + $0x18] sm:$0xf] %vm2765, %v2676
        %2770 = vst.msk [vmem:[#allocation3 + $0x20] sm:$0xf] %vm2765, %v2678
        %2771 = vst.msk [vmem:[#allocation3 + $0x28] sm:$0xf] %vm2765, %v2680
        %2772 = vst.msk [vmem:[#allocation3 + $0x30] sm:$0xf] %vm2765, %v2682
        %2773 = vst.msk [vmem:[#allocation3 + $0x38] sm:$0xf] %vm2765, %v2684
        %2774 = vst.msk [vmem:[#allocation3 + $0x40] sm:$0xf] %vm2765, %v2686
        %2775 = vst.msk [vmem:[#allocation3 + $0x48] sm:$0xf] %vm2765, %v2688
        %2776 = vst.msk [vmem:[#allocation3 + $0x50] sm:$0xf] %vm2765, %v2690
        %2777 = vst.msk [vmem:[#allocation3 + $0x58] sm:$0xf] %vm2765, %v2692
        %2778 = vst.msk [vmem:[#allocation3 + $0x60] sm:$0xf] %vm2765, %v2694
        %2779 = vst.msk [vmem:[#allocation3 + $0x68] sm:$0xf] %vm2765, %v2696
        %2780 = vst.msk [vmem:[#allocation3 + $0x70] sm:$0xf] %vm2765, %v2698
        %2781 = vst.msk [vmem:[#allocation3 + $0x78] sm:$0xf] %vm2765, %v2700
        %2782 = vst.msk [vmem:[#allocation3 + $0x80] sm:$0xf] %vm2765, %v2702
        %2783 = vst.msk [vmem:[#allocation3 + $0x88] sm:$0xf] %vm2765, %v2704
        %2784 = vst.msk [vmem:[#allocation3 + $0x90] sm:$0xf] %vm2765, %v2706
        %2785 = vst.msk [vmem:[#allocation3 + $0x98] sm:$0xf] %vm2765, %v2708
        %2786 = vst.msk [vmem:[#allocation3 + $0xa0] sm:$0xf] %vm2765, %v2710
        %2787 = vst.msk [vmem:[#allocation3 + $0xa8] sm:$0xf] %vm2765, %v2712
        %2788 = vst.msk [vmem:[#allocation3 + $0xb0] sm:$0xf] %vm2765, %v2714
        %2789 = vst.msk [vmem:[#allocation3 + $0xb8] sm:$0xf] %vm2765, %v2716
        %2790 = vst.msk [vmem:[#allocation3 + $0xc0] sm:$0xf] %vm2765, %v2718
        %2791 = vst.msk [vmem:[#allocation3 + $0xc8] sm:$0xf] %vm2765, %v2720
        %2792 = vst.msk [vmem:[#allocation3 + $0xd0] sm:$0xf] %vm2765, %v2722
        %2793 = vst.msk [vmem:[#allocation3 + $0xd8] sm:$0xf] %vm2765, %v2724
        %2794 = vst.msk [vmem:[#allocation3 + $0xe0] sm:$0xf] %vm2765, %v2726
        %2795 = vst.msk [vmem:[#allocation3 + $0xe8] sm:$0xf] %vm2765, %v2728
        %2796 = vst.msk [vmem:[#allocation3 + $0xf0] sm:$0xf] %vm2765, %v2730
        %2797 = vst.msk [vmem:[#allocation3 + $0xf8] sm:$0xf] %vm2765, %v2732
        %s2798 = scalar_lea.vmem [#allocation2], 24
        %v2799 = vld [vmem:[%s2798] sm:$0xf]
        %v2800 = vld [vmem:[%s2798 + $0x4] sm:$0xf]
        %v2801 = vld [vmem:[%s2798 + $0xc] sm:$0xf]
        %v2802 = vld [vmem:[%s2798 + $0x10] sm:$0xf]
        %v2803 = vld [vmem:[%s2798 + $0x18] sm:$0xf]
        %v2804 = vld [vmem:[%s2798 + $0x1c] sm:$0xf]
        %v2805 = vld [vmem:[%s2798 + $0x24] sm:$0xf]
        %v2806 = vld [vmem:[%s2798 + $0x28] sm:$0xf]
        %v2807 = vld [vmem:[%s2798 + $0x30] sm:$0xf]
        %v2808 = vld [vmem:[%s2798 + $0x34] sm:$0xf]
        %v2809 = vld [vmem:[%s2798 + $0x3c] sm:$0xf]
        %v2810 = vld [vmem:[%s2798 + $0x40] sm:$0xf]
        %v2811 = vld [vmem:[%s2798 + $0x48] sm:$0xf]
        %v2812 = vld [vmem:[%s2798 + $0x4c] sm:$0xf]
        %v2813 = vld [vmem:[%s2798 + $0x54] sm:$0xf]
        %v2814 = vld [vmem:[%s2798 + $0x58] sm:$0xf]
        %v2815 = vld [vmem:[%s2798 + $0x60] sm:$0xf]
        %v2816 = vld [vmem:[%s2798 + $0x64] sm:$0xf]
        %v2817 = vld [vmem:[%s2798 + $0x6c] sm:$0xf]
        %v2818 = vld [vmem:[%s2798 + $0x70] sm:$0xf]
        %v2819 = vld [vmem:[%s2798 + $0x78] sm:$0xf]
        %v2820 = vld [vmem:[%s2798 + $0x7c] sm:$0xf]
        %v2821 = vld [vmem:[%s2798 + $0x84] sm:$0xf]
        %v2822 = vld [vmem:[%s2798 + $0x88] sm:$0xf]
        %v2823 = vld [vmem:[%s2798 + $0x90] sm:$0xf]
        %v2824 = vld [vmem:[%s2798 + $0x94] sm:$0xf]
        %v2825 = vld [vmem:[%s2798 + $0x9c] sm:$0xf]
        %v2826 = vld [vmem:[%s2798 + $0xa0] sm:$0xf]
        %v2827 = vld [vmem:[%s2798 + $0xa8] sm:$0xf]
        %v2828 = vld [vmem:[%s2798 + $0xac] sm:$0xf]
        %v2829 = vld [vmem:[%s2798 + $0xb4] sm:$0xf]
        %v2830 = vld [vmem:[%s2798 + $0xb8] sm:$0xf]
        %2863 = vrot.lane.b32.xlu0 %v2799, 90
        %v2864 = vpop.permute.xlu0 %2863
        %2865 = vrot.lane.b32.xlu0 %v2800, 90
        %v2866 = vpop.permute.xlu0 %2865
        %2867 = vrot.lane.b32.xlu0 %v2801, 90
        %v2868 = vpop.permute.xlu0 %2867
        %2869 = vrot.lane.b32.xlu0 %v2802, 90
        %v2870 = vpop.permute.xlu0 %2869
        %2871 = vrot.lane.b32.xlu0 %v2803, 90
        %v2872 = vpop.permute.xlu0 %2871
        %2873 = vrot.lane.b32.xlu0 %v2804, 90
        %v2874 = vpop.permute.xlu0 %2873
        %2875 = vrot.lane.b32.xlu0 %v2805, 90
        %v2876 = vpop.permute.xlu0 %2875
        %2877 = vrot.lane.b32.xlu0 %v2806, 90
        %v2878 = vpop.permute.xlu0 %2877
        %2879 = vrot.lane.b32.xlu0 %v2807, 90
        %v2880 = vpop.permute.xlu0 %2879
        %2881 = vrot.lane.b32.xlu0 %v2808, 90
        %v2882 = vpop.permute.xlu0 %2881
        %2883 = vrot.lane.b32.xlu0 %v2809, 90
        %v2884 = vpop.permute.xlu0 %2883
        %2885 = vrot.lane.b32.xlu0 %v2810, 90
        %v2886 = vpop.permute.xlu0 %2885
        %2887 = vrot.lane.b32.xlu0 %v2811, 90
        %v2888 = vpop.permute.xlu0 %2887
        %2889 = vrot.lane.b32.xlu0 %v2812, 90
        %v2890 = vpop.permute.xlu0 %2889
        %2891 = vrot.lane.b32.xlu0 %v2813, 90
        %v2892 = vpop.permute.xlu0 %2891
        %2893 = vrot.lane.b32.xlu0 %v2814, 90
        %v2894 = vpop.permute.xlu0 %2893
        %2895 = vrot.lane.b32.xlu0 %v2815, 90
        %v2896 = vpop.permute.xlu0 %2895
        %2897 = vrot.lane.b32.xlu0 %v2816, 90
        %v2898 = vpop.permute.xlu0 %2897
        %2899 = vrot.lane.b32.xlu0 %v2817, 90
        %v2900 = vpop.permute.xlu0 %2899
        %2901 = vrot.lane.b32.xlu0 %v2818, 90
        %v2902 = vpop.permute.xlu0 %2901
        %2903 = vrot.lane.b32.xlu0 %v2819, 90
        %v2904 = vpop.permute.xlu0 %2903
        %2905 = vrot.lane.b32.xlu0 %v2820, 90
        %v2906 = vpop.permute.xlu0 %2905
        %2907 = vrot.lane.b32.xlu0 %v2821, 90
        %v2908 = vpop.permute.xlu0 %2907
        %2909 = vrot.lane.b32.xlu0 %v2822, 90
        %v2910 = vpop.permute.xlu0 %2909
        %2911 = vrot.lane.b32.xlu0 %v2823, 90
        %v2912 = vpop.permute.xlu0 %2911
        %2913 = vrot.lane.b32.xlu0 %v2824, 90
        %v2914 = vpop.permute.xlu0 %2913
        %2915 = vrot.lane.b32.xlu0 %v2825, 90
        %v2916 = vpop.permute.xlu0 %2915
        %2917 = vrot.lane.b32.xlu0 %v2826, 90
        %v2918 = vpop.permute.xlu0 %2917
        %2919 = vrot.lane.b32.xlu0 %v2827, 90
        %v2920 = vpop.permute.xlu0 %2919
        %2921 = vrot.lane.b32.xlu0 %v2828, 90
        %v2922 = vpop.permute.xlu0 %2921
        %2923 = vrot.lane.b32.xlu0 %v2829, 90
        %v2924 = vpop.permute.xlu0 %2923
        %2925 = vrot.lane.b32.xlu0 %v2830, 90
        %v2926 = vpop.permute.xlu0 %2925
        %vm2959 = vcmask 855760
        %2960 = vst.msk [vmem:[#allocation3] sm:$0xf] %vm2959, %v2864
        %2961 = vst.msk [vmem:[#allocation3 + $0x8] sm:$0xf] %vm2959, %v2866
        %2962 = vst.msk [vmem:[#allocation3 + $0x10] sm:$0xf] %vm2959, %v2868
        %2963 = vst.msk [vmem:[#allocation3 + $0x18] sm:$0xf] %vm2959, %v2870
        %2964 = vst.msk [vmem:[#allocation3 + $0x20] sm:$0xf] %vm2959, %v2872
        %2965 = vst.msk [vmem:[#allocation3 + $0x28] sm:$0xf] %vm2959, %v2874
        %2966 = vst.msk [vmem:[#allocation3 + $0x30] sm:$0xf] %vm2959, %v2876
        %2967 = vst.msk [vmem:[#allocation3 + $0x38] sm:$0xf] %vm2959, %v2878
        %2968 = vst.msk [vmem:[#allocation3 + $0x40] sm:$0xf] %vm2959, %v2880
        %2969 = vst.msk [vmem:[#allocation3 + $0x48] sm:$0xf] %vm2959, %v2882
        %2970 = vst.msk [vmem:[#allocation3 + $0x50] sm:$0xf] %vm2959, %v2884
        %2971 = vst.msk [vmem:[#allocation3 + $0x58] sm:$0xf] %vm2959, %v2886
        %2972 = vst.msk [vmem:[#allocation3 + $0x60] sm:$0xf] %vm2959, %v2888
        %2973 = vst.msk [vmem:[#allocation3 + $0x68] sm:$0xf] %vm2959, %v2890
        %2974 = vst.msk [vmem:[#allocation3 + $0x70] sm:$0xf] %vm2959, %v2892
        %2975 = vst.msk [vmem:[#allocation3 + $0x78] sm:$0xf] %vm2959, %v2894
        %2976 = vst.msk [vmem:[#allocation3 + $0x80] sm:$0xf] %vm2959, %v2896
        %2977 = vst.msk [vmem:[#allocation3 + $0x88] sm:$0xf] %vm2959, %v2898
        %2978 = vst.msk [vmem:[#allocation3 + $0x90] sm:$0xf] %vm2959, %v2900
        %2979 = vst.msk [vmem:[#allocation3 + $0x98] sm:$0xf] %vm2959, %v2902
        %2980 = vst.msk [vmem:[#allocation3 + $0xa0] sm:$0xf] %vm2959, %v2904
        %2981 = vst.msk [vmem:[#allocation3 + $0xa8] sm:$0xf] %vm2959, %v2906
        %2982 = vst.msk [vmem:[#allocation3 + $0xb0] sm:$0xf] %vm2959, %v2908
        %2983 = vst.msk [vmem:[#allocation3 + $0xb8] sm:$0xf] %vm2959, %v2910
        %2984 = vst.msk [vmem:[#allocation3 + $0xc0] sm:$0xf] %vm2959, %v2912
        %2985 = vst.msk [vmem:[#allocation3 + $0xc8] sm:$0xf] %vm2959, %v2914
        %2986 = vst.msk [vmem:[#allocation3 + $0xd0] sm:$0xf] %vm2959, %v2916
        %2987 = vst.msk [vmem:[#allocation3 + $0xd8] sm:$0xf] %vm2959, %v2918
        %2988 = vst.msk [vmem:[#allocation3 + $0xe0] sm:$0xf] %vm2959, %v2920
        %2989 = vst.msk [vmem:[#allocation3 + $0xe8] sm:$0xf] %vm2959, %v2922
        %2990 = vst.msk [vmem:[#allocation3 + $0xf0] sm:$0xf] %vm2959, %v2924
        %2991 = vst.msk [vmem:[#allocation3 + $0xf8] sm:$0xf] %vm2959, %v2926
        %v2992 = vld [vmem:[%s2798] sm:$0xf]
        %v2993 = vld [vmem:[%s2798 + $0x4] sm:$0xf]
        %v2994 = vld [vmem:[%s2798 + $0x8] sm:$0x1]
        %v2995 = vld [vmem:[%s2798 + $0xc] sm:$0xf]
        %v2996 = vld [vmem:[%s2798 + $0x10] sm:$0xf]
        %v2997 = vld [vmem:[%s2798 + $0x14] sm:$0x1]
        %v2998 = vld [vmem:[%s2798 + $0x18] sm:$0xf]
        %v2999 = vld [vmem:[%s2798 + $0x1c] sm:$0xf]
        %v3000 = vld [vmem:[%s2798 + $0x20] sm:$0x1]
        %v3001 = vld [vmem:[%s2798 + $0x24] sm:$0xf]
        %v3002 = vld [vmem:[%s2798 + $0x28] sm:$0xf]
        %v3003 = vld [vmem:[%s2798 + $0x2c] sm:$0x1]
        %v3004 = vld [vmem:[%s2798 + $0x30] sm:$0xf]
        %v3005 = vld [vmem:[%s2798 + $0x34] sm:$0xf]
        %v3006 = vld [vmem:[%s2798 + $0x38] sm:$0x1]
        %v3007 = vld [vmem:[%s2798 + $0x3c] sm:$0xf]
        %v3008 = vld [vmem:[%s2798 + $0x40] sm:$0xf]
        %v3009 = vld [vmem:[%s2798 + $0x44] sm:$0x1]
        %v3010 = vld [vmem:[%s2798 + $0x48] sm:$0xf]
        %v3011 = vld [vmem:[%s2798 + $0x4c] sm:$0xf]
        %v3012 = vld [vmem:[%s2798 + $0x50] sm:$0x1]
        %v3013 = vld [vmem:[%s2798 + $0x54] sm:$0xf]
        %v3014 = vld [vmem:[%s2798 + $0x58] sm:$0xf]
        %v3015 = vld [vmem:[%s2798 + $0x5c] sm:$0x1]
        %v3016 = vld [vmem:[%s2798 + $0x60] sm:$0xf]
        %v3017 = vld [vmem:[%s2798 + $0x64] sm:$0xf]
        %v3018 = vld [vmem:[%s2798 + $0x68] sm:$0x1]
        %v3019 = vld [vmem:[%s2798 + $0x6c] sm:$0xf]
        %v3020 = vld [vmem:[%s2798 + $0x70] sm:$0xf]
        %v3021 = vld [vmem:[%s2798 + $0x74] sm:$0x1]
        %v3022 = vld [vmem:[%s2798 + $0x78] sm:$0xf]
        %v3023 = vld [vmem:[%s2798 + $0x7c] sm:$0xf]
        %v3024 = vld [vmem:[%s2798 + $0x80] sm:$0x1]
        %v3025 = vld [vmem:[%s2798 + $0x84] sm:$0xf]
        %v3026 = vld [vmem:[%s2798 + $0x88] sm:$0xf]
        %v3027 = vld [vmem:[%s2798 + $0x8c] sm:$0x1]
        %v3028 = vld [vmem:[%s2798 + $0x90] sm:$0xf]
        %v3029 = vld [vmem:[%s2798 + $0x94] sm:$0xf]
        %v3030 = vld [vmem:[%s2798 + $0x98] sm:$0x1]
        %v3031 = vld [vmem:[%s2798 + $0x9c] sm:$0xf]
        %v3032 = vld [vmem:[%s2798 + $0xa0] sm:$0xf]
        %v3033 = vld [vmem:[%s2798 + $0xa4] sm:$0x1]
        %v3034 = vld [vmem:[%s2798 + $0xa8] sm:$0xf]
        %v3035 = vld [vmem:[%s2798 + $0xac] sm:$0xf]
        %v3036 = vld [vmem:[%s2798 + $0xb0] sm:$0x1]
        %v3037 = vld [vmem:[%s2798 + $0xb4] sm:$0xf]
        %v3038 = vld [vmem:[%s2798 + $0xb8] sm:$0xf]
        %v3039 = vld [vmem:[%s2798 + $0xbc] sm:$0x1]
        %v3041 = vshrl.u32 %v2992, 16
        %v3043 = vrot.slane %v3041, 4
        %v3044 = vshll.u32 %v2992, 16
        %v3046 = vrot.slane %v3044, 5
        %v3047 = vor.u32 %v3043, %v3046
        %v3048 = vrot.slane %v3047, 4
        %v3050 = vshll.u32 %v2993, 16
        %v3052 = vrot.slane %v3050, 5
        %v3053 = vsel %vm853, %v3048, %v3052
        %v3054 = vshrl.u32 %v2993, 16
        %v3056 = vrot.slane %v3054, 4
        %v3057 = vor.u32 %v3056, %v3052
        %v3058 = vrot.slane %v3057, 4
        %v3060 = vshll.u32 %v2994, 16
        %v3062 = vrot.slane %v3060, 5
        %v3063 = vsel %vm853, %v3058, %v3062
        %v3065 = vshrl.u32 %v2995, 16
        %v3067 = vrot.slane %v3065, 4
        %v3068 = vshll.u32 %v2995, 16
        %v3070 = vrot.slane %v3068, 5
        %v3071 = vor.u32 %v3067, %v3070
        %v3072 = vrot.slane %v3071, 4
        %v3074 = vshll.u32 %v2996, 16
        %v3076 = vrot.slane %v3074, 5
        %v3077 = vsel %vm853, %v3072, %v3076
        %v3078 = vshrl.u32 %v2996, 16
        %v3080 = vrot.slane %v3078, 4
        %v3081 = vor.u32 %v3080, %v3076
        %v3082 = vrot.slane %v3081, 4
        %v3084 = vshll.u32 %v2997, 16
        %v3086 = vrot.slane %v3084, 5
        %v3087 = vsel %vm853, %v3082, %v3086
        %v3089 = vshrl.u32 %v2998, 16
        %v3091 = vrot.slane %v3089, 4
        %v3092 = vshll.u32 %v2998, 16
        %v3094 = vrot.slane %v3092, 5
        %v3095 = vor.u32 %v3091, %v3094
        %v3096 = vrot.slane %v3095, 4
        %v3098 = vshll.u32 %v2999, 16
        %v3100 = vrot.slane %v3098, 5
        %v3101 = vsel %vm853, %v3096, %v3100
        %v3102 = vshrl.u32 %v2999, 16
        %v3104 = vrot.slane %v3102, 4
        %v3105 = vor.u32 %v3104, %v3100
        %v3106 = vrot.slane %v3105, 4
        %v3108 = vshll.u32 %v3000, 16
        %v3110 = vrot.slane %v3108, 5
        %v3111 = vsel %vm853, %v3106, %v3110
        %v3113 = vshrl.u32 %v3001, 16
        %v3115 = vrot.slane %v3113, 4
        %v3116 = vshll.u32 %v3001, 16
        %v3118 = vrot.slane %v3116, 5
        %v3119 = vor.u32 %v3115, %v3118
        %v3120 = vrot.slane %v3119, 4
        %v3122 = vshll.u32 %v3002, 16
        %v3124 = vrot.slane %v3122, 5
        %v3125 = vsel %vm853, %v3120, %v3124
        %v3126 = vshrl.u32 %v3002, 16
        %v3128 = vrot.slane %v3126, 4
        %v3129 = vor.u32 %v3128, %v3124
        %v3130 = vrot.slane %v3129, 4
        %v3132 = vshll.u32 %v3003, 16
        %v3134 = vrot.slane %v3132, 5
        %v3135 = vsel %vm853, %v3130, %v3134
        %v3137 = vshrl.u32 %v3004, 16
        %v3139 = vrot.slane %v3137, 4
        %v3140 = vshll.u32 %v3004, 16
        %v3142 = vrot.slane %v3140, 5
        %v3143 = vor.u32 %v3139, %v3142
        %v3144 = vrot.slane %v3143, 4
        %v3146 = vshll.u32 %v3005, 16
        %v3148 = vrot.slane %v3146, 5
        %v3149 = vsel %vm853, %v3144, %v3148
        %v3150 = vshrl.u32 %v3005, 16
        %v3152 = vrot.slane %v3150, 4
        %v3153 = vor.u32 %v3152, %v3148
        %v3154 = vrot.slane %v3153, 4
        %v3156 = vshll.u32 %v3006, 16
        %v3158 = vrot.slane %v3156, 5
        %v3159 = vsel %vm853, %v3154, %v3158
        %v3161 = vshrl.u32 %v3007, 16
        %v3163 = vrot.slane %v3161, 4
        %v3164 = vshll.u32 %v3007, 16
        %v3166 = vrot.slane %v3164, 5
        %v3167 = vor.u32 %v3163, %v3166
        %v3168 = vrot.slane %v3167, 4
        %v3170 = vshll.u32 %v3008, 16
        %v3172 = vrot.slane %v3170, 5
        %v3173 = vsel %vm853, %v3168, %v3172
        %v3174 = vshrl.u32 %v3008, 16
        %v3176 = vrot.slane %v3174, 4
        %v3177 = vor.u32 %v3176, %v3172
        %v3178 = vrot.slane %v3177, 4
        %v3180 = vshll.u32 %v3009, 16
        %v3182 = vrot.slane %v3180, 5
        %v3183 = vsel %vm853, %v3178, %v3182
        %v3185 = vshrl.u32 %v3010, 16
        %v3187 = vrot.slane %v3185, 4
        %v3188 = vshll.u32 %v3010, 16
        %v3190 = vrot.slane %v3188, 5
        %v3191 = vor.u32 %v3187, %v3190
        %v3192 = vrot.slane %v3191, 4
        %v3194 = vshll.u32 %v3011, 16
        %v3196 = vrot.slane %v3194, 5
        %v3197 = vsel %vm853, %v3192, %v3196
        %v3198 = vshrl.u32 %v3011, 16
        %v3200 = vrot.slane %v3198, 4
        %v3201 = vor.u32 %v3200, %v3196
        %v3202 = vrot.slane %v3201, 4
        %v3204 = vshll.u32 %v3012, 16
        %v3206 = vrot.slane %v3204, 5
        %v3207 = vsel %vm853, %v3202, %v3206
        %v3209 = vshrl.u32 %v3013, 16
        %v3211 = vrot.slane %v3209, 4
        %v3212 = vshll.u32 %v3013, 16
        %v3214 = vrot.slane %v3212, 5
        %v3215 = vor.u32 %v3211, %v3214
        %v3216 = vrot.slane %v3215, 4
        %v3218 = vshll.u32 %v3014, 16
        %v3220 = vrot.slane %v3218, 5
        %v3221 = vsel %vm853, %v3216, %v3220
        %v3222 = vshrl.u32 %v3014, 16
        %v3224 = vrot.slane %v3222, 4
        %v3225 = vor.u32 %v3224, %v3220
        %v3226 = vrot.slane %v3225, 4
        %v3228 = vshll.u32 %v3015, 16
        %v3230 = vrot.slane %v3228, 5
        %v3231 = vsel %vm853, %v3226, %v3230
        %v3233 = vshrl.u32 %v3016, 16
        %v3235 = vrot.slane %v3233, 4
        %v3236 = vshll.u32 %v3016, 16
        %v3238 = vrot.slane %v3236, 5
        %v3239 = vor.u32 %v3235, %v3238
        %v3240 = vrot.slane %v3239, 4
        %v3242 = vshll.u32 %v3017, 16
        %v3244 = vrot.slane %v3242, 5
        %v3245 = vsel %vm853, %v3240, %v3244
        %v3246 = vshrl.u32 %v3017, 16
        %v3248 = vrot.slane %v3246, 4
        %v3249 = vor.u32 %v3248, %v3244
        %v3250 = vrot.slane %v3249, 4
        %v3252 = vshll.u32 %v3018, 16
        %v3254 = vrot.slane %v3252, 5
        %v3255 = vsel %vm853, %v3250, %v3254
        %v3257 = vshrl.u32 %v3019, 16
        %v3259 = vrot.slane %v3257, 4
        %v3260 = vshll.u32 %v3019, 16
        %v3262 = vrot.slane %v3260, 5
        %v3263 = vor.u32 %v3259, %v3262
        %v3264 = vrot.slane %v3263, 4
        %v3266 = vshll.u32 %v3020, 16
        %v3268 = vrot.slane %v3266, 5
        %v3269 = vsel %vm853, %v3264, %v3268
        %v3270 = vshrl.u32 %v3020, 16
        %v3272 = vrot.slane %v3270, 4
        %v3273 = vor.u32 %v3272, %v3268
        %v3274 = vrot.slane %v3273, 4
        %v3276 = vshll.u32 %v3021, 16
        %v3278 = vrot.slane %v3276, 5
        %v3279 = vsel %vm853, %v3274, %v3278
        %v3281 = vshrl.u32 %v3022, 16
        %v3283 = vrot.slane %v3281, 4
        %v3284 = vshll.u32 %v3022, 16
        %v3286 = vrot.slane %v3284, 5
        %v3287 = vor.u32 %v3283, %v3286
        %v3288 = vrot.slane %v3287, 4
        %v3290 = vshll.u32 %v3023, 16
        %v3292 = vrot.slane %v3290, 5
        %v3293 = vsel %vm853, %v3288, %v3292
        %v3294 = vshrl.u32 %v3023, 16
        %v3296 = vrot.slane %v3294, 4
        %v3297 = vor.u32 %v3296, %v3292
        %v3298 = vrot.slane %v3297, 4
        %v3300 = vshll.u32 %v3024, 16
        %v3302 = vrot.slane %v3300, 5
        %v3303 = vsel %vm853, %v3298, %v3302
        %v3305 = vshrl.u32 %v3025, 16
        %v3307 = vrot.slane %v3305, 4
        %v3308 = vshll.u32 %v3025, 16
        %v3310 = vrot.slane %v3308, 5
        %v3311 = vor.u32 %v3307, %v3310
        %v3312 = vrot.slane %v3311, 4
        %v3314 = vshll.u32 %v3026, 16
        %v3316 = vrot.slane %v3314, 5
        %v3317 = vsel %vm853, %v3312, %v3316
        %v3318 = vshrl.u32 %v3026, 16
        %v3320 = vrot.slane %v3318, 4
        %v3321 = vor.u32 %v3320, %v3316
        %v3322 = vrot.slane %v3321, 4
        %v3324 = vshll.u32 %v3027, 16
        %v3326 = vrot.slane %v3324, 5
        %v3327 = vsel %vm853, %v3322, %v3326
        %v3329 = vshrl.u32 %v3028, 16
        %v3331 = vrot.slane %v3329, 4
        %v3332 = vshll.u32 %v3028, 16
        %v3334 = vrot.slane %v3332, 5
        %v3335 = vor.u32 %v3331, %v3334
        %v3336 = vrot.slane %v3335, 4
        %v3338 = vshll.u32 %v3029, 16
        %v3340 = vrot.slane %v3338, 5
        %v3341 = vsel %vm853, %v3336, %v3340
        %v3342 = vshrl.u32 %v3029, 16
        %v3344 = vrot.slane %v3342, 4
        %v3345 = vor.u32 %v3344, %v3340
        %v3346 = vrot.slane %v3345, 4
        %v3348 = vshll.u32 %v3030, 16
        %v3350 = vrot.slane %v3348, 5
        %v3351 = vsel %vm853, %v3346, %v3350
        %v3353 = vshrl.u32 %v3031, 16
        %v3355 = vrot.slane %v3353, 4
        %v3356 = vshll.u32 %v3031, 16
        %v3358 = vrot.slane %v3356, 5
        %v3359 = vor.u32 %v3355, %v3358
        %v3360 = vrot.slane %v3359, 4
        %v3362 = vshll.u32 %v3032, 16
        %v3364 = vrot.slane %v3362, 5
        %v3365 = vsel %vm853, %v3360, %v3364
        %v3366 = vshrl.u32 %v3032, 16
        %v3368 = vrot.slane %v3366, 4
        %v3369 = vor.u32 %v3368, %v3364
        %v3370 = vrot.slane %v3369, 4
        %v3372 = vshll.u32 %v3033, 16
        %v3374 = vrot.slane %v3372, 5
        %v3375 = vsel %vm853, %v3370, %v3374
        %v3377 = vshrl.u32 %v3034, 16
        %v3379 = vrot.slane %v3377, 4
        %v3380 = vshll.u32 %v3034, 16
        %v3382 = vrot.slane %v3380, 5
        %v3383 = vor.u32 %v3379, %v3382
        %v3384 = vrot.slane %v3383, 4
        %v3386 = vshll.u32 %v3035, 16
        %v3388 = vrot.slane %v3386, 5
        %v3389 = vsel %vm853, %v3384, %v3388
        %v3390 = vshrl.u32 %v3035, 16
        %v3392 = vrot.slane %v3390, 4
        %v3393 = vor.u32 %v3392, %v3388
        %v3394 = vrot.slane %v3393, 4
        %v3396 = vshll.u32 %v3036, 16
        %v3398 = vrot.slane %v3396, 5
        %v3399 = vsel %vm853, %v3394, %v3398
        %v3401 = vshrl.u32 %v3037, 16
        %v3403 = vrot.slane %v3401, 4
        %v3404 = vshll.u32 %v3037, 16
        %v3406 = vrot.slane %v3404, 5
        %v3407 = vor.u32 %v3403, %v3406
        %v3408 = vrot.slane %v3407, 4
        %v3410 = vshll.u32 %v3038, 16
        %v3412 = vrot.slane %v3410, 5
        %v3413 = vsel %vm853, %v3408, %v3412
        %v3414 = vshrl.u32 %v3038, 16
        %v3416 = vrot.slane %v3414, 4
        %v3417 = vor.u32 %v3416, %v3412
        %v3418 = vrot.slane %v3417, 4
        %v3420 = vshll.u32 %v3039, 16
        %v3422 = vrot.slane %v3420, 5
        %v3423 = vsel %vm853, %v3418, %v3422
        %3424 = vrot.lane.b32.xlu0 %v3053, 105
        %v3425 = vpop.permute.xlu0 %3424
        %3426 = vrot.lane.b32.xlu0 %v3063, 105
        %v3427 = vpop.permute.xlu0 %3426
        %3428 = vrot.lane.b32.xlu0 %v3077, 105
        %v3429 = vpop.permute.xlu0 %3428
        %3430 = vrot.lane.b32.xlu0 %v3087, 105
        %v3431 = vpop.permute.xlu0 %3430
        %3432 = vrot.lane.b32.xlu0 %v3101, 105
        %v3433 = vpop.permute.xlu0 %3432
        %3434 = vrot.lane.b32.xlu0 %v3111, 105
        %v3435 = vpop.permute.xlu0 %3434
        %3436 = vrot.lane.b32.xlu0 %v3125, 105
        %v3437 = vpop.permute.xlu0 %3436
        %3438 = vrot.lane.b32.xlu0 %v3135, 105
        %v3439 = vpop.permute.xlu0 %3438
        %3440 = vrot.lane.b32.xlu0 %v3149, 105
        %v3441 = vpop.permute.xlu0 %3440
        %3442 = vrot.lane.b32.xlu0 %v3159, 105
        %v3443 = vpop.permute.xlu0 %3442
        %3444 = vrot.lane.b32.xlu0 %v3173, 105
        %v3445 = vpop.permute.xlu0 %3444
        %3446 = vrot.lane.b32.xlu0 %v3183, 105
        %v3447 = vpop.permute.xlu0 %3446
        %3448 = vrot.lane.b32.xlu0 %v3197, 105
        %v3449 = vpop.permute.xlu0 %3448
        %3450 = vrot.lane.b32.xlu0 %v3207, 105
        %v3451 = vpop.permute.xlu0 %3450
        %3452 = vrot.lane.b32.xlu0 %v3221, 105
        %v3453 = vpop.permute.xlu0 %3452
        %3454 = vrot.lane.b32.xlu0 %v3231, 105
        %v3455 = vpop.permute.xlu0 %3454
        %3456 = vrot.lane.b32.xlu0 %v3245, 105
        %v3457 = vpop.permute.xlu0 %3456
        %3458 = vrot.lane.b32.xlu0 %v3255, 105
        %v3459 = vpop.permute.xlu0 %3458
        %3460 = vrot.lane.b32.xlu0 %v3269, 105
        %v3461 = vpop.permute.xlu0 %3460
        %3462 = vrot.lane.b32.xlu0 %v3279, 105
        %v3463 = vpop.permute.xlu0 %3462
        %3464 = vrot.lane.b32.xlu0 %v3293, 105
        %v3465 = vpop.permute.xlu0 %3464
        %3466 = vrot.lane.b32.xlu0 %v3303, 105
        %v3467 = vpop.permute.xlu0 %3466
        %3468 = vrot.lane.b32.xlu0 %v3317, 105
        %v3469 = vpop.permute.xlu0 %3468
        %3470 = vrot.lane.b32.xlu0 %v3327, 105
        %v3471 = vpop.permute.xlu0 %3470
        %3472 = vrot.lane.b32.xlu0 %v3341, 105
        %v3473 = vpop.permute.xlu0 %3472
        %3474 = vrot.lane.b32.xlu0 %v3351, 105
        %v3475 = vpop.permute.xlu0 %3474
        %3476 = vrot.lane.b32.xlu0 %v3365, 105
        %v3477 = vpop.permute.xlu0 %3476
        %3478 = vrot.lane.b32.xlu0 %v3375, 105
        %v3479 = vpop.permute.xlu0 %3478
        %3480 = vrot.lane.b32.xlu0 %v3389, 105
        %v3481 = vpop.permute.xlu0 %3480
        %3482 = vrot.lane.b32.xlu0 %v3399, 105
        %v3483 = vpop.permute.xlu0 %3482
        %3484 = vrot.lane.b32.xlu0 %v3413, 105
        %v3485 = vpop.permute.xlu0 %3484
        %3486 = vrot.lane.b32.xlu0 %v3423, 105
        %v3487 = vpop.permute.xlu0 %3486
        %vm3520 = vcmask 978760
        %3521 = vst.msk [vmem:[#allocation3] sm:$0xf] %vm3520, %v3425
        %3522 = vst.msk [vmem:[#allocation3 + $0x8] sm:$0xf] %vm3520, %v3427
        %3523 = vst.msk [vmem:[#allocation3 + $0x10] sm:$0xf] %vm3520, %v3429
        %3524 = vst.msk [vmem:[#allocation3 + $0x18] sm:$0xf] %vm3520, %v3431
        %3525 = vst.msk [vmem:[#allocation3 + $0x20] sm:$0xf] %vm3520, %v3433
        %3526 = vst.msk [vmem:[#allocation3 + $0x28] sm:$0xf] %vm3520, %v3435
        %3527 = vst.msk [vmem:[#allocation3 + $0x30] sm:$0xf] %vm3520, %v3437
        %3528 = vst.msk [vmem:[#allocation3 + $0x38] sm:$0xf] %vm3520, %v3439
        %3529 = vst.msk [vmem:[#allocation3 + $0x40] sm:$0xf] %vm3520, %v3441
        %3530 = vst.msk [vmem:[#allocation3 + $0x48] sm:$0xf] %vm3520, %v3443
        %3531 = vst.msk [vmem:[#allocation3 + $0x50] sm:$0xf] %vm3520, %v3445
        %3532 = vst.msk [vmem:[#allocation3 + $0x58] sm:$0xf] %vm3520, %v3447
        %3533 = vst.msk [vmem:[#allocation3 + $0x60] sm:$0xf] %vm3520, %v3449
        %3534 = vst.msk [vmem:[#allocation3 + $0x68] sm:$0xf] %vm3520, %v3451
        %3535 = vst.msk [vmem:[#allocation3 + $0x70] sm:$0xf] %vm3520, %v3453
        %3536 = vst.msk [vmem:[#allocation3 + $0x78] sm:$0xf] %vm3520, %v3455
        %3537 = vst.msk [vmem:[#allocation3 + $0x80] sm:$0xf] %vm3520, %v3457
        %3538 = vst.msk [vmem:[#allocation3 + $0x88] sm:$0xf] %vm3520, %v3459
        %3539 = vst.msk [vmem:[#allocation3 + $0x90] sm:$0xf] %vm3520, %v3461
        %3540 = vst.msk [vmem:[#allocation3 + $0x98] sm:$0xf] %vm3520, %v3463
        %3541 = vst.msk [vmem:[#allocation3 + $0xa0] sm:$0xf] %vm3520, %v3465
        %3542 = vst.msk [vmem:[#allocation3 + $0xa8] sm:$0xf] %vm3520, %v3467
        %3543 = vst.msk [vmem:[#allocation3 + $0xb0] sm:$0xf] %vm3520, %v3469
        %3544 = vst.msk [vmem:[#allocation3 + $0xb8] sm:$0xf] %vm3520, %v3471
        %3545 = vst.msk [vmem:[#allocation3 + $0xc0] sm:$0xf] %vm3520, %v3473
        %3546 = vst.msk [vmem:[#allocation3 + $0xc8] sm:$0xf] %vm3520, %v3475
        %3547 = vst.msk [vmem:[#allocation3 + $0xd0] sm:$0xf] %vm3520, %v3477
        %3548 = vst.msk [vmem:[#allocation3 + $0xd8] sm:$0xf] %vm3520, %v3479
        %3549 = vst.msk [vmem:[#allocation3 + $0xe0] sm:$0xf] %vm3520, %v3481
        %3550 = vst.msk [vmem:[#allocation3 + $0xe8] sm:$0xf] %vm3520, %v3483
        %3551 = vst.msk [vmem:[#allocation3 + $0xf0] sm:$0xf] %vm3520, %v3485
        %3552 = vst.msk [vmem:[#allocation3 + $0xf8] sm:$0xf] %vm3520, %v3487
        %v3553 = vld [vmem:[%s2798] sm:$0xe]
        %v3554 = vld [vmem:[%s2798 + $0x4] sm:$0xf]
        %v3555 = vld [vmem:[%s2798 + $0x8] sm:$0x1]
        %v3556 = vld [vmem:[%s2798 + $0xc] sm:$0xe]
        %v3557 = vld [vmem:[%s2798 + $0x10] sm:$0xf]
        %v3558 = vld [vmem:[%s2798 + $0x14] sm:$0x1]
        %v3559 = vld [vmem:[%s2798 + $0x18] sm:$0xe]
        %v3560 = vld [vmem:[%s2798 + $0x1c] sm:$0xf]
        %v3561 = vld [vmem:[%s2798 + $0x20] sm:$0x1]
        %v3562 = vld [vmem:[%s2798 + $0x24] sm:$0xe]
        %v3563 = vld [vmem:[%s2798 + $0x28] sm:$0xf]
        %v3564 = vld [vmem:[%s2798 + $0x2c] sm:$0x1]
        %v3565 = vld [vmem:[%s2798 + $0x30] sm:$0xe]
        %v3566 = vld [vmem:[%s2798 + $0x34] sm:$0xf]
        %v3567 = vld [vmem:[%s2798 + $0x38] sm:$0x1]
        %v3568 = vld [vmem:[%s2798 + $0x3c] sm:$0xe]
        %v3569 = vld [vmem:[%s2798 + $0x40] sm:$0xf]
        %v3570 = vld [vmem:[%s2798 + $0x44] sm:$0x1]
        %v3571 = vld [vmem:[%s2798 + $0x48] sm:$0xe]
        %v3572 = vld [vmem:[%s2798 + $0x4c] sm:$0xf]
        %v3573 = vld [vmem:[%s2798 + $0x50] sm:$0x1]
        %v3574 = vld [vmem:[%s2798 + $0x54] sm:$0xe]
        %v3575 = vld [vmem:[%s2798 + $0x58] sm:$0xf]
        %v3576 = vld [vmem:[%s2798 + $0x5c] sm:$0x1]
        %v3577 = vld [vmem:[%s2798 + $0x60] sm:$0xe]
        %v3578 = vld [vmem:[%s2798 + $0x64] sm:$0xf]
        %v3579 = vld [vmem:[%s2798 + $0x68] sm:$0x1]
        %v3580 = vld [vmem:[%s2798 + $0x6c] sm:$0xe]
        %v3581 = vld [vmem:[%s2798 + $0x70] sm:$0xf]
        %v3582 = vld [vmem:[%s2798 + $0x74] sm:$0x1]
        %v3583 = vld [vmem:[%s2798 + $0x78] sm:$0xe]
        %v3584 = vld [vmem:[%s2798 + $0x7c] sm:$0xf]
        %v3585 = vld [vmem:[%s2798 + $0x80] sm:$0x1]
        %v3586 = vld [vmem:[%s2798 + $0x84] sm:$0xe]
        %v3587 = vld [vmem:[%s2798 + $0x88] sm:$0xf]
        %v3588 = vld [vmem:[%s2798 + $0x8c] sm:$0x1]
        %v3589 = vld [vmem:[%s2798 + $0x90] sm:$0xe]
        %v3590 = vld [vmem:[%s2798 + $0x94] sm:$0xf]
        %v3591 = vld [vmem:[%s2798 + $0x98] sm:$0x1]
        %v3592 = vld [vmem:[%s2798 + $0x9c] sm:$0xe]
        %v3593 = vld [vmem:[%s2798 + $0xa0] sm:$0xf]
        %v3594 = vld [vmem:[%s2798 + $0xa4] sm:$0x1]
        %v3595 = vld [vmem:[%s2798 + $0xa8] sm:$0xe]
        %v3596 = vld [vmem:[%s2798 + $0xac] sm:$0xf]
        %v3597 = vld [vmem:[%s2798 + $0xb0] sm:$0x1]
        %v3598 = vld [vmem:[%s2798 + $0xb4] sm:$0xe]
        %v3599 = vld [vmem:[%s2798 + $0xb8] sm:$0xf]
        %v3600 = vld [vmem:[%s2798 + $0xbc] sm:$0x1]
        %v3649 = vrot.slane %v3553, 5
        %v3650 = vrot.slane %v3649, 4
        %v3651 = vrot.slane %v3554, 5
        %v3652 = vsel %vm1465, %v3650, %v3651
        %v3653 = vrot.slane %v3651, 4
        %v3654 = vrot.slane %v3555, 5
        %v3655 = vsel %vm1465, %v3653, %v3654
        %v3656 = vrot.slane %v3556, 5
        %v3657 = vrot.slane %v3656, 4
        %v3658 = vrot.slane %v3557, 5
        %v3659 = vsel %vm1465, %v3657, %v3658
        %v3660 = vrot.slane %v3658, 4
        %v3661 = vrot.slane %v3558, 5
        %v3662 = vsel %vm1465, %v3660, %v3661
        %v3663 = vrot.slane %v3559, 5
        %v3664 = vrot.slane %v3663, 4
        %v3665 = vrot.slane %v3560, 5
        %v3666 = vsel %vm1465, %v3664, %v3665
        %v3667 = vrot.slane %v3665, 4
        %v3668 = vrot.slane %v3561, 5
        %v3669 = vsel %vm1465, %v3667, %v3668
        %v3670 = vrot.slane %v3562, 5
        %v3671 = vrot.slane %v3670, 4
        %v3672 = vrot.slane %v3563, 5
        %v3673 = vsel %vm1465, %v3671, %v3672
        %v3674 = vrot.slane %v3672, 4
        %v3675 = vrot.slane %v3564, 5
        %v3676 = vsel %vm1465, %v3674, %v3675
        %v3677 = vrot.slane %v3565, 5
        %v3678 = vrot.slane %v3677, 4
        %v3679 = vrot.slane %v3566, 5
        %v3680 = vsel %vm1465, %v3678, %v3679
        %v3681 = vrot.slane %v3679, 4
        %v3682 = vrot.slane %v3567, 5
        %v3683 = vsel %vm1465, %v3681, %v3682
        %v3684 = vrot.slane %v3568, 5
        %v3685 = vrot.slane %v3684, 4
        %v3686 = vrot.slane %v3569, 5
        %v3687 = vsel %vm1465, %v3685, %v3686
        %v3688 = vrot.slane %v3686, 4
        %v3689 = vrot.slane %v3570, 5
        %v3690 = vsel %vm1465, %v3688, %v3689
        %v3691 = vrot.slane %v3571, 5
        %v3692 = vrot.slane %v3691, 4
        %v3693 = vrot.slane %v3572, 5
        %v3694 = vsel %vm1465, %v3692, %v3693
        %v3695 = vrot.slane %v3693, 4
        %v3696 = vrot.slane %v3573, 5
        %v3697 = vsel %vm1465, %v3695, %v3696
        %v3698 = vrot.slane %v3574, 5
        %v3699 = vrot.slane %v3698, 4
        %v3700 = vrot.slane %v3575, 5
        %v3701 = vsel %vm1465, %v3699, %v3700
        %v3702 = vrot.slane %v3700, 4
        %v3703 = vrot.slane %v3576, 5
        %v3704 = vsel %vm1465, %v3702, %v3703
        %v3705 = vrot.slane %v3577, 5
        %v3706 = vrot.slane %v3705, 4
        %v3707 = vrot.slane %v3578, 5
        %v3708 = vsel %vm1465, %v3706, %v3707
        %v3709 = vrot.slane %v3707, 4
        %v3710 = vrot.slane %v3579, 5
        %v3711 = vsel %vm1465, %v3709, %v3710
        %v3712 = vrot.slane %v3580, 5
        %v3713 = vrot.slane %v3712, 4
        %v3714 = vrot.slane %v3581, 5
        %v3715 = vsel %vm1465, %v3713, %v3714
        %v3716 = vrot.slane %v3714, 4
        %v3717 = vrot.slane %v3582, 5
        %v3718 = vsel %vm1465, %v3716, %v3717
        %v3719 = vrot.slane %v3583, 5
        %v3720 = vrot.slane %v3719, 4
        %v3721 = vrot.slane %v3584, 5
        %v3722 = vsel %vm1465, %v3720, %v3721
        %v3723 = vrot.slane %v3721, 4
        %v3724 = vrot.slane %v3585, 5
        %v3725 = vsel %vm1465, %v3723, %v3724
        %v3726 = vrot.slane %v3586, 5
        %v3727 = vrot.slane %v3726, 4
        %v3728 = vrot.slane %v3587, 5
        %v3729 = vsel %vm1465, %v3727, %v3728
        %v3730 = vrot.slane %v3728, 4
        %v3731 = vrot.slane %v3588, 5
        %v3732 = vsel %vm1465, %v3730, %v3731
        %v3733 = vrot.slane %v3589, 5
        %v3734 = vrot.slane %v3733, 4
        %v3735 = vrot.slane %v3590, 5
        %v3736 = vsel %vm1465, %v3734, %v3735
        %v3737 = vrot.slane %v3735, 4
        %v3738 = vrot.slane %v3591, 5
        %v3739 = vsel %vm1465, %v3737, %v3738
        %v3740 = vrot.slane %v3592, 5
        %v3741 = vrot.slane %v3740, 4
        %v3742 = vrot.slane %v3593, 5
        %v3743 = vsel %vm1465, %v3741, %v3742
        %v3744 = vrot.slane %v3742, 4
        %v3745 = vrot.slane %v3594, 5
        %v3746 = vsel %vm1465, %v3744, %v3745
        %v3747 = vrot.slane %v3595, 5
        %v3748 = vrot.slane %v3747, 4
        %v3749 = vrot.slane %v3596, 5
        %v3750 = vsel %vm1465, %v3748, %v3749
        %v3751 = vrot.slane %v3749, 4
        %v3752 = vrot.slane %v3597, 5
        %v3753 = vsel %vm1465, %v3751, %v3752
        %v3754 = vrot.slane %v3598, 5
        %v3755 = vrot.slane %v3754, 4
        %v3756 = vrot.slane %v3599, 5
        %v3757 = vsel %vm1465, %v3755, %v3756
        %v3758 = vrot.slane %v3756, 4
        %v3759 = vrot.slane %v3600, 5
        %v3760 = vsel %vm1465, %v3758, %v3759
        %3761 = vrot.lane.b32.xlu0 %v3652, 120
        %v3762 = vpop.permute.xlu0 %3761
        %3763 = vrot.lane.b32.xlu0 %v3655, 120
        %v3764 = vpop.permute.xlu0 %3763
        %3765 = vrot.lane.b32.xlu0 %v3659, 120
        %v3766 = vpop.permute.xlu0 %3765
        %3767 = vrot.lane.b32.xlu0 %v3662, 120
        %v3768 = vpop.permute.xlu0 %3767
        %3769 = vrot.lane.b32.xlu0 %v3666, 120
        %v3770 = vpop.permute.xlu0 %3769
        %3771 = vrot.lane.b32.xlu0 %v3669, 120
        %v3772 = vpop.permute.xlu0 %3771
        %3773 = vrot.lane.b32.xlu0 %v3673, 120
        %v3774 = vpop.permute.xlu0 %3773
        %3775 = vrot.lane.b32.xlu0 %v3676, 120
        %v3776 = vpop.permute.xlu0 %3775
        %3777 = vrot.lane.b32.xlu0 %v3680, 120
        %v3778 = vpop.permute.xlu0 %3777
        %3779 = vrot.lane.b32.xlu0 %v3683, 120
        %v3780 = vpop.permute.xlu0 %3779
        %3781 = vrot.lane.b32.xlu0 %v3687, 120
        %v3782 = vpop.permute.xlu0 %3781
        %3783 = vrot.lane.b32.xlu0 %v3690, 120
        %v3784 = vpop.permute.xlu0 %3783
        %3785 = vrot.lane.b32.xlu0 %v3694, 120
        %v3786 = vpop.permute.xlu0 %3785
        %3787 = vrot.lane.b32.xlu0 %v3697, 120
        %v3788 = vpop.permute.xlu0 %3787
        %3789 = vrot.lane.b32.xlu0 %v3701, 120
        %v3790 = vpop.permute.xlu0 %3789
        %3791 = vrot.lane.b32.xlu0 %v3704, 120
        %v3792 = vpop.permute.xlu0 %3791
        %3793 = vrot.lane.b32.xlu0 %v3708, 120
        %v3794 = vpop.permute.xlu0 %3793
        %3795 = vrot.lane.b32.xlu0 %v3711, 120
        %v3796 = vpop.permute.xlu0 %3795
        %3797 = vrot.lane.b32.xlu0 %v3715, 120
        %v3798 = vpop.permute.xlu0 %3797
        %3799 = vrot.lane.b32.xlu0 %v3718, 120
        %v3800 = vpop.permute.xlu0 %3799
        %3801 = vrot.lane.b32.xlu0 %v3722, 120
        %v3802 = vpop.permute.xlu0 %3801
        %3803 = vrot.lane.b32.xlu0 %v3725, 120
        %v3804 = vpop.permute.xlu0 %3803
        %3805 = vrot.lane.b32.xlu0 %v3729, 120
        %v3806 = vpop.permute.xlu0 %3805
        %3807 = vrot.lane.b32.xlu0 %v3732, 120
        %v3808 = vpop.permute.xlu0 %3807
        %3809 = vrot.lane.b32.xlu0 %v3736, 120
        %v3810 = vpop.permute.xlu0 %3809
        %3811 = vrot.lane.b32.xlu0 %v3739, 120
        %v3812 = vpop.permute.xlu0 %3811
        %3813 = vrot.lane.b32.xlu0 %v3743, 120
        %v3814 = vpop.permute.xlu0 %3813
        %3815 = vrot.lane.b32.xlu0 %v3746, 120
        %v3816 = vpop.permute.xlu0 %3815
        %3817 = vrot.lane.b32.xlu0 %v3750, 120
        %v3818 = vpop.permute.xlu0 %3817
        %3819 = vrot.lane.b32.xlu0 %v3753, 120
        %v3820 = vpop.permute.xlu0 %3819
        %3821 = vrot.lane.b32.xlu0 %v3757, 120
        %v3822 = vpop.permute.xlu0 %3821
        %3823 = vrot.lane.b32.xlu0 %v3760, 120
        %v3824 = vpop.permute.xlu0 %3823
        %v3825 = vrot.slane %v3762, 4
        %v3826 = vrot.slane %v3764, 4
        %v3827 = vrot.slane %v3766, 4
        %v3828 = vrot.slane %v3768, 4
        %v3829 = vrot.slane %v3770, 4
        %v3830 = vrot.slane %v3772, 4
        %v3831 = vrot.slane %v3774, 4
        %v3832 = vrot.slane %v3776, 4
        %v3833 = vrot.slane %v3778, 4
        %v3834 = vrot.slane %v3780, 4
        %v3835 = vrot.slane %v3782, 4
        %v3836 = vrot.slane %v3784, 4
        %v3837 = vrot.slane %v3786, 4
        %v3838 = vrot.slane %v3788, 4
        %v3839 = vrot.slane %v3790, 4
        %v3840 = vrot.slane %v3792, 4
        %v3841 = vrot.slane %v3794, 4
        %v3842 = vrot.slane %v3796, 4
        %v3843 = vrot.slane %v3798, 4
        %v3844 = vrot.slane %v3800, 4
        %v3845 = vrot.slane %v3802, 4
        %v3846 = vrot.slane %v3804, 4
        %v3847 = vrot.slane %v3806, 4
        %v3848 = vrot.slane %v3808, 4
        %v3849 = vrot.slane %v3810, 4
        %v3850 = vrot.slane %v3812, 4
        %v3851 = vrot.slane %v3814, 4
        %v3852 = vrot.slane %v3816, 4
        %v3853 = vrot.slane %v3818, 4
        %v3854 = vrot.slane %v3820, 4
        %v3855 = vrot.slane %v3822, 4
        %v3856 = vrot.slane %v3824, 4
        %vm3857 = vcmask 982016
        %v3858 = vsel %vm3857, %v3825, %v3762
        %v3859 = vsel %vm3857, %v3826, %v3764
        %v3860 = vsel %vm3857, %v3827, %v3766
        %v3861 = vsel %vm3857, %v3828, %v3768
        %v3862 = vsel %vm3857, %v3829, %v3770
        %v3863 = vsel %vm3857, %v3830, %v3772
        %v3864 = vsel %vm3857, %v3831, %v3774
        %v3865 = vsel %vm3857, %v3832, %v3776
        %v3866 = vsel %vm3857, %v3833, %v3778
        %v3867 = vsel %vm3857, %v3834, %v3780
        %v3868 = vsel %vm3857, %v3835, %v3782
        %v3869 = vsel %vm3857, %v3836, %v3784
        %v3870 = vsel %vm3857, %v3837, %v3786
        %v3871 = vsel %vm3857, %v3838, %v3788
        %v3872 = vsel %vm3857, %v3839, %v3790
        %v3873 = vsel %vm3857, %v3840, %v3792
        %v3874 = vsel %vm3857, %v3841, %v3794
        %v3875 = vsel %vm3857, %v3842, %v3796
        %v3876 = vsel %vm3857, %v3843, %v3798
        %v3877 = vsel %vm3857, %v3844, %v3800
        %v3878 = vsel %vm3857, %v3845, %v3802
        %v3879 = vsel %vm3857, %v3846, %v3804
        %v3880 = vsel %vm3857, %v3847, %v3806
        %v3881 = vsel %vm3857, %v3848, %v3808
        %v3882 = vsel %vm3857, %v3849, %v3810
        %v3883 = vsel %vm3857, %v3850, %v3812
        %v3884 = vsel %vm3857, %v3851, %v3814
        %v3885 = vsel %vm3857, %v3852, %v3816
        %v3886 = vsel %vm3857, %v3853, %v3818
        %v3887 = vsel %vm3857, %v3854, %v3820
        %v3888 = vsel %vm3857, %v3855, %v3822
        %v3889 = vsel %vm3857, %v3856, %v3824
        %vm3922 = vcmask 1044416
        %vm3923 = vcmask 56324
        %vm3924 = vmor %vm3923, %vm3922
        %3925 = vst.msk [vmem:[#allocation3] sm:$0xff] %vm3924, %v3858
        %3926 = vst.msk [vmem:[#allocation3 + $0x8] sm:$0xff] %vm3924, %v3859
        %3927 = vst.msk [vmem:[#allocation3 + $0x10] sm:$0xff] %vm3924, %v3860
        %3928 = vst.msk [vmem:[#allocation3 + $0x18] sm:$0xff] %vm3924, %v3861
        %3929 = vst.msk [vmem:[#allocation3 + $0x20] sm:$0xff] %vm3924, %v3862
        %3930 = vst.msk [vmem:[#allocation3 + $0x28] sm:$0xff] %vm3924, %v3863
        %3931 = vst.msk [vmem:[#allocation3 + $0x30] sm:$0xff] %vm3924, %v3864
        %3932 = vst.msk [vmem:[#allocation3 + $0x38] sm:$0xff] %vm3924, %v3865
        %3933 = vst.msk [vmem:[#allocation3 + $0x40] sm:$0xff] %vm3924, %v3866
        %3934 = vst.msk [vmem:[#allocation3 + $0x48] sm:$0xff] %vm3924, %v3867
        %3935 = vst.msk [vmem:[#allocation3 + $0x50] sm:$0xff] %vm3924, %v3868
        %3936 = vst.msk [vmem:[#allocation3 + $0x58] sm:$0xff] %vm3924, %v3869
        %3937 = vst.msk [vmem:[#allocation3 + $0x60] sm:$0xff] %vm3924, %v3870
        %3938 = vst.msk [vmem:[#allocation3 + $0x68] sm:$0xff] %vm3924, %v3871
        %3939 = vst.msk [vmem:[#allocation3 + $0x70] sm:$0xff] %vm3924, %v3872
        %3940 = vst.msk [vmem:[#allocation3 + $0x78] sm:$0xff] %vm3924, %v3873
        %3941 = vst.msk [vmem:[#allocation3 + $0x80] sm:$0xff] %vm3924, %v3874
        %3942 = vst.msk [vmem:[#allocation3 + $0x88] sm:$0xff] %vm3924, %v3875
        %3943 = vst.msk [vmem:[#allocation3 + $0x90] sm:$0xff] %vm3924, %v3876
        %3944 = vst.msk [vmem:[#allocation3 + $0x98] sm:$0xff] %vm3924, %v3877
        %3945 = vst.msk [vmem:[#allocation3 + $0xa0] sm:$0xff] %vm3924, %v3878
        %3946 = vst.msk [vmem:[#allocation3 + $0xa8] sm:$0xff] %vm3924, %v3879
        %3947 = vst.msk [vmem:[#allocation3 + $0xb0] sm:$0xff] %vm3924, %v3880
        %3948 = vst.msk [vmem:[#allocation3 + $0xb8] sm:$0xff] %vm3924, %v3881
        %3949 = vst.msk [vmem:[#allocation3 + $0xc0] sm:$0xff] %vm3924, %v3882
        %3950 = vst.msk [vmem:[#allocation3 + $0xc8] sm:$0xff] %vm3924, %v3883
        %3951 = vst.msk [vmem:[#allocation3 + $0xd0] sm:$0xff] %vm3924, %v3884
        %3952 = vst.msk [vmem:[#allocation3 + $0xd8] sm:$0xff] %vm3924, %v3885
        %3953 = vst.msk [vmem:[#allocation3 + $0xe0] sm:$0xff] %vm3924, %v3886
        %3954 = vst.msk [vmem:[#allocation3 + $0xe8] sm:$0xff] %vm3924, %v3887
        %3955 = vst.msk [vmem:[#allocation3 + $0xf0] sm:$0xff] %vm3924, %v3888
        %3956 = vst.msk [vmem:[#allocation3 + $0xf8] sm:$0xff] %vm3924, %v3889
        %v3957 = vld [vmem:[#allocation3] sm:$0xff]
        %v3958 = vld [vmem:[#allocation3 + $0x8] sm:$0xff]
        %v3959 = vld [vmem:[#allocation3 + $0x10] sm:$0xff]
        %v3960 = vld [vmem:[#allocation3 + $0x18] sm:$0xff]
        %v3961 = vld [vmem:[#allocation3 + $0x20] sm:$0xff]
        %v3962 = vld [vmem:[#allocation3 + $0x28] sm:$0xff]
        %v3963 = vld [vmem:[#allocation3 + $0x30] sm:$0xff]
        %v3964 = vld [vmem:[#allocation3 + $0x38] sm:$0xff]
        %v3965 = vld [vmem:[#allocation3 + $0x40] sm:$0xff]
        %v3966 = vld [vmem:[#allocation3 + $0x48] sm:$0xff]
        %v3967 = vld [vmem:[#allocation3 + $0x50] sm:$0xff]
        %v3968 = vld [vmem:[#allocation3 + $0x58] sm:$0xff]
        %v3969 = vld [vmem:[#allocation3 + $0x60] sm:$0xff]
        %v3970 = vld [vmem:[#allocation3 + $0x68] sm:$0xff]
        %v3971 = vld [vmem:[#allocation3 + $0x70] sm:$0xff]
        %v3972 = vld [vmem:[#allocation3 + $0x78] sm:$0xff]
        %v3973 = vld [vmem:[#allocation3 + $0x80] sm:$0xff]
        %v3974 = vld [vmem:[#allocation3 + $0x88] sm:$0xff]
        %v3975 = vld [vmem:[#allocation3 + $0x90] sm:$0xff]
        %v3976 = vld [vmem:[#allocation3 + $0x98] sm:$0xff]
        %v3977 = vld [vmem:[#allocation3 + $0xa0] sm:$0xff]
        %v3978 = vld [vmem:[#allocation3 + $0xa8] sm:$0xff]
        %v3979 = vld [vmem:[#allocation3 + $0xb0] sm:$0xff]
        %v3980 = vld [vmem:[#allocation3 + $0xb8] sm:$0xff]
        %v3981 = vld [vmem:[#allocation3 + $0xc0] sm:$0xff]
        %v3982 = vld [vmem:[#allocation3 + $0xc8] sm:$0xff]
        %v3983 = vld [vmem:[#allocation3 + $0xd0] sm:$0xff]
        %v3984 = vld [vmem:[#allocation3 + $0xd8] sm:$0xff]
        %v3985 = vld [vmem:[#allocation3 + $0xe0] sm:$0xff]
        %v3986 = vld [vmem:[#allocation3 + $0xe8] sm:$0xff]
        %v3987 = vld [vmem:[#allocation3 + $0xf0] sm:$0xff]
        %v3988 = vld [vmem:[#allocation3 + $0xf8] sm:$0xff]
        %v3989 = vld [vmem:[%s1] sm:$0xf]
        %v3990 = vld [vmem:[%s1 + $0x4] sm:$0xf]
        %v3991 = vld [vmem:[%s1 + $0x8] sm:$0xf]
        %v3992 = vld [vmem:[%s1 + $0xc] sm:$0xf]
        %v3993 = vld [vmem:[%s1 + $0x10] sm:$0xf]
        %v3994 = vld [vmem:[%s1 + $0x14] sm:$0xf]
        %v3995 = vld [vmem:[%s1 + $0x18] sm:$0xf]
        %v3996 = vld [vmem:[%s1 + $0x1c] sm:$0xf]
        %v3997 = vld [vmem:[%s1 + $0x20] sm:$0xf]
        %v3998 = vld [vmem:[%s1 + $0x24] sm:$0xf]
        %v3999 = vld [vmem:[%s1 + $0x28] sm:$0xf]
        %v4000 = vld [vmem:[%s1 + $0x2c] sm:$0xf]
        %v4001 = vld [vmem:[%s1 + $0x30] sm:$0xf]
        %v4002 = vld [vmem:[%s1 + $0x34] sm:$0xf]
        %v4003 = vld [vmem:[%s1 + $0x38] sm:$0xf]
        %v4004 = vld [vmem:[%s1 + $0x3c] sm:$0xf]
        %v4005 = vld [vmem:[%s1 + $0x40] sm:$0xf]
        %v4006 = vld [vmem:[%s1 + $0x44] sm:$0xf]
        %v4007 = vld [vmem:[%s1 + $0x48] sm:$0xf]
        %v4008 = vld [vmem:[%s1 + $0x4c] sm:$0xf]
        %v4009 = vld [vmem:[%s1 + $0x50] sm:$0xf]
        %v4010 = vld [vmem:[%s1 + $0x54] sm:$0xf]
        %v4011 = vld [vmem:[%s1 + $0x58] sm:$0xf]
        %v4012 = vld [vmem:[%s1 + $0x5c] sm:$0xf]
        %v4013 = vld [vmem:[%s1 + $0x60] sm:$0xf]
        %v4014 = vld [vmem:[%s1 + $0x64] sm:$0xf]
        %v4015 = vld [vmem:[%s1 + $0x68] sm:$0xf]
        %v4016 = vld [vmem:[%s1 + $0x6c] sm:$0xf]
        %v4017 = vld [vmem:[%s1 + $0x70] sm:$0xf]
        %v4018 = vld [vmem:[%s1 + $0x74] sm:$0xf]
        %v4019 = vld [vmem:[%s1 + $0x78] sm:$0xf]
        %v4020 = vld [vmem:[%s1 + $0x7c] sm:$0xf]
        %v4053 = vunpack.c.l.b16 %v3957
        %v4054 = vunpack.c.h.b16 %v3957
        %v4055 = vunpack.c.l.b16 %v3958
        %v4056 = vunpack.c.h.b16 %v3958
        %v4057 = vunpack.c.l.b16 %v3959
        %v4058 = vunpack.c.h.b16 %v3959
        %v4059 = vunpack.c.l.b16 %v3960
        %v4060 = vunpack.c.h.b16 %v3960
        %v4061 = vunpack.c.l.b16 %v3961
        %v4062 = vunpack.c.h.b16 %v3961
        %v4063 = vunpack.c.l.b16 %v3962
        %v4064 = vunpack.c.h.b16 %v3962
        %v4065 = vunpack.c.l.b16 %v3963
        %v4066 = vunpack.c.h.b16 %v3963
        %v4067 = vunpack.c.l.b16 %v3964
        %v4068 = vunpack.c.h.b16 %v3964
        %v4069 = vunpack.c.l.b16 %v3965
        %v4070 = vunpack.c.h.b16 %v3965
        %v4071 = vunpack.c.l.b16 %v3966
        %v4072 = vunpack.c.h.b16 %v3966
        %v4073 = vunpack.c.l.b16 %v3967
        %v4074 = vunpack.c.h.b16 %v3967
        %v4075 = vunpack.c.l.b16 %v3968
        %v4076 = vunpack.c.h.b16 %v3968
        %v4077 = vunpack.c.l.b16 %v3969
        %v4078 = vunpack.c.h.b16 %v3969
        %v4079 = vunpack.c.l.b16 %v3970
        %v4080 = vunpack.c.h.b16 %v3970
        %v4081 = vunpack.c.l.b16 %v3971
        %v4082 = vunpack.c.h.b16 %v3971
        %v4083 = vunpack.c.l.b16 %v3972
        %v4084 = vunpack.c.h.b16 %v3972
        %v4085 = vunpack.c.l.b16 %v3973
        %v4086 = vunpack.c.h.b16 %v3973
        %v4087 = vunpack.c.l.b16 %v3974
        %v4088 = vunpack.c.h.b16 %v3974
        %v4089 = vunpack.c.l.b16 %v3975
        %v4090 = vunpack.c.h.b16 %v3975
        %v4091 = vunpack.c.l.b16 %v3976
        %v4092 = vunpack.c.h.b16 %v3976
        %v4093 = vunpack.c.l.b16 %v3977
        %v4094 = vunpack.c.h.b16 %v3977
        %v4095 = vunpack.c.l.b16 %v3978
        %v4096 = vunpack.c.h.b16 %v3978
        %v4097 = vunpack.c.l.b16 %v3979
        %v4098 = vunpack.c.h.b16 %v3979
        %v4099 = vunpack.c.l.b16 %v3980
        %v4100 = vunpack.c.h.b16 %v3980
        %v4101 = vunpack.c.l.b16 %v3981
        %v4102 = vunpack.c.h.b16 %v3981
        %v4103 = vunpack.c.l.b16 %v3982
        %v4104 = vunpack.c.h.b16 %v3982
        %v4105 = vunpack.c.l.b16 %v3983
        %v4106 = vunpack.c.h.b16 %v3983
        %v4107 = vunpack.c.l.b16 %v3984
        %v4108 = vunpack.c.h.b16 %v3984
        %v4109 = vunpack.c.l.b16 %v3985
        %v4110 = vunpack.c.h.b16 %v3985
        %v4111 = vunpack.c.l.b16 %v3986
        %v4112 = vunpack.c.h.b16 %v3986
        %v4113 = vunpack.c.l.b16 %v3987
        %v4114 = vunpack.c.h.b16 %v3987
        %v4115 = vunpack.c.l.b16 %v3988
        %v4116 = vunpack.c.h.b16 %v3988
        %v4117 = vpack.c.b16 %v4055, %v4053
        %v4118 = vpack.c.b16 %v4056, %v4054
        %v4119 = vpack.c.b16 %v4059, %v4057
        %v4120 = vpack.c.b16 %v4060, %v4058
        %v4121 = vpack.c.b16 %v4063, %v4061
        %v4122 = vpack.c.b16 %v4064, %v4062
        %v4123 = vpack.c.b16 %v4067, %v4065
        %v4124 = vpack.c.b16 %v4068, %v4066
        %v4125 = vpack.c.b16 %v4071, %v4069
        %v4126 = vpack.c.b16 %v4072, %v4070
        %v4127 = vpack.c.b16 %v4075, %v4073
        %v4128 = vpack.c.b16 %v4076, %v4074
        %v4129 = vpack.c.b16 %v4079, %v4077
        %v4130 = vpack.c.b16 %v4080, %v4078
        %v4131 = vpack.c.b16 %v4083, %v4081
        %v4132 = vpack.c.b16 %v4084, %v4082
        %v4133 = vpack.c.b16 %v4087, %v4085
        %v4134 = vpack.c.b16 %v4088, %v4086
        %v4135 = vpack.c.b16 %v4091, %v4089
        %v4136 = vpack.c.b16 %v4092, %v4090
        %v4137 = vpack.c.b16 %v4095, %v4093
        %v4138 = vpack.c.b16 %v4096, %v4094
        %v4139 = vpack.c.b16 %v4099, %v4097
        %v4140 = vpack.c.b16 %v4100, %v4098
        %v4141 = vpack.c.b16 %v4103, %v4101
        %v4142 = vpack.c.b16 %v4104, %v4102
        %v4143 = vpack.c.b16 %v4107, %v4105
        %v4144 = vpack.c.b16 %v4108, %v4106
        %v4145 = vpack.c.b16 %v4111, %v4109
        %v4146 = vpack.c.b16 %v4112, %v4110
        %v4147 = vpack.c.b16 %v4115, %v4113
        %v4148 = vpack.c.b16 %v4116, %v4114
        %v4213 = vunpack.c.l.b16 %v3989
        %v4214 = vunpack.c.l.b16 %v3990
        %v4215 = vunpack.c.l.b16 %v3991
        %v4216 = vunpack.c.l.b16 %v3992
        %v4217 = vunpack.c.l.b16 %v3993
        %v4218 = vunpack.c.l.b16 %v3994
        %v4219 = vunpack.c.l.b16 %v3995
        %v4220 = vunpack.c.l.b16 %v3996
        %v4221 = vunpack.c.l.b16 %v3997
        %v4222 = vunpack.c.l.b16 %v3998
        %v4223 = vunpack.c.l.b16 %v3999
        %v4224 = vunpack.c.l.b16 %v4000
        %v4225 = vunpack.c.l.b16 %v4001
        %v4226 = vunpack.c.l.b16 %v4002
        %v4227 = vunpack.c.l.b16 %v4003
        %v4228 = vunpack.c.l.b16 %v4004
        %v4229 = vunpack.c.l.b16 %v4005
        %v4230 = vunpack.c.l.b16 %v4006
        %v4231 = vunpack.c.l.b16 %v4007
        %v4232 = vunpack.c.l.b16 %v4008
        %v4233 = vunpack.c.l.b16 %v4009
        %v4234 = vunpack.c.l.b16 %v4010
        %v4235 = vunpack.c.l.b16 %v4011
        %v4236 = vunpack.c.l.b16 %v4012
        %v4237 = vunpack.c.l.b16 %v4013
        %v4238 = vunpack.c.l.b16 %v4014
        %v4239 = vunpack.c.l.b16 %v4015
        %v4240 = vunpack.c.l.b16 %v4016
        %v4241 = vunpack.c.l.b16 %v4017
        %v4242 = vunpack.c.l.b16 %v4018
        %v4243 = vunpack.c.l.b16 %v4019
        %v4244 = vunpack.c.l.b16 %v4020
        %v4245 = vpack.c.b16 %v4214, %v4213
        %v4246 = vpack.c.b16 %v4216, %v4215
        %v4247 = vpack.c.b16 %v4218, %v4217
        %v4248 = vpack.c.b16 %v4220, %v4219
        %v4249 = vpack.c.b16 %v4222, %v4221
        %v4250 = vpack.c.b16 %v4224, %v4223
        %v4251 = vpack.c.b16 %v4226, %v4225
        %v4252 = vpack.c.b16 %v4228, %v4227
        %v4253 = vpack.c.b16 %v4230, %v4229
        %v4254 = vpack.c.b16 %v4232, %v4231
        %v4255 = vpack.c.b16 %v4234, %v4233
        %v4256 = vpack.c.b16 %v4236, %v4235
        %v4257 = vpack.c.b16 %v4238, %v4237
        %v4258 = vpack.c.b16 %v4240, %v4239
        %v4259 = vpack.c.b16 %v4242, %v4241
        %v4260 = vpack.c.b16 %v4244, %v4243
        %4277 = vmatpush.bf16.msra.mxu0 %v4252
        %4278 = vmatpush.bf16.msra.mxu0 %v4251
        %4279 = vmatpush.bf16.msra.mxu0 %v4250
        %4280 = vmatpush.bf16.msra.mxu0 %v4249
        %4281 = vmatpush.bf16.msra.mxu0 %v4248
        %4282 = vmatpush.bf16.msra.mxu0 %v4247
        %4283 = vmatpush.bf16.msra.mxu0 %v4246
        %4284 = vmatpush.bf16.msra.mxu0 %v4245
        %4285 = vmatmul.bf16.gmra.mxu0 %v4117
        %v4286 = vpop.f32.mrf.mxu0
        %v4287 = vadd.f32 0.0, %v4286
        %v4288 = vpop.f32.mrf.mxu0
        %v4289 = vadd.f32 0.0, %v4288
        %4290 = vmatmul.bf16.gmra.mxu0 %v4119
        %v4291 = vpop.f32.mrf.mxu0
        %v4292 = vadd.f32 0.0, %v4291
        %v4293 = vpop.f32.mrf.mxu0
        %v4294 = vadd.f32 0.0, %v4293
        %4295 = vmatmul.bf16.gmra.mxu0 %v4121
        %v4296 = vpop.f32.mrf.mxu0
        %v4297 = vadd.f32 0.0, %v4296
        %v4298 = vpop.f32.mrf.mxu0
        %v4299 = vadd.f32 0.0, %v4298
        %4300 = vmatmul.bf16.gmra.mxu0 %v4123
        %v4301 = vpop.f32.mrf.mxu0
        %v4302 = vadd.f32 0.0, %v4301
        %v4303 = vpop.f32.mrf.mxu0
        %v4304 = vadd.f32 0.0, %v4303
        %4305 = vmatmul.bf16.gmra.mxu0 %v4125
        %v4306 = vpop.f32.mrf.mxu0
        %v4307 = vadd.f32 0.0, %v4306
        %v4308 = vpop.f32.mrf.mxu0
        %v4309 = vadd.f32 0.0, %v4308
        %4310 = vmatmul.bf16.gmra.mxu0 %v4127
        %v4311 = vpop.f32.mrf.mxu0
        %v4312 = vadd.f32 0.0, %v4311
        %v4313 = vpop.f32.mrf.mxu0
        %v4314 = vadd.f32 0.0, %v4313
        %4315 = vmatmul.bf16.gmra.mxu0 %v4129
        %v4316 = vpop.f32.mrf.mxu0
        %v4317 = vadd.f32 0.0, %v4316
        %v4318 = vpop.f32.mrf.mxu0
        %v4319 = vadd.f32 0.0, %v4318
        %4320 = vmatmul.bf16.gmra.mxu0 %v4131
        %v4321 = vpop.f32.mrf.mxu0
        %v4322 = vadd.f32 0.0, %v4321
        %v4323 = vpop.f32.mrf.mxu0
        %v4324 = vadd.f32 0.0, %v4323
        %4325 = vmatmul.bf16.gmra.mxu0 %v4133
        %v4326 = vpop.f32.mrf.mxu0
        %v4327 = vadd.f32 0.0, %v4326
        %v4328 = vpop.f32.mrf.mxu0
        %v4329 = vadd.f32 0.0, %v4328
        %4330 = vmatmul.bf16.gmra.mxu0 %v4135
        %v4331 = vpop.f32.mrf.mxu0
        %v4332 = vadd.f32 0.0, %v4331
        %v4333 = vpop.f32.mrf.mxu0
        %v4334 = vadd.f32 0.0, %v4333
        %4335 = vmatmul.bf16.gmra.mxu0 %v4137
        %v4336 = vpop.f32.mrf.mxu0
        %v4337 = vadd.f32 0.0, %v4336
        %v4338 = vpop.f32.mrf.mxu0
        %v4339 = vadd.f32 0.0, %v4338
        %4340 = vmatmul.bf16.gmra.mxu0 %v4139
        %v4341 = vpop.f32.mrf.mxu0
        %v4342 = vadd.f32 0.0, %v4341
        %v4343 = vpop.f32.mrf.mxu0
        %v4344 = vadd.f32 0.0, %v4343
        %4345 = vmatmul.bf16.gmra.mxu0 %v4141
        %v4346 = vpop.f32.mrf.mxu0
        %v4347 = vadd.f32 0.0, %v4346
        %v4348 = vpop.f32.mrf.mxu0
        %v4349 = vadd.f32 0.0, %v4348
        %4350 = vmatmul.bf16.gmra.mxu0 %v4143
        %v4351 = vpop.f32.mrf.mxu0
        %v4352 = vadd.f32 0.0, %v4351
        %v4353 = vpop.f32.mrf.mxu0
        %v4354 = vadd.f32 0.0, %v4353
        %4355 = vmatmul.bf16.gmra.mxu0 %v4145
        %v4356 = vpop.f32.mrf.mxu0
        %v4357 = vadd.f32 0.0, %v4356
        %v4358 = vpop.f32.mrf.mxu0
        %v4359 = vadd.f32 0.0, %v4358
        %4360 = vmatmul.bf16.gmra.mxu0 %v4147
        %v4361 = vpop.f32.mrf.mxu0
        %v4362 = vadd.f32 0.0, %v4361
        %v4363 = vpop.f32.mrf.mxu0
        %v4364 = vadd.f32 0.0, %v4363
        %4365 = vdwg.mxu0
        %4366 = vmatpush.bf16.msra.mxu0 %v4260
        %4367 = vmatpush.bf16.msra.mxu0 %v4259
        %4368 = vmatpush.bf16.msra.mxu0 %v4258
        %4369 = vmatpush.bf16.msra.mxu0 %v4257
        %4370 = vmatpush.bf16.msra.mxu0 %v4256
        %4371 = vmatpush.bf16.msra.mxu0 %v4255
        %4372 = vmatpush.bf16.msra.mxu0 %v4254
        %4373 = vmatpush.bf16.msra.mxu0 %v4253
        %4374 = vmatmul.bf16.gmra.mxu0 %v4118
        %v4375 = vpop.f32.mrf.mxu0
        %v4376 = vadd.f32 %v4287, %v4375
        %v4377 = vpop.f32.mrf.mxu0
        %v4378 = vadd.f32 %v4289, %v4377
        %4379 = vmatmul.bf16.gmra.mxu0 %v4120
        %v4380 = vpop.f32.mrf.mxu0
        %v4381 = vadd.f32 %v4292, %v4380
        %v4382 = vpop.f32.mrf.mxu0
        %v4383 = vadd.f32 %v4294, %v4382
        %4384 = vmatmul.bf16.gmra.mxu0 %v4122
        %v4385 = vpop.f32.mrf.mxu0
        %v4386 = vadd.f32 %v4297, %v4385
        %v4387 = vpop.f32.mrf.mxu0
        %v4388 = vadd.f32 %v4299, %v4387
        %4389 = vmatmul.bf16.gmra.mxu0 %v4124
        %v4390 = vpop.f32.mrf.mxu0
        %v4391 = vadd.f32 %v4302, %v4390
        %v4392 = vpop.f32.mrf.mxu0
        %v4393 = vadd.f32 %v4304, %v4392
        %4394 = vmatmul.bf16.gmra.mxu0 %v4126
        %v4395 = vpop.f32.mrf.mxu0
        %v4396 = vadd.f32 %v4307, %v4395
        %v4397 = vpop.f32.mrf.mxu0
        %v4398 = vadd.f32 %v4309, %v4397
        %4399 = vmatmul.bf16.gmra.mxu0 %v4128
        %v4400 = vpop.f32.mrf.mxu0
        %v4401 = vadd.f32 %v4312, %v4400
        %v4402 = vpop.f32.mrf.mxu0
        %v4403 = vadd.f32 %v4314, %v4402
        %4404 = vmatmul.bf16.gmra.mxu0 %v4130
        %v4405 = vpop.f32.mrf.mxu0
        %v4406 = vadd.f32 %v4317, %v4405
        %v4407 = vpop.f32.mrf.mxu0
        %v4408 = vadd.f32 %v4319, %v4407
        %4409 = vmatmul.bf16.gmra.mxu0 %v4132
        %v4410 = vpop.f32.mrf.mxu0
        %v4411 = vadd.f32 %v4322, %v4410
        %v4412 = vpop.f32.mrf.mxu0
        %v4413 = vadd.f32 %v4324, %v4412
        %4414 = vmatmul.bf16.gmra.mxu0 %v4134
        %v4415 = vpop.f32.mrf.mxu0
        %v4416 = vadd.f32 %v4327, %v4415
        %v4417 = vpop.f32.mrf.mxu0
        %v4418 = vadd.f32 %v4329, %v4417
        %4419 = vmatmul.bf16.gmra.mxu0 %v4136
        %v4420 = vpop.f32.mrf.mxu0
        %v4421 = vadd.f32 %v4332, %v4420
        %v4422 = vpop.f32.mrf.mxu0
        %v4423 = vadd.f32 %v4334, %v4422
        %4424 = vmatmul.bf16.gmra.mxu0 %v4138
        %v4425 = vpop.f32.mrf.mxu0
        %v4426 = vadd.f32 %v4337, %v4425
        %v4427 = vpop.f32.mrf.mxu0
        %v4428 = vadd.f32 %v4339, %v4427
        %4429 = vmatmul.bf16.gmra.mxu0 %v4140
        %v4430 = vpop.f32.mrf.mxu0
        %v4431 = vadd.f32 %v4342, %v4430
        %v4432 = vpop.f32.mrf.mxu0
        %v4433 = vadd.f32 %v4344, %v4432
        %4434 = vmatmul.bf16.gmra.mxu0 %v4142
        %v4435 = vpop.f32.mrf.mxu0
        %v4436 = vadd.f32 %v4347, %v4435
        %v4437 = vpop.f32.mrf.mxu0
        %v4438 = vadd.f32 %v4349, %v4437
        %4439 = vmatmul.bf16.gmra.mxu0 %v4144
        %v4440 = vpop.f32.mrf.mxu0
        %v4441 = vadd.f32 %v4352, %v4440
        %v4442 = vpop.f32.mrf.mxu0
        %v4443 = vadd.f32 %v4354, %v4442
        %4444 = vmatmul.bf16.gmra.mxu0 %v4146
        %v4445 = vpop.f32.mrf.mxu0
        %v4446 = vadd.f32 %v4357, %v4445
        %v4447 = vpop.f32.mrf.mxu0
        %v4448 = vadd.f32 %v4359, %v4447
        %4449 = vmatmul.bf16.gmra.mxu0 %v4148
        %v4450 = vpop.f32.mrf.mxu0
        %v4451 = vadd.f32 %v4362, %v4450
        %v4452 = vpop.f32.mrf.mxu0
        %v4453 = vadd.f32 %v4364, %v4452
        %4454 = vdwg.mxu0
        %v4455 = vmax.f32 %v4376, 0.0
        %v4456 = vmax.f32 %v4378, 0.0
        %v4457 = vmax.f32 %v4381, 0.0
        %v4458 = vmax.f32 %v4383, 0.0
        %v4459 = vmax.f32 %v4386, 0.0
        %v4460 = vmax.f32 %v4388, 0.0
        %v4461 = vmax.f32 %v4391, 0.0
        %v4462 = vmax.f32 %v4393, 0.0
        %v4463 = vmax.f32 %v4396, 0.0
        %v4464 = vmax.f32 %v4398, 0.0
        %v4465 = vmax.f32 %v4401, 0.0
        %v4466 = vmax.f32 %v4403, 0.0
        %v4467 = vmax.f32 %v4406, 0.0
        %v4468 = vmax.f32 %v4408, 0.0
        %v4469 = vmax.f32 %v4411, 0.0
        %v4470 = vmax.f32 %v4413, 0.0
        %v4471 = vmax.f32 %v4416, 0.0
        %v4472 = vmax.f32 %v4418, 0.0
        %v4473 = vmax.f32 %v4421, 0.0
        %v4474 = vmax.f32 %v4423, 0.0
        %v4475 = vmax.f32 %v4426, 0.0
        %v4476 = vmax.f32 %v4428, 0.0
        %v4477 = vmax.f32 %v4431, 0.0
        %v4478 = vmax.f32 %v4433, 0.0
        %v4479 = vmax.f32 %v4436, 0.0
        %v4480 = vmax.f32 %v4438, 0.0
        %v4481 = vmax.f32 %v4441, 0.0
        %v4482 = vmax.f32 %v4443, 0.0
        %v4483 = vmax.f32 %v4446, 0.0
        %v4484 = vmax.f32 %v4448, 0.0
        %v4485 = vmax.f32 %v4451, 0.0
        %v4486 = vmax.f32 %v4453, 0.0
        %v4487 = vpack.c.bf16 %v4455, %v4455
        %v4488 = vpack.c.bf16 %v4456, %v4456
        %v4489 = vpack.c.bf16 %v4457, %v4457
        %v4490 = vpack.c.bf16 %v4458, %v4458
        %v4491 = vpack.c.bf16 %v4459, %v4459
        %v4492 = vpack.c.bf16 %v4460, %v4460
        %v4493 = vpack.c.bf16 %v4461, %v4461
        %v4494 = vpack.c.bf16 %v4462, %v4462
        %v4495 = vpack.c.bf16 %v4463, %v4463
        %v4496 = vpack.c.bf16 %v4464, %v4464
        %v4497 = vpack.c.bf16 %v4465, %v4465
        %v4498 = vpack.c.bf16 %v4466, %v4466
        %v4499 = vpack.c.bf16 %v4467, %v4467
        %v4500 = vpack.c.bf16 %v4468, %v4468
        %v4501 = vpack.c.bf16 %v4469, %v4469
        %v4502 = vpack.c.bf16 %v4470, %v4470
        %v4503 = vpack.c.bf16 %v4471, %v4471
        %v4504 = vpack.c.bf16 %v4472, %v4472
        %v4505 = vpack.c.bf16 %v4473, %v4473
        %v4506 = vpack.c.bf16 %v4474, %v4474
        %v4507 = vpack.c.bf16 %v4475, %v4475
        %v4508 = vpack.c.bf16 %v4476, %v4476
        %v4509 = vpack.c.bf16 %v4477, %v4477
        %v4510 = vpack.c.bf16 %v4478, %v4478
        %v4511 = vpack.c.bf16 %v4479, %v4479
        %v4512 = vpack.c.bf16 %v4480, %v4480
        %v4513 = vpack.c.bf16 %v4481, %v4481
        %v4514 = vpack.c.bf16 %v4482, %v4482
        %v4515 = vpack.c.bf16 %v4483, %v4483
        %v4516 = vpack.c.bf16 %v4484, %v4484
        %v4517 = vpack.c.bf16 %v4485, %v4485
        %v4518 = vpack.c.bf16 %v4486, %v4486
        %vm4519 = vcmask 125952
        %4520 = vst.msk [vmem:[%s136] sm:$0xf] %vm4519, %v4487
        %4521 = vst.msk [vmem:[%s136 + $0x4] sm:$0xf] %vm4519, %v4488
        %4522 = vst.msk [vmem:[%s136 + $0x8] sm:$0xf] %vm4519, %v4489
        %4523 = vst.msk [vmem:[%s136 + $0xc] sm:$0xf] %vm4519, %v4490
        %4524 = vst.msk [vmem:[%s136 + $0x10] sm:$0xf] %vm4519, %v4491
        %4525 = vst.msk [vmem:[%s136 + $0x14] sm:$0xf] %vm4519, %v4492
        %4526 = vst.msk [vmem:[%s136 + $0x18] sm:$0xf] %vm4519, %v4493
        %4527 = vst.msk [vmem:[%s136 + $0x1c] sm:$0xf] %vm4519, %v4494
        %4528 = vst.msk [vmem:[%s136 + $0x20] sm:$0xf] %vm4519, %v4495
        %4529 = vst.msk [vmem:[%s136 + $0x24] sm:$0xf] %vm4519, %v4496
        %4530 = vst.msk [vmem:[%s136 + $0x28] sm:$0xf] %vm4519, %v4497
        %4531 = vst.msk [vmem:[%s136 + $0x2c] sm:$0xf] %vm4519, %v4498
        %4532 = vst.msk [vmem:[%s136 + $0x30] sm:$0xf] %vm4519, %v4499
        %4533 = vst.msk [vmem:[%s136 + $0x34] sm:$0xf] %vm4519, %v4500
        %4534 = vst.msk [vmem:[%s136 + $0x38] sm:$0xf] %vm4519, %v4501
        %4535 = vst.msk [vmem:[%s136 + $0x3c] sm:$0xf] %vm4519, %v4502
        %4536 = vst.msk [vmem:[%s136 + $0x40] sm:$0xf] %vm4519, %v4503
        %4537 = vst.msk [vmem:[%s136 + $0x44] sm:$0xf] %vm4519, %v4504
        %4538 = vst.msk [vmem:[%s136 + $0x48] sm:$0xf] %vm4519, %v4505
        %4539 = vst.msk [vmem:[%s136 + $0x4c] sm:$0xf] %vm4519, %v4506
        %4540 = vst.msk [vmem:[%s136 + $0x50] sm:$0xf] %vm4519, %v4507
        %4541 = vst.msk [vmem:[%s136 + $0x54] sm:$0xf] %vm4519, %v4508
        %4542 = vst.msk [vmem:[%s136 + $0x58] sm:$0xf] %vm4519, %v4509
        %4543 = vst.msk [vmem:[%s136 + $0x5c] sm:$0xf] %vm4519, %v4510
        %4544 = vst.msk [vmem:[%s136 + $0x60] sm:$0xf] %vm4519, %v4511
        %4545 = vst.msk [vmem:[%s136 + $0x64] sm:$0xf] %vm4519, %v4512
        %4546 = vst.msk [vmem:[%s136 + $0x68] sm:$0xf] %vm4519, %v4513
        %4547 = vst.msk [vmem:[%s136 + $0x6c] sm:$0xf] %vm4519, %v4514
        %4548 = vst.msk [vmem:[%s136 + $0x70] sm:$0xf] %vm4519, %v4515
        %4549 = vst.msk [vmem:[%s136 + $0x74] sm:$0xf] %vm4519, %v4516
        %4550 = vst.msk [vmem:[%s136 + $0x78] sm:$0xf] %vm4519, %v4517
        %4551 = vst.msk [vmem:[%s136 + $0x7c] sm:$0xf] %vm4519, %v4518
        %s4552 = sand.u32 %s71, 1
        %s4553 = scalar_lea.sflag [#allocation5], %s4552
        %s4554 = sand.u32 %s71, 1
        %s4555 = smul.addr %s4554, 128
        %s4556 = scalar_lea.vmem [#allocation4], %s4555
        // Predicated region
        $region29: #{tpu_custom_call.1} parent=27 // pred_check
          %p4557 = pneg %p81
        $region30: #{tpu_custom_call.1} parent=27 // pred_check_branch
          %4559 = sbr.rel (%p4557) target = $region32
        $region31: #{tpu_custom_call.1} parent=27 // pred_region
          %4561 = vsyncadd %s4553, 0
          %s4562 = smul.addr %s16, 32
          %s4563 = smul.addr %s4562, 4
          %s4564 = scalar_lea.hbm %s2, %s4563
          %s4565 = sshll.u32 %s4556, 4
          %s4566 = int_to_ptr.vmem [resolvable:$true] %s4565
          %s4567 = sshll.u32 %s4564, 4
          %s4568 = int_to_ptr.hbm [resolvable:$true] %s4567
          %4573 = dma.vmem_to_hbm [thread:$0]  %s4566, 2048, %s4568, %s4553, 64, 64, 4
        $region32: #{tpu_custom_call.1} parent=27 // pred_fallthru
          _
      $region28: #{tpu_custom_call.1} parent=5 // pred_fallthru
        _
      %p4574 = scmp.le.s32.totalorder 2, %s11
      // Predicated region
      $region33: #{tpu_custom_call.1} parent=5 // pred_check
        %p4575 = pneg %p4574
      $region34: #{tpu_custom_call.1} parent=5 // pred_check_branch
        %4577 = sbr.rel (%p4575) target = $region36
      $region35: #{tpu_custom_call.1} parent=5 // pred_region
        %s4578 = ssub.s32 %s11, 2
        // Predicated region
        $region37: #{tpu_custom_call.1} parent=35 // pred_check
          %p4579 = pneg %p87
        $region38: #{tpu_custom_call.1} parent=35 // pred_check_branch
          %4581 = sbr.rel (%p4579) target = $region40
        $region39: #{tpu_custom_call.1} parent=35 // pred_region
          %s4582 = sand.u32 %s72, 1
          %s4583 = scalar_lea.sflag [#allocation5], %s4582
          %s4584 = sand.u32 %s72, 1
          %s4585 = smul.addr %s4584, 128
          %s4586 = scalar_lea.vmem [#allocation4], %s4585
          %4588 = dma.done %s4583, 2048
        $region40: #{tpu_custom_call.1} parent=35 // pred_fallthru
          _
      $region36: #{tpu_custom_call.1} parent=5 // pred_fallthru
        _
    $region6: #{tpu_custom_call.1} parent=1 // loop_footer
      %s15 = sadd.s32 1, %s11
    $region7: #{tpu_custom_call.1} parent=1 // loop_footer_branch
      %10 = sbr.rel target = $region3
    $region8: #{tpu_custom_call.1} parent=1 // loop_exit
      _
    %4589 = vsyncpa [#allocation5], 1
    %s4590 = scalar_lea.sflag [#allocation5], 1
    %4591 = vsyncpa %s4590, 1

</llo_original>
